<compile_context>
chip_gen: v7x
topology: tpu7x:2x2x1
jax: 0.10.0
libtpu: 0.0.40
codegen_flags: <defaults>
</compile_context>

<pallas_src>
import functools

import jax
import jax.numpy as jnp
from jax.experimental import pallas as pl
from jax.experimental.pallas import tpu as pltpu


# ----------------------------------------------------------------------------
# Kernel
# ----------------------------------------------------------------------------
def _ggnn_block_kernel(h_ref, edge_ref, adj_ref, mwh_ref, mwe_ref, mb_ref,
                       gw_ref, gb_ref, l1w_ref, l1b_ref, l2w_ref, l2b_ref,
                       out_ref, *, num_layers, n_nodes):
    f32 = jnp.float32
    h0 = h_ref[0].astype(f32)          # (N, F)
    edge = edge_ref[0].astype(f32)     # (N, N, E)
    adj = adj_ref[0].astype(f32)       # (N, N)

    # Layer-invariant graph aggregates (hoisted out of the layer loop).
    deg = jnp.sum(adj, axis=1, keepdims=True)             # (N, 1)  sum_j adj_ij
    ew = jnp.sum(adj[:, :, None] * edge, axis=1)          # (N, E)  sum_j adj_ij*e_ij
    inv_n = 1.0 / float(n_nodes)

    h = h0
    for l in range(num_layers):
        w1 = mwh_ref[l, 0]             # (F, F) acts on neighbor features h_j
        w2 = mwh_ref[l, 1]             # (F, F) acts on self features h_i
        we = mwe_ref[l]                # (E, F)
        wb = mb_ref[l]                 # (1, F)

        # Message: m_i = (1/N) * sum_j adj_ij * (h_j W1 + e_ij We + h_i W2 + b)
        hw1 = jnp.dot(h, w1, preferred_element_type=f32)           # (N, F)
        hw2 = jnp.dot(h, w2, preferred_element_type=f32)           # (N, F)
        agg = jnp.dot(adj, hw1, preferred_element_type=f32)        # (N, F)
        ec = jnp.dot(ew, we, preferred_element_type=f32)           # (N, F)
        m = (agg + ec + deg * (hw2 + wb)) * inv_n                  # (N, F)

        # GRUCell(input = h, hidden = m)  (PyTorch gate order r, z, n).
        wir = gw_ref[l, 0]; wiz = gw_ref[l, 1]; win = gw_ref[l, 2]
        whr = gw_ref[l, 3]; whz = gw_ref[l, 4]; whn = gw_ref[l, 5]
        br = gb_ref[l, 0]; bz = gb_ref[l, 1]; bin_ = gb_ref[l, 2]; bhn = gb_ref[l, 3]

        r = jax.nn.sigmoid(jnp.dot(h, wir, preferred_element_type=f32)
                           + jnp.dot(m, whr, preferred_element_type=f32) + br)
        z = jax.nn.sigmoid(jnp.dot(h, wiz, preferred_element_type=f32)
                           + jnp.dot(m, whz, preferred_element_type=f32) + bz)
        n = jnp.tanh(jnp.dot(h, win, preferred_element_type=f32) + bin_
                     + r * (jnp.dot(m, whn, preferred_element_type=f32) + bhn))
        h = jnp.maximum((1.0 - z) * n + z * m, 0.0)        # GRU update + relu

    # Readout: g = sigmoid(L1([h, h0])), R = relu(mean_i(g * L2(h)))
    g = jax.nn.sigmoid(jnp.dot(h, l1w_ref[0], preferred_element_type=f32)
                       + jnp.dot(h0, l1w_ref[1], preferred_element_type=f32)
                       + l1b_ref[...])
    h_l2 = jnp.dot(h, l2w_ref[...], preferred_element_type=f32) + l2b_ref[...]
    r_out = jnp.mean(g * h_l2, axis=0, keepdims=True)      # (1, F)
    out_ref[...] = jnp.maximum(r_out, 0.0).reshape(out_ref.shape).astype(out_ref.dtype)


# ----------------------------------------------------------------------------
# Host-side parameter packing (transpose & stack so the kernel only does
# right-multiplies and full-block loads).
# ----------------------------------------------------------------------------
def _pack_params(params, fdim, edim):
    layers = params["layers"]
    mwh = jnp.stack([jnp.stack([lp["W"][:, :fdim].T,
                                lp["W"][:, fdim + edim:].T]) for lp in layers])       # (L,2,F,F)
    mwe = jnp.stack([lp["W"][:, fdim:fdim + edim].T for lp in layers])                 # (L,E,F)
    mb = jnp.stack([lp["Wb"].reshape(1, fdim) for lp in layers])                       # (L,1,F)
    gw = jnp.stack([jnp.stack([
        lp["Wih"][0:fdim].T, lp["Wih"][fdim:2 * fdim].T, lp["Wih"][2 * fdim:].T,
        lp["Whh"][0:fdim].T, lp["Whh"][fdim:2 * fdim].T, lp["Whh"][2 * fdim:].T])
        for lp in layers])                                                             # (L,6,F,F)
    gb = jnp.stack([jnp.stack([
        (lp["bih"][0:fdim] + lp["bhh"][0:fdim]).reshape(1, fdim),
        (lp["bih"][fdim:2 * fdim] + lp["bhh"][fdim:2 * fdim]).reshape(1, fdim),
        lp["bih"][2 * fdim:].reshape(1, fdim),
        lp["bhh"][2 * fdim:].reshape(1, fdim)])
        for lp in layers])                                                             # (L,4,1,F)
    l1w = jnp.stack([params["L1"][:, :fdim].T, params["L1"][:, fdim:].T])              # (2,F,F)
    l1b = params["bL1"].reshape(1, fdim)
    l2w = params["L2"].T
    l2b = params["bL2"].reshape(1, fdim)
    return mwh, mwe, mb, gw, gb, l1w, l1b, l2w, l2b


# ----------------------------------------------------------------------------
# Wrapper
# ----------------------------------------------------------------------------
def ggnn_block_forward(h, edge, adj, params):
    B, N, F = h.shape
    E = edge.shape[-1]
    L = len(params["layers"])
    mwh, mwe, mb, gw, gb, l1w, l1b, l2w, l2b = _pack_params(params, F, E)

    kernel = functools.partial(_ggnn_block_kernel, num_layers=L, n_nodes=N)

    # Advisory cost estimate (per the decomposed message formulation).
    flops_per_b = (L * (8 * 2 * N * F * F + 2 * N * N * F + 2 * N * N * E
                        + 2 * N * E * F + 20 * N * F)
                   + 3 * 2 * N * F * F + 10 * N * F)
    transc_per_b = L * 3 * N * F + N * F
    in_bytes = sum(int(x.size) * x.dtype.itemsize
                   for x in (h, edge, adj, mwh, mwe, mb, gw, gb, l1w, l1b, l2w, l2b))
    cost = pl.CostEstimate(flops=int(B * flops_per_b),
                           transcendentals=int(B * transc_per_b),
                           bytes_accessed=int(in_bytes + B * F * 4))

    out = pl.pallas_call(
        kernel,
        out_shape=jax.ShapeDtypeStruct((B, 1, F), h.dtype),
        grid_spec=pltpu.PrefetchScalarGridSpec(
            num_scalar_prefetch=0,
            grid=(B,),
            in_specs=[
                pl.BlockSpec((1, N, F), lambda b: (b, 0, 0)),          # h
                pl.BlockSpec((1, N, N, E), lambda b: (b, 0, 0, 0)),    # edge
                pl.BlockSpec((1, N, N), lambda b: (b, 0, 0)),          # adj
                pl.BlockSpec((L, 2, F, F), lambda b: (0, 0, 0, 0)),    # message W (h parts)
                pl.BlockSpec((L, E, F), lambda b: (0, 0, 0)),          # message W (edge part)
                pl.BlockSpec((L, 1, F), lambda b: (0, 0, 0)),          # message bias
                pl.BlockSpec((L, 6, F, F), lambda b: (0, 0, 0, 0)),    # GRU weights
                pl.BlockSpec((L, 4, 1, F), lambda b: (0, 0, 0, 0)),    # GRU biases
                pl.BlockSpec((2, F, F), lambda b: (0, 0, 0)),          # L1 (split for h / h0)
                pl.BlockSpec((1, F), lambda b: (0, 0)),                # L1 bias
                pl.BlockSpec((F, F), lambda b: (0, 0)),                # L2
                pl.BlockSpec((1, F), lambda b: (0, 0)),                # L2 bias
            ],
            out_specs=pl.BlockSpec((1, 1, F), lambda b: (b, 0, 0)),
        ),
        compiler_params=pltpu.CompilerParams(
            dimension_semantics=("parallel",),   # batch shards across TensorCores
        ),
        cost_estimate=cost,
    )(h, edge, adj, mwh, mwe, mb, gw, gb, l1w, l1b, l2w, l2b)
    return out.reshape(B, F)


# ----------------------------------------------------------------------------
# Pure-JAX reference (direct translation of the PyTorch module)
# ----------------------------------------------------------------------------
def ggnn_block_reference(h, edge, adj, params):
    prec = jax.lax.Precision.HIGHEST
    b, N, F = h.shape
    h0 = h
    for lp in params["layers"]:
        W, Wb = lp["W"], lp["Wb"]
        Wih, Whh, bih, bhh = lp["Wih"], lp["Whh"], lp["bih"], lp["bhh"]
        h1 = jnp.broadcast_to(h[:, None, :, :], (b, N, N, F))
        h2 = jnp.broadcast_to(h[:, :, None, :], (b, N, N, F))
        cat = jnp.concatenate([h1, edge, h2], axis=-1)
        m = (jnp.matmul(cat, W.T, precision=prec) + Wb) * adj[..., None]
        m = m.mean(axis=2)
        x = h.reshape(-1, F)
        hid = m.reshape(-1, F)
        gi = jnp.matmul(x, Wih.T, precision=prec) + bih
        gh = jnp.matmul(hid, Whh.T, precision=prec) + bhh
        i_r, i_z, i_n = jnp.split(gi, 3, axis=-1)
        h_r, h_z, h_n = jnp.split(gh, 3, axis=-1)
        r = jax.nn.sigmoid(i_r + h_r)
        z = jax.nn.sigmoid(i_z + h_z)
        n = jnp.tanh(i_n + r * h_n)
        new_h = (1.0 - z) * n + z * hid
        h = jax.nn.relu(new_h).reshape(b, N, F)
    g = jax.nn.sigmoid(jnp.matmul(jnp.concatenate([h, h0], axis=-1),
                                  params["L1"].T, precision=prec) + params["bL1"])
    hh = jnp.matmul(h, params["L2"].T, precision=prec) + params["bL2"]
    R = (g * hh).mean(axis=1)
    return jax.nn.relu(R)


def init_params(key, fdim, edim, num_layers):
    def uniform(k, shape, bound):
        return jax.random.uniform(k, shape, jnp.float32, -bound, bound)

    params = {"layers": []}
    k = key
    bw = 1.0 / float(2 * fdim + edim) ** 0.5
    bg = 1.0 / float(fdim) ** 0.5
    for _ in range(num_layers):
        k, k1, k2, k3, k4, k5, k6 = jax.random.split(k, 7)
        params["layers"].append({
            "W": uniform(k1, (fdim, 2 * fdim + edim), bw),
            "Wb": uniform(k2, (fdim,), bw),
            "Wih": uniform(k3, (3 * fdim, fdim), bg),
            "Whh": uniform(k4, (3 * fdim, fdim), bg),
            "bih": uniform(k5, (3 * fdim,), bg),
            "bhh": uniform(k6, (3 * fdim,), bg),
        })
    k, k1, k2, k3, k4 = jax.random.split(k, 5)
    b1 = 1.0 / float(2 * fdim) ** 0.5
    params["L1"] = uniform(k1, (fdim, 2 * fdim), b1)
    params["bL1"] = uniform(k2, (fdim,), b1)
    params["L2"] = uniform(k3, (fdim, fdim), bg)
    params["bL2"] = uniform(k4, (fdim,), bg)
    return params


if __name__ == "__main__":
    key = jax.random.PRNGKey(0)
    B, N, F, E, L = 2, 8, 32, 16, 2

    key, kh, ke, ka, kp = jax.random.split(key, 5)
    h = jax.random.normal(kh, (B, N, F), jnp.float32)
    edge = jax.random.normal(ke, (B, N, N, E), jnp.float32)
    adj = (jax.random.uniform(ka, (B, N, N)) > 0.4).astype(jnp.float32)
    params = init_params(kp, F, E, L)

    out = ggnn_block_forward(h, edge, adj, params)
    out = jax.block_until_ready(out)

    ref = ggnn_block_reference(h, edge, adj, params)
    assert out.shape == (B, F) and out.dtype == h.dtype
    max_diff = float(jnp.max(jnp.abs(out - ref)))
    assert jnp.allclose(out, ref, atol=2e-3, rtol=2e-3), f"mismatch vs reference: {max_diff}"

    print("KERNEL_OK")
</pallas_src>

<mosaic_0001>
module attributes {stable_mosaic.version = 11 : i64} {
  func.func @_ggnn_block_kernel(%arg0: i32, %arg1: memref<1x8x32xf32, #tpu.memory_space<vmem>>, %arg2: memref<1x8x8x16xf32, #tpu.memory_space<vmem>>, %arg3: memref<1x8x8xf32, #tpu.memory_space<vmem>>, %arg4: memref<2x2x32x32xf32, #tpu.memory_space<vmem>>, %arg5: memref<2x16x32xf32, #tpu.memory_space<vmem>>, %arg6: memref<2x1x32xf32, #tpu.memory_space<vmem>>, %arg7: memref<2x6x32x32xf32, #tpu.memory_space<vmem>>, %arg8: memref<2x4x1x32xf32, #tpu.memory_space<vmem>>, %arg9: memref<2x32x32xf32, #tpu.memory_space<vmem>>, %arg10: memref<1x32xf32, #tpu.memory_space<vmem>>, %arg11: memref<32x32xf32, #tpu.memory_space<vmem>>, %arg12: memref<1x32xf32, #tpu.memory_space<vmem>>, %arg13: memref<1x1x32xf32, #tpu.memory_space<vmem>>) attributes {dimension_semantics = [#tpu.dimension_semantics<parallel>], iteration_bounds = array<i64: 2>, scalar_prefetch = 0 : i64, scratch_operands = 0 : i64, tpu.core_type = #tpu.core_type<tc>, window_params = [{transform_indices = @transform_0, window_bounds = array<i64: 1, 8, 32>}, {transform_indices = @transform_1, window_bounds = array<i64: 1, 8, 8, 16>}, {transform_indices = @transform_2, window_bounds = array<i64: 1, 8, 8>}, {pipeline_mode = #tpu.pipeline_mode<synchronous>, transform_indices = @transform_3, window_bounds = array<i64: 2, 2, 32, 32>}, {pipeline_mode = #tpu.pipeline_mode<synchronous>, transform_indices = @transform_4, window_bounds = array<i64: 2, 16, 32>}, {pipeline_mode = #tpu.pipeline_mode<synchronous>, transform_indices = @transform_5, window_bounds = array<i64: 2, 1, 32>}, {pipeline_mode = #tpu.pipeline_mode<synchronous>, transform_indices = @transform_6, window_bounds = array<i64: 2, 6, 32, 32>}, {pipeline_mode = #tpu.pipeline_mode<synchronous>, transform_indices = @transform_7, window_bounds = array<i64: 2, 4, 1, 32>}, {pipeline_mode = #tpu.pipeline_mode<synchronous>, transform_indices = @transform_8, window_bounds = array<i64: 2, 32, 32>}, {pipeline_mode = #tpu.pipeline_mode<synchronous>, transform_indices = @transform_9, window_bounds = array<i64: 1, 32>}, {pipeline_mode = #tpu.pipeline_mode<synchronous>, transform_indices = @transform_10, window_bounds = array<i64: 32, 32>}, {pipeline_mode = #tpu.pipeline_mode<synchronous>, transform_indices = @transform_11, window_bounds = array<i64: 1, 32>}, {transform_indices = @transform_12, window_bounds = array<i64: 1, 1, 32>}]} {
    %c0 = arith.constant 0 : index
    %c0_0 = arith.constant 0 : index
    %c0_1 = arith.constant 0 : index
    %0 = vector.load %arg1[%c0, %c0_0, %c0_1] : memref<1x8x32xf32, #tpu.memory_space<vmem>>, vector<1x8x32xf32>
    %1 = vector.shape_cast %0 : vector<1x8x32xf32> to vector<8x32xf32>
    %c0_2 = arith.constant 0 : index
    %c0_3 = arith.constant 0 : index
    %c0_4 = arith.constant 0 : index
    %c0_5 = arith.constant 0 : index
    %2 = vector.load %arg2[%c0_2, %c0_3, %c0_4, %c0_5] : memref<1x8x8x16xf32, #tpu.memory_space<vmem>>, vector<1x8x8x16xf32>
    %3 = vector.shape_cast %2 : vector<1x8x8x16xf32> to vector<8x8x16xf32>
    %c0_6 = arith.constant 0 : index
    %c0_7 = arith.constant 0 : index
    %c0_8 = arith.constant 0 : index
    %4 = vector.load %arg3[%c0_6, %c0_7, %c0_8] : memref<1x8x8xf32, #tpu.memory_space<vmem>>, vector<1x8x8xf32>
    %5 = vector.shape_cast %4 : vector<1x8x8xf32> to vector<8x8xf32>
    %cst = arith.constant dense<0.000000e+00> : vector<8xf32>
    %6 = vector.multi_reduction <add>, %5, %cst [1] : vector<8x8xf32> to vector<8xf32>
    %7 = vector.shape_cast %6 : vector<8xf32> to vector<8x1xf32>
    %8 = vector.shape_cast %5 : vector<8x8xf32> to vector<8x8x1xf32>
    %9 = vector.broadcast %8 : vector<8x8x1xf32> to vector<8x8x16xf32>
    %10 = arith.mulf %9, %3 : vector<8x8x16xf32>
    %cst_9 = arith.constant dense<0.000000e+00> : vector<8x16xf32>
    %11 = vector.multi_reduction <add>, %10, %cst_9 [1] : vector<8x8x16xf32> to vector<8x16xf32>
    %c0_10 = arith.constant 0 : index
    %c0_11 = arith.constant 0 : index
    %c0_12 = arith.constant 0 : index
    %c0_13 = arith.constant 0 : index
    %12 = vector.load %arg4[%c0_10, %c0_11, %c0_12, %c0_13] : memref<2x2x32x32xf32, #tpu.memory_space<vmem>>, vector<1x1x32x32xf32>
    %13 = vector.shape_cast %12 : vector<1x1x32x32xf32> to vector<32x32xf32>
    %c0_14 = arith.constant 0 : index
    %c1 = arith.constant 1 : index
    %c0_15 = arith.constant 0 : index
    %c0_16 = arith.constant 0 : index
    %14 = vector.load %arg4[%c0_14, %c1, %c0_15, %c0_16] : memref<2x2x32x32xf32, #tpu.memory_space<vmem>>, vector<1x1x32x32xf32>
    %15 = vector.shape_cast %14 : vector<1x1x32x32xf32> to vector<32x32xf32>
    %c0_17 = arith.constant 0 : index
    %c0_18 = arith.constant 0 : index
    %c0_19 = arith.constant 0 : index
    %16 = vector.load %arg5[%c0_17, %c0_18, %c0_19] : memref<2x16x32xf32, #tpu.memory_space<vmem>>, vector<1x16x32xf32>
    %17 = vector.shape_cast %16 : vector<1x16x32xf32> to vector<16x32xf32>
    %c0_20 = arith.constant 0 : index
    %c0_21 = arith.constant 0 : index
    %c0_22 = arith.constant 0 : index
    %18 = vector.load %arg6[%c0_20, %c0_21, %c0_22] : memref<2x1x32xf32, #tpu.memory_space<vmem>>, vector<1x1x32xf32>
    %19 = vector.shape_cast %18 : vector<1x1x32xf32> to vector<1x32xf32>
    %cst_23 = arith.constant dense<0.000000e+00> : vector<8x32xf32>
    %20 = tpu.matmul %1, %13, %cst_23 {dimension_numbers = #tpu.dot_dimension_numbers<[1], [0], [0], [1], [0, 0, 1, 1], [], []>} : vector<8x32xf32>, vector<32x32xf32>, vector<8x32xf32> -> vector<8x32xf32>
    %cst_24 = arith.constant dense<0.000000e+00> : vector<8x32xf32>
    %21 = tpu.matmul %1, %15, %cst_24 {dimension_numbers = #tpu.dot_dimension_numbers<[1], [0], [0], [1], [0, 0, 1, 1], [], []>} : vector<8x32xf32>, vector<32x32xf32>, vector<8x32xf32> -> vector<8x32xf32>
    %cst_25 = arith.constant dense<0.000000e+00> : vector<8x32xf32>
    %22 = tpu.matmul %5, %20, %cst_25 {dimension_numbers = #tpu.dot_dimension_numbers<[1], [0], [0], [1], [0, 0, 1, 1], [], []>} : vector<8x8xf32>, vector<8x32xf32>, vector<8x32xf32> -> vector<8x32xf32>
    %cst_26 = arith.constant dense<0.000000e+00> : vector<8x32xf32>
    %23 = tpu.matmul %11, %17, %cst_26 {dimension_numbers = #tpu.dot_dimension_numbers<[1], [0], [0], [1], [0, 0, 1, 1], [], []>} : vector<8x16xf32>, vector<16x32xf32>, vector<8x32xf32> -> vector<8x32xf32>
    %24 = arith.addf %22, %23 : vector<8x32xf32>
    %25 = vector.broadcast %19 : vector<1x32xf32> to vector<8x32xf32>
    %26 = arith.addf %21, %25 : vector<8x32xf32>
    %27 = vector.broadcast %7 : vector<8x1xf32> to vector<8x32xf32>
    %28 = arith.mulf %27, %26 : vector<8x32xf32>
    %29 = arith.addf %24, %28 : vector<8x32xf32>
    %cst_27 = arith.constant 1.250000e-01 : f32
    %30 = vector.broadcast %cst_27 : f32 to vector<8x32xf32>
    %31 = arith.mulf %29, %30 : vector<8x32xf32>
    %c0_28 = arith.constant 0 : index
    %c0_29 = arith.constant 0 : index
    %c0_30 = arith.constant 0 : index
    %c0_31 = arith.constant 0 : index
    %32 = vector.load %arg7[%c0_28, %c0_29, %c0_30, %c0_31] : memref<2x6x32x32xf32, #tpu.memory_space<vmem>>, vector<1x1x32x32xf32>
    %33 = vector.shape_cast %32 : vector<1x1x32x32xf32> to vector<32x32xf32>
    %c0_32 = arith.constant 0 : index
    %c1_33 = arith.constant 1 : index
    %c0_34 = arith.constant 0 : index
    %c0_35 = arith.constant 0 : index
    %34 = vector.load %arg7[%c0_32, %c1_33, %c0_34, %c0_35] : memref<2x6x32x32xf32, #tpu.memory_space<vmem>>, vector<1x1x32x32xf32>
    %35 = vector.shape_cast %34 : vector<1x1x32x32xf32> to vector<32x32xf32>
    %c0_36 = arith.constant 0 : index
    %c2 = arith.constant 2 : index
    %c0_37 = arith.constant 0 : index
    %c0_38 = arith.constant 0 : index
    %36 = vector.load %arg7[%c0_36, %c2, %c0_37, %c0_38] : memref<2x6x32x32xf32, #tpu.memory_space<vmem>>, vector<1x1x32x32xf32>
    %37 = vector.shape_cast %36 : vector<1x1x32x32xf32> to vector<32x32xf32>
    %c0_39 = arith.constant 0 : index
    %c3 = arith.constant 3 : index
    %c0_40 = arith.constant 0 : index
    %c0_41 = arith.constant 0 : index
    %38 = vector.load %arg7[%c0_39, %c3, %c0_40, %c0_41] : memref<2x6x32x32xf32, #tpu.memory_space<vmem>>, vector<1x1x32x32xf32>
    %39 = vector.shape_cast %38 : vector<1x1x32x32xf32> to vector<32x32xf32>
    %c0_42 = arith.constant 0 : index
    %c4 = arith.constant 4 : index
    %c0_43 = arith.constant 0 : index
    %c0_44 = arith.constant 0 : index
    %40 = vector.load %arg7[%c0_42, %c4, %c0_43, %c0_44] : memref<2x6x32x32xf32, #tpu.memory_space<vmem>>, vector<1x1x32x32xf32>
    %41 = vector.shape_cast %40 : vector<1x1x32x32xf32> to vector<32x32xf32>
    %c0_45 = arith.constant 0 : index
    %c5 = arith.constant 5 : index
    %c0_46 = arith.constant 0 : index
    %c0_47 = arith.constant 0 : index
    %42 = vector.load %arg7[%c0_45, %c5, %c0_46, %c0_47] : memref<2x6x32x32xf32, #tpu.memory_space<vmem>>, vector<1x1x32x32xf32>
    %43 = vector.shape_cast %42 : vector<1x1x32x32xf32> to vector<32x32xf32>
    %c0_48 = arith.constant 0 : index
    %c0_49 = arith.constant 0 : index
    %c0_50 = arith.constant 0 : index
    %c0_51 = arith.constant 0 : index
    %44 = vector.load %arg8[%c0_48, %c0_49, %c0_50, %c0_51] : memref<2x4x1x32xf32, #tpu.memory_space<vmem>>, vector<1x1x1x32xf32>
    %45 = vector.shape_cast %44 : vector<1x1x1x32xf32> to vector<1x32xf32>
    %c0_52 = arith.constant 0 : index
    %c1_53 = arith.constant 1 : index
    %c0_54 = arith.constant 0 : index
    %c0_55 = arith.constant 0 : index
    %46 = vector.load %arg8[%c0_52, %c1_53, %c0_54, %c0_55] : memref<2x4x1x32xf32, #tpu.memory_space<vmem>>, vector<1x1x1x32xf32>
    %47 = vector.shape_cast %46 : vector<1x1x1x32xf32> to vector<1x32xf32>
    %c0_56 = arith.constant 0 : index
    %c2_57 = arith.constant 2 : index
    %c0_58 = arith.constant 0 : index
    %c0_59 = arith.constant 0 : index
    %48 = vector.load %arg8[%c0_56, %c2_57, %c0_58, %c0_59] : memref<2x4x1x32xf32, #tpu.memory_space<vmem>>, vector<1x1x1x32xf32>
    %49 = vector.shape_cast %48 : vector<1x1x1x32xf32> to vector<1x32xf32>
    %c0_60 = arith.constant 0 : index
    %c3_61 = arith.constant 3 : index
    %c0_62 = arith.constant 0 : index
    %c0_63 = arith.constant 0 : index
    %50 = vector.load %arg8[%c0_60, %c3_61, %c0_62, %c0_63] : memref<2x4x1x32xf32, #tpu.memory_space<vmem>>, vector<1x1x1x32xf32>
    %51 = vector.shape_cast %50 : vector<1x1x1x32xf32> to vector<1x32xf32>
    %cst_64 = arith.constant dense<0.000000e+00> : vector<8x32xf32>
    %52 = tpu.matmul %1, %33, %cst_64 {dimension_numbers = #tpu.dot_dimension_numbers<[1], [0], [0], [1], [0, 0, 1, 1], [], []>} : vector<8x32xf32>, vector<32x32xf32>, vector<8x32xf32> -> vector<8x32xf32>
    %cst_65 = arith.constant dense<0.000000e+00> : vector<8x32xf32>
    %53 = tpu.matmul %31, %39, %cst_65 {dimension_numbers = #tpu.dot_dimension_numbers<[1], [0], [0], [1], [0, 0, 1, 1], [], []>} : vector<8x32xf32>, vector<32x32xf32>, vector<8x32xf32> -> vector<8x32xf32>
    %54 = arith.addf %52, %53 : vector<8x32xf32>
    %55 = vector.broadcast %45 : vector<1x32xf32> to vector<8x32xf32>
    %56 = arith.addf %54, %55 : vector<8x32xf32>
    %57 = arith.negf %56 : vector<8x32xf32>
    %58 = math.exp %57 : vector<8x32xf32>
    %cst_66 = arith.constant 1.000000e+00 : f32
    %59 = vector.broadcast %cst_66 : f32 to vector<8x32xf32>
    %60 = arith.addf %59, %58 : vector<8x32xf32>
    %61 = arith.divf %59, %60 : vector<8x32xf32>
    %cst_67 = arith.constant dense<0.000000e+00> : vector<8x32xf32>
    %62 = tpu.matmul %1, %35, %cst_67 {dimension_numbers = #tpu.dot_dimension_numbers<[1], [0], [0], [1], [0, 0, 1, 1], [], []>} : vector<8x32xf32>, vector<32x32xf32>, vector<8x32xf32> -> vector<8x32xf32>
    %cst_68 = arith.constant dense<0.000000e+00> : vector<8x32xf32>
    %63 = tpu.matmul %31, %41, %cst_68 {dimension_numbers = #tpu.dot_dimension_numbers<[1], [0], [0], [1], [0, 0, 1, 1], [], []>} : vector<8x32xf32>, vector<32x32xf32>, vector<8x32xf32> -> vector<8x32xf32>
    %64 = arith.addf %62, %63 : vector<8x32xf32>
    %65 = vector.broadcast %47 : vector<1x32xf32> to vector<8x32xf32>
    %66 = arith.addf %64, %65 : vector<8x32xf32>
    %67 = arith.negf %66 : vector<8x32xf32>
    %68 = math.exp %67 : vector<8x32xf32>
    %cst_69 = arith.constant 1.000000e+00 : f32
    %69 = vector.broadcast %cst_69 : f32 to vector<8x32xf32>
    %70 = arith.addf %69, %68 : vector<8x32xf32>
    %71 = arith.divf %69, %70 : vector<8x32xf32>
    %cst_70 = arith.constant dense<0.000000e+00> : vector<8x32xf32>
    %72 = tpu.matmul %1, %37, %cst_70 {dimension_numbers = #tpu.dot_dimension_numbers<[1], [0], [0], [1], [0, 0, 1, 1], [], []>} : vector<8x32xf32>, vector<32x32xf32>, vector<8x32xf32> -> vector<8x32xf32>
    %73 = vector.broadcast %49 : vector<1x32xf32> to vector<8x32xf32>
    %74 = arith.addf %72, %73 : vector<8x32xf32>
    %cst_71 = arith.constant dense<0.000000e+00> : vector<8x32xf32>
    %75 = tpu.matmul %31, %43, %cst_71 {dimension_numbers = #tpu.dot_dimension_numbers<[1], [0], [0], [1], [0, 0, 1, 1], [], []>} : vector<8x32xf32>, vector<32x32xf32>, vector<8x32xf32> -> vector<8x32xf32>
    %76 = vector.broadcast %51 : vector<1x32xf32> to vector<8x32xf32>
    %77 = arith.addf %75, %76 : vector<8x32xf32>
    %78 = arith.mulf %61, %77 : vector<8x32xf32>
    %79 = arith.addf %74, %78 : vector<8x32xf32>
    %80 = math.tanh %79 : vector<8x32xf32>
    %cst_72 = arith.constant 1.000000e+00 : f32
    %81 = vector.broadcast %cst_72 : f32 to vector<8x32xf32>
    %82 = arith.subf %81, %71 : vector<8x32xf32>
    %83 = arith.mulf %82, %80 : vector<8x32xf32>
    %84 = arith.mulf %71, %31 : vector<8x32xf32>
    %85 = arith.addf %83, %84 : vector<8x32xf32>
    %cst_73 = arith.constant 0.000000e+00 : f32
    %86 = vector.broadcast %cst_73 : f32 to vector<8x32xf32>
    %87 = arith.maximumf %85, %86 : vector<8x32xf32>
    %c1_74 = arith.constant 1 : index
    %c0_75 = arith.constant 0 : index
    %c0_76 = arith.constant 0 : index
    %c0_77 = arith.constant 0 : index
    %88 = vector.load %arg4[%c1_74, %c0_75, %c0_76, %c0_77] : memref<2x2x32x32xf32, #tpu.memory_space<vmem>>, vector<1x1x32x32xf32>
    %89 = vector.shape_cast %88 : vector<1x1x32x32xf32> to vector<32x32xf32>
    %c1_78 = arith.constant 1 : index
    %c1_79 = arith.constant 1 : index
    %c0_80 = arith.constant 0 : index
    %c0_81 = arith.constant 0 : index
    %90 = vector.load %arg4[%c1_78, %c1_79, %c0_80, %c0_81] : memref<2x2x32x32xf32, #tpu.memory_space<vmem>>, vector<1x1x32x32xf32>
    %91 = vector.shape_cast %90 : vector<1x1x32x32xf32> to vector<32x32xf32>
    %c1_82 = arith.constant 1 : index
    %c0_83 = arith.constant 0 : index
    %c0_84 = arith.constant 0 : index
    %92 = vector.load %arg5[%c1_82, %c0_83, %c0_84] : memref<2x16x32xf32, #tpu.memory_space<vmem>>, vector<1x16x32xf32>
    %93 = vector.shape_cast %92 : vector<1x16x32xf32> to vector<16x32xf32>
    %c1_85 = arith.constant 1 : index
    %c0_86 = arith.constant 0 : index
    %c0_87 = arith.constant 0 : index
    %94 = vector.load %arg6[%c1_85, %c0_86, %c0_87] : memref<2x1x32xf32, #tpu.memory_space<vmem>>, vector<1x1x32xf32>
    %95 = vector.shape_cast %94 : vector<1x1x32xf32> to vector<1x32xf32>
    %cst_88 = arith.constant dense<0.000000e+00> : vector<8x32xf32>
    %96 = tpu.matmul %87, %89, %cst_88 {dimension_numbers = #tpu.dot_dimension_numbers<[1], [0], [0], [1], [0, 0, 1, 1], [], []>} : vector<8x32xf32>, vector<32x32xf32>, vector<8x32xf32> -> vector<8x32xf32>
    %cst_89 = arith.constant dense<0.000000e+00> : vector<8x32xf32>
    %97 = tpu.matmul %87, %91, %cst_89 {dimension_numbers = #tpu.dot_dimension_numbers<[1], [0], [0], [1], [0, 0, 1, 1], [], []>} : vector<8x32xf32>, vector<32x32xf32>, vector<8x32xf32> -> vector<8x32xf32>
    %cst_90 = arith.constant dense<0.000000e+00> : vector<8x32xf32>
    %98 = tpu.matmul %5, %96, %cst_90 {dimension_numbers = #tpu.dot_dimension_numbers<[1], [0], [0], [1], [0, 0, 1, 1], [], []>} : vector<8x8xf32>, vector<8x32xf32>, vector<8x32xf32> -> vector<8x32xf32>
    %cst_91 = arith.constant dense<0.000000e+00> : vector<8x32xf32>
    %99 = tpu.matmul %11, %93, %cst_91 {dimension_numbers = #tpu.dot_dimension_numbers<[1], [0], [0], [1], [0, 0, 1, 1], [], []>} : vector<8x16xf32>, vector<16x32xf32>, vector<8x32xf32> -> vector<8x32xf32>
    %100 = arith.addf %98, %99 : vector<8x32xf32>
    %101 = vector.broadcast %95 : vector<1x32xf32> to vector<8x32xf32>
    %102 = arith.addf %97, %101 : vector<8x32xf32>
    %103 = vector.broadcast %7 : vector<8x1xf32> to vector<8x32xf32>
    %104 = arith.mulf %103, %102 : vector<8x32xf32>
    %105 = arith.addf %100, %104 : vector<8x32xf32>
    %cst_92 = arith.constant 1.250000e-01 : f32
    %106 = vector.broadcast %cst_92 : f32 to vector<8x32xf32>
    %107 = arith.mulf %105, %106 : vector<8x32xf32>
    %c1_93 = arith.constant 1 : index
    %c0_94 = arith.constant 0 : index
    %c0_95 = arith.constant 0 : index
    %c0_96 = arith.constant 0 : index
    %108 = vector.load %arg7[%c1_93, %c0_94, %c0_95, %c0_96] : memref<2x6x32x32xf32, #tpu.memory_space<vmem>>, vector<1x1x32x32xf32>
    %109 = vector.shape_cast %108 : vector<1x1x32x32xf32> to vector<32x32xf32>
    %c1_97 = arith.constant 1 : index
    %c1_98 = arith.constant 1 : index
    %c0_99 = arith.constant 0 : index
    %c0_100 = arith.constant 0 : index
    %110 = vector.load %arg7[%c1_97, %c1_98, %c0_99, %c0_100] : memref<2x6x32x32xf32, #tpu.memory_space<vmem>>, vector<1x1x32x32xf32>
    %111 = vector.shape_cast %110 : vector<1x1x32x32xf32> to vector<32x32xf32>
    %c1_101 = arith.constant 1 : index
    %c2_102 = arith.constant 2 : index
    %c0_103 = arith.constant 0 : index
    %c0_104 = arith.constant 0 : index
    %112 = vector.load %arg7[%c1_101, %c2_102, %c0_103, %c0_104] : memref<2x6x32x32xf32, #tpu.memory_space<vmem>>, vector<1x1x32x32xf32>
    %113 = vector.shape_cast %112 : vector<1x1x32x32xf32> to vector<32x32xf32>
    %c1_105 = arith.constant 1 : index
    %c3_106 = arith.constant 3 : index
    %c0_107 = arith.constant 0 : index
    %c0_108 = arith.constant 0 : index
    %114 = vector.load %arg7[%c1_105, %c3_106, %c0_107, %c0_108] : memref<2x6x32x32xf32, #tpu.memory_space<vmem>>, vector<1x1x32x32xf32>
    %115 = vector.shape_cast %114 : vector<1x1x32x32xf32> to vector<32x32xf32>
    %c1_109 = arith.constant 1 : index
    %c4_110 = arith.constant 4 : index
    %c0_111 = arith.constant 0 : index
    %c0_112 = arith.constant 0 : index
    %116 = vector.load %arg7[%c1_109, %c4_110, %c0_111, %c0_112] : memref<2x6x32x32xf32, #tpu.memory_space<vmem>>, vector<1x1x32x32xf32>
    %117 = vector.shape_cast %116 : vector<1x1x32x32xf32> to vector<32x32xf32>
    %c1_113 = arith.constant 1 : index
    %c5_114 = arith.constant 5 : index
    %c0_115 = arith.constant 0 : index
    %c0_116 = arith.constant 0 : index
    %118 = vector.load %arg7[%c1_113, %c5_114, %c0_115, %c0_116] : memref<2x6x32x32xf32, #tpu.memory_space<vmem>>, vector<1x1x32x32xf32>
    %119 = vector.shape_cast %118 : vector<1x1x32x32xf32> to vector<32x32xf32>
    %c1_117 = arith.constant 1 : index
    %c0_118 = arith.constant 0 : index
    %c0_119 = arith.constant 0 : index
    %c0_120 = arith.constant 0 : index
    %120 = vector.load %arg8[%c1_117, %c0_118, %c0_119, %c0_120] : memref<2x4x1x32xf32, #tpu.memory_space<vmem>>, vector<1x1x1x32xf32>
    %121 = vector.shape_cast %120 : vector<1x1x1x32xf32> to vector<1x32xf32>
    %c1_121 = arith.constant 1 : index
    %c1_122 = arith.constant 1 : index
    %c0_123 = arith.constant 0 : index
    %c0_124 = arith.constant 0 : index
    %122 = vector.load %arg8[%c1_121, %c1_122, %c0_123, %c0_124] : memref<2x4x1x32xf32, #tpu.memory_space<vmem>>, vector<1x1x1x32xf32>
    %123 = vector.shape_cast %122 : vector<1x1x1x32xf32> to vector<1x32xf32>
    %c1_125 = arith.constant 1 : index
    %c2_126 = arith.constant 2 : index
    %c0_127 = arith.constant 0 : index
    %c0_128 = arith.constant 0 : index
    %124 = vector.load %arg8[%c1_125, %c2_126, %c0_127, %c0_128] : memref<2x4x1x32xf32, #tpu.memory_space<vmem>>, vector<1x1x1x32xf32>
    %125 = vector.shape_cast %124 : vector<1x1x1x32xf32> to vector<1x32xf32>
    %c1_129 = arith.constant 1 : index
    %c3_130 = arith.constant 3 : index
    %c0_131 = arith.constant 0 : index
    %c0_132 = arith.constant 0 : index
    %126 = vector.load %arg8[%c1_129, %c3_130, %c0_131, %c0_132] : memref<2x4x1x32xf32, #tpu.memory_space<vmem>>, vector<1x1x1x32xf32>
    %127 = vector.shape_cast %126 : vector<1x1x1x32xf32> to vector<1x32xf32>
    %cst_133 = arith.constant dense<0.000000e+00> : vector<8x32xf32>
    %128 = tpu.matmul %87, %109, %cst_133 {dimension_numbers = #tpu.dot_dimension_numbers<[1], [0], [0], [1], [0, 0, 1, 1], [], []>} : vector<8x32xf32>, vector<32x32xf32>, vector<8x32xf32> -> vector<8x32xf32>
    %cst_134 = arith.constant dense<0.000000e+00> : vector<8x32xf32>
    %129 = tpu.matmul %107, %115, %cst_134 {dimension_numbers = #tpu.dot_dimension_numbers<[1], [0], [0], [1], [0, 0, 1, 1], [], []>} : vector<8x32xf32>, vector<32x32xf32>, vector<8x32xf32> -> vector<8x32xf32>
    %130 = arith.addf %128, %129 : vector<8x32xf32>
    %131 = vector.broadcast %121 : vector<1x32xf32> to vector<8x32xf32>
    %132 = arith.addf %130, %131 : vector<8x32xf32>
    %133 = arith.negf %132 : vector<8x32xf32>
    %134 = math.exp %133 : vector<8x32xf32>
    %cst_135 = arith.constant 1.000000e+00 : f32
    %135 = vector.broadcast %cst_135 : f32 to vector<8x32xf32>
    %136 = arith.addf %135, %134 : vector<8x32xf32>
    %137 = arith.divf %135, %136 : vector<8x32xf32>
    %cst_136 = arith.constant dense<0.000000e+00> : vector<8x32xf32>
    %138 = tpu.matmul %87, %111, %cst_136 {dimension_numbers = #tpu.dot_dimension_numbers<[1], [0], [0], [1], [0, 0, 1, 1], [], []>} : vector<8x32xf32>, vector<32x32xf32>, vector<8x32xf32> -> vector<8x32xf32>
    %cst_137 = arith.constant dense<0.000000e+00> : vector<8x32xf32>
    %139 = tpu.matmul %107, %117, %cst_137 {dimension_numbers = #tpu.dot_dimension_numbers<[1], [0], [0], [1], [0, 0, 1, 1], [], []>} : vector<8x32xf32>, vector<32x32xf32>, vector<8x32xf32> -> vector<8x32xf32>
    %140 = arith.addf %138, %139 : vector<8x32xf32>
    %141 = vector.broadcast %123 : vector<1x32xf32> to vector<8x32xf32>
    %142 = arith.addf %140, %141 : vector<8x32xf32>
    %143 = arith.negf %142 : vector<8x32xf32>
    %144 = math.exp %143 : vector<8x32xf32>
    %cst_138 = arith.constant 1.000000e+00 : f32
    %145 = vector.broadcast %cst_138 : f32 to vector<8x32xf32>
    %146 = arith.addf %145, %144 : vector<8x32xf32>
    %147 = arith.divf %145, %146 : vector<8x32xf32>
    %cst_139 = arith.constant dense<0.000000e+00> : vector<8x32xf32>
    %148 = tpu.matmul %87, %113, %cst_139 {dimension_numbers = #tpu.dot_dimension_numbers<[1], [0], [0], [1], [0, 0, 1, 1], [], []>} : vector<8x32xf32>, vector<32x32xf32>, vector<8x32xf32> -> vector<8x32xf32>
    %149 = vector.broadcast %125 : vector<1x32xf32> to vector<8x32xf32>
    %150 = arith.addf %148, %149 : vector<8x32xf32>
    %cst_140 = arith.constant dense<0.000000e+00> : vector<8x32xf32>
    %151 = tpu.matmul %107, %119, %cst_140 {dimension_numbers = #tpu.dot_dimension_numbers<[1], [0], [0], [1], [0, 0, 1, 1], [], []>} : vector<8x32xf32>, vector<32x32xf32>, vector<8x32xf32> -> vector<8x32xf32>
    %152 = vector.broadcast %127 : vector<1x32xf32> to vector<8x32xf32>
    %153 = arith.addf %151, %152 : vector<8x32xf32>
    %154 = arith.mulf %137, %153 : vector<8x32xf32>
    %155 = arith.addf %150, %154 : vector<8x32xf32>
    %156 = math.tanh %155 : vector<8x32xf32>
    %cst_141 = arith.constant 1.000000e+00 : f32
    %157 = vector.broadcast %cst_141 : f32 to vector<8x32xf32>
    %158 = arith.subf %157, %147 : vector<8x32xf32>
    %159 = arith.mulf %158, %156 : vector<8x32xf32>
    %160 = arith.mulf %147, %107 : vector<8x32xf32>
    %161 = arith.addf %159, %160 : vector<8x32xf32>
    %cst_142 = arith.constant 0.000000e+00 : f32
    %162 = vector.broadcast %cst_142 : f32 to vector<8x32xf32>
    %163 = arith.maximumf %161, %162 : vector<8x32xf32>
    %c0_143 = arith.constant 0 : index
    %c0_144 = arith.constant 0 : index
    %c0_145 = arith.constant 0 : index
    %164 = vector.load %arg9[%c0_143, %c0_144, %c0_145] : memref<2x32x32xf32, #tpu.memory_space<vmem>>, vector<1x32x32xf32>
    %165 = vector.shape_cast %164 : vector<1x32x32xf32> to vector<32x32xf32>
    %cst_146 = arith.constant dense<0.000000e+00> : vector<8x32xf32>
    %166 = tpu.matmul %163, %165, %cst_146 {dimension_numbers = #tpu.dot_dimension_numbers<[1], [0], [0], [1], [0, 0, 1, 1], [], []>} : vector<8x32xf32>, vector<32x32xf32>, vector<8x32xf32> -> vector<8x32xf32>
    %c1_147 = arith.constant 1 : index
    %c0_148 = arith.constant 0 : index
    %c0_149 = arith.constant 0 : index
    %167 = vector.load %arg9[%c1_147, %c0_148, %c0_149] : memref<2x32x32xf32, #tpu.memory_space<vmem>>, vector<1x32x32xf32>
    %168 = vector.shape_cast %167 : vector<1x32x32xf32> to vector<32x32xf32>
    %cst_150 = arith.constant dense<0.000000e+00> : vector<8x32xf32>
    %169 = tpu.matmul %1, %168, %cst_150 {dimension_numbers = #tpu.dot_dimension_numbers<[1], [0], [0], [1], [0, 0, 1, 1], [], []>} : vector<8x32xf32>, vector<32x32xf32>, vector<8x32xf32> -> vector<8x32xf32>
    %170 = arith.addf %166, %169 : vector<8x32xf32>
    %c0_151 = arith.constant 0 : index
    %c0_152 = arith.constant 0 : index
    %171 = vector.load %arg10[%c0_151, %c0_152] : memref<1x32xf32, #tpu.memory_space<vmem>>, vector<1x32xf32>
    %172 = vector.broadcast %171 : vector<1x32xf32> to vector<8x32xf32>
    %173 = arith.addf %170, %172 : vector<8x32xf32>
    %174 = arith.negf %173 : vector<8x32xf32>
    %175 = math.exp %174 : vector<8x32xf32>
    %cst_153 = arith.constant 1.000000e+00 : f32
    %176 = vector.broadcast %cst_153 : f32 to vector<8x32xf32>
    %177 = arith.addf %176, %175 : vector<8x32xf32>
    %178 = arith.divf %176, %177 : vector<8x32xf32>
    %c0_154 = arith.constant 0 : index
    %c0_155 = arith.constant 0 : index
    %179 = vector.load %arg11[%c0_154, %c0_155] : memref<32x32xf32, #tpu.memory_space<vmem>>, vector<32x32xf32>
    %cst_156 = arith.constant dense<0.000000e+00> : vector<8x32xf32>
    %180 = tpu.matmul %163, %179, %cst_156 {dimension_numbers = #tpu.dot_dimension_numbers<[1], [0], [0], [1], [0, 0, 1, 1], [], []>} : vector<8x32xf32>, vector<32x32xf32>, vector<8x32xf32> -> vector<8x32xf32>
    %c0_157 = arith.constant 0 : index
    %c0_158 = arith.constant 0 : index
    %181 = vector.load %arg12[%c0_157, %c0_158] : memref<1x32xf32, #tpu.memory_space<vmem>>, vector<1x32xf32>
    %182 = vector.broadcast %181 : vector<1x32xf32> to vector<8x32xf32>
    %183 = arith.addf %180, %182 : vector<8x32xf32>
    %184 = arith.mulf %178, %183 : vector<8x32xf32>
    %cst_159 = arith.constant dense<0.000000e+00> : vector<32xf32>
    %185 = vector.multi_reduction <add>, %184, %cst_159 [0] : vector<8x32xf32> to vector<32xf32>
    %186 = vector.shape_cast %185 : vector<32xf32> to vector<1x32xf32>
    %cst_160 = arith.constant 8.000000e+00 : f32
    %187 = vector.broadcast %cst_160 : f32 to vector<1x32xf32>
    %188 = arith.divf %186, %187 : vector<1x32xf32>
    %cst_161 = arith.constant 0.000000e+00 : f32
    %189 = vector.broadcast %cst_161 : f32 to vector<1x32xf32>
    %190 = arith.maximumf %188, %189 : vector<1x32xf32>
    %191 = vector.shape_cast %190 : vector<1x32xf32> to vector<1x1x32xf32>
    %c0_162 = arith.constant 0 : index
    %c0_163 = arith.constant 0 : index
    %c0_164 = arith.constant 0 : index
    %192 = vector.load %arg13[%c0_162, %c0_163, %c0_164] : memref<1x1x32xf32, #tpu.memory_space<vmem>>, vector<1x1x32xf32>
    tpu.vector_store %arg13[%c0_162, %c0_163, %c0_164], %191 {strides = array<i32>} : memref<1x1x32xf32, #tpu.memory_space<vmem>>, vector<1x1x32xf32>,
    return
  }
  func.func @transform_0(%arg0: i32) -> (i32, i32, i32) {
    %c0_i32 = arith.constant 0 : i32
    %c0_i32_0 = arith.constant 0 : i32
    %c0_i32_1 = arith.constant 0 : i32
    return %arg0, %c0_i32, %c0_i32_0 : i32, i32, i32
  }
  func.func @transform_1(%arg0: i32) -> (i32, i32, i32, i32) {
    %c0_i32 = arith.constant 0 : i32
    %c0_i32_0 = arith.constant 0 : i32
    %c0_i32_1 = arith.constant 0 : i32
    %c0_i32_2 = arith.constant 0 : i32
    return %arg0, %c0_i32, %c0_i32_0, %c0_i32_1 : i32, i32, i32, i32
  }
  func.func @transform_2(%arg0: i32) -> (i32, i32, i32) {
    %c0_i32 = arith.constant 0 : i32
    %c0_i32_0 = arith.constant 0 : i32
    %c0_i32_1 = arith.constant 0 : i32
    return %arg0, %c0_i32, %c0_i32_0 : i32, i32, i32
  }
  func.func @transform_3(%arg0: i32) -> (i32, i32, i32, i32) {
    %c0_i32 = arith.constant 0 : i32
    %c0_i32_0 = arith.constant 0 : i32
    %c0_i32_1 = arith.constant 0 : i32
    %c0_i32_2 = arith.constant 0 : i32
    %c0_i32_3 = arith.constant 0 : i32
    return %c0_i32, %c0_i32_0, %c0_i32_1, %c0_i32_2 : i32, i32, i32, i32
  }
  func.func @transform_4(%arg0: i32) -> (i32, i32, i32) {
    %c0_i32 = arith.constant 0 : i32
    %c0_i32_0 = arith.constant 0 : i32
    %c0_i32_1 = arith.constant 0 : i32
    %c0_i32_2 = arith.constant 0 : i32
    return %c0_i32, %c0_i32_0, %c0_i32_1 : i32, i32, i32
  }
  func.func @transform_5(%arg0: i32) -> (i32, i32, i32) {
    %c0_i32 = arith.constant 0 : i32
    %c0_i32_0 = arith.constant 0 : i32
    %c0_i32_1 = arith.constant 0 : i32
    %c0_i32_2 = arith.constant 0 : i32
    return %c0_i32, %c0_i32_0, %c0_i32_1 : i32, i32, i32
  }
  func.func @transform_6(%arg0: i32) -> (i32, i32, i32, i32) {
    %c0_i32 = arith.constant 0 : i32
    %c0_i32_0 = arith.constant 0 : i32
    %c0_i32_1 = arith.constant 0 : i32
    %c0_i32_2 = arith.constant 0 : i32
    %c0_i32_3 = arith.constant 0 : i32
    return %c0_i32, %c0_i32_0, %c0_i32_1, %c0_i32_2 : i32, i32, i32, i32
  }
  func.func @transform_7(%arg0: i32) -> (i32, i32, i32, i32) {
    %c0_i32 = arith.constant 0 : i32
    %c0_i32_0 = arith.constant 0 : i32
    %c0_i32_1 = arith.constant 0 : i32
    %c0_i32_2 = arith.constant 0 : i32
    %c0_i32_3 = arith.constant 0 : i32
    return %c0_i32, %c0_i32_0, %c0_i32_1, %c0_i32_2 : i32, i32, i32, i32
  }
  func.func @transform_8(%arg0: i32) -> (i32, i32, i32) {
    %c0_i32 = arith.constant 0 : i32
    %c0_i32_0 = arith.constant 0 : i32
    %c0_i32_1 = arith.constant 0 : i32
    %c0_i32_2 = arith.constant 0 : i32
    return %c0_i32, %c0_i32_0, %c0_i32_1 : i32, i32, i32
  }
  func.func @transform_9(%arg0: i32) -> (i32, i32) {
    %c0_i32 = arith.constant 0 : i32
    %c0_i32_0 = arith.constant 0 : i32
    %c0_i32_1 = arith.constant 0 : i32
    return %c0_i32, %c0_i32_0 : i32, i32
  }
  func.func @transform_10(%arg0: i32) -> (i32, i32) {
    %c0_i32 = arith.constant 0 : i32
    %c0_i32_0 = arith.constant 0 : i32
    %c0_i32_1 = arith.constant 0 : i32
    return %c0_i32, %c0_i32_0 : i32, i32
  }
  func.func @transform_11(%arg0: i32) -> (i32, i32) {
    %c0_i32 = arith.constant 0 : i32
    %c0_i32_0 = arith.constant 0 : i32
    %c0_i32_1 = arith.constant 0 : i32
    return %c0_i32, %c0_i32_0 : i32, i32
  }
  func.func @transform_12(%arg0: i32) -> (i32, i32, i32) {
    %c0_i32 = arith.constant 0 : i32
    %c0_i32_0 = arith.constant 0 : i32
    %c0_i32_1 = arith.constant 0 : i32
    return %arg0, %c0_i32, %c0_i32_0 : i32, i32, i32
  }
}

</mosaic_0001>

<llo_original>
// kernel: tpu_custom_call.1
$region0: #{tpu_custom_call.1}
  #allocation0 [shape = 'u32[]', space=smem, size = 0x4, offset = 0x4, fixed_abs, tag = 'smem constant byte address 0x4 - core index']
  #allocation1 [shape = 'u32[144,128]{1,0:T(1,128)}', space=vmem, size = 0x12000, scoped, tag = 'internal scratch']
  %s0 = inlined_call_operand.hbm [shape: f32[2,8,32], index: 0, kind: input, shape index: {}]
  %s1 = inlined_call_operand.hbm [shape: f32[2,8,8,16], index: 1, kind: input, shape index: {}]
  %s2 = inlined_call_operand.hbm [shape: f32[2,8,8], index: 2, kind: input, shape index: {}]
  %s3 = inlined_call_operand.hbm [shape: f32[2,2,32,32], index: 3, kind: input, shape index: {}]
  %s4 = inlined_call_operand.hbm [shape: f32[2,16,32], index: 4, kind: input, shape index: {}]
  %s5 = inlined_call_operand.vmem [shape: f32[2,1,32], index: 5, kind: input, shape index: {}]
  %s6 = inlined_call_operand.hbm [shape: f32[2,6,32,32], index: 6, kind: input, shape index: {}]
  %s7 = inlined_call_operand.hbm [shape: f32[2,4,1,32], index: 7, kind: input, shape index: {}]
  %s8 = inlined_call_operand.hbm [shape: f32[2,32,32], index: 8, kind: input, shape index: {}]
  %s9 = inlined_call_operand.vmem [shape: f32[1,32], index: 9, kind: input, shape index: {}]
  %s10 = inlined_call_operand.vmem [shape: f32[32,32], index: 10, kind: input, shape index: {}]
  %s11 = inlined_call_operand.vmem [shape: f32[1,32], index: 11, kind: input, shape index: {}]
  %s12 = inlined_call_operand.hbm [shape: f32[2,1,32], index: 12, kind: output, shape index: {}]
  %s13 = sld [smem:[#allocation0]]
  $region113: #{tpu_custom_call.1} parent=0
    _
  %s15 = ssub.s32 1, %s13
  %s16 = scalar_select 0, %s15, %s13
  $region1: #{tpu_custom_call.1} parent=0
    #allocation2 [shape = 'u8[8192]{0}', space=vmem, size = 0x2000, scoped, tag = 'input window, operand 0']
    #allocation3 [shape = 's32[2]{0}', space=sflag, size = 0x8, scoped, tag = 'scoped memory for tpu_custom_call.1']
    #allocation4 [shape = 's32[2]{0}', space=sflag, size = 0x8, scoped, tag = 'scoped memory for tpu_custom_call.1']
    #allocation5 [shape = 'u8[65536]{0}', space=vmem, size = 0x10000, scoped, tag = 'input window, operand 1']
    #allocation6 [shape = 's32[2]{0}', space=sflag, size = 0x8, scoped, tag = 'scoped memory for tpu_custom_call.1']
    #allocation7 [shape = 'u8[8192]{0}', space=vmem, size = 0x2000, scoped, tag = 'input window, operand 2']
    #allocation8 [shape = 'u8[65536]{0}', space=vmem, size = 0x10000, scoped, tag = 'input window, operand 3, single buffered']
    #allocation9 [shape = 's32[1]{0}', space=sflag, size = 0x4, scoped, tag = 'scoped memory for tpu_custom_call.1']
    #allocation10 [shape = 'u8[16384]{0}', space=vmem, size = 0x4000, scoped, tag = 'input window, operand 4, single buffered']
    #allocation11 [shape = 'u8[196608]{0}', space=vmem, size = 0x30000, scoped, tag = 'input window, operand 6, single buffered']
    #allocation12 [shape = 's32[1]{0}', space=sflag, size = 0x4, scoped, tag = 'scoped memory for tpu_custom_call.1']
    #allocation13 [shape = 'u8[4096]{0}', space=vmem, size = 0x1000, scoped, tag = 'input window, operand 7, single buffered']
    #allocation14 [shape = 'u8[32768]{0}', space=vmem, size = 0x8000, scoped, tag = 'input window, operand 8, single buffered']
    #allocation15 [shape = 's32[1]{0}', space=sflag, size = 0x4, scoped, tag = 'scoped memory for tpu_custom_call.1']
    #allocation16 [shape = 'u8[1024]{0}', space=vmem, size = 0x400, scoped, tag = 'output window, operand 0']
    %17 = vsyncpa [#allocation3], 0
    %s18 = scalar_lea.sflag [#allocation3], 1
    %19 = vsyncpa %s18, 0
    %20 = vsyncpa [#allocation6], 0
    %s21 = scalar_lea.sflag [#allocation6], 1
    %22 = vsyncpa %s21, 0
    %23 = vsyncpa [#allocation9], 0
    %24 = vsyncpa [#allocation12], 0
    %25 = vsyncpa [#allocation15], 0
    %26 = vsyncpa [#allocation4], 0
    %s27 = scalar_lea.sflag [#allocation4], 1
    %28 = vsyncpa %s27, 0
    loop: start=0, step=1, limit=4
    $region2: #{tpu_custom_call.1} parent=1 // loop_pre_header
      _
    $region3: #{tpu_custom_call.1} parent=1 // loop_header
      %s30 = sphi 0, %s34
      %p31 = scmp.ge.s32.totalorder %s30, 4
      %s40 = sphi 0, %s42
      %s43 = sphi 0, %s40
      %s44 = sphi 0, %s43
      %s60 = sphi 0, %s44
      %s66 = sphi 0, %s68
      %s69 = sphi 0, %s66
      %s70 = sphi 0, %s69
      %s86 = sphi 0, %s70
      %s92 = sphi 0, %s94
      %s95 = sphi 0, %s92
      %s96 = sphi 0, %s95
      %s112 = sphi 0, %s96
      %s116 = sphi 0, %s116
      %s118 = sphi 0, %s116
      %s119 = sphi 0, %s118
      %s133 = sphi 0, %s119
      %s137 = sphi 0, %s137
      %s139 = sphi 0, %s137
      %s140 = sphi 0, %s139
      %s154 = sphi 0, %s140
      %s158 = sphi 0, %s158
      %s160 = sphi 0, %s158
      %s161 = sphi 0, %s160
      %s175 = sphi 0, %s161
      %s179 = sphi 0, %s179
      %s181 = sphi 0, %s179
      %s182 = sphi 0, %s181
      %s196 = sphi 0, %s182
      %s200 = sphi 0, %s200
      %s202 = sphi 0, %s200
      %s203 = sphi 0, %s202
      %s217 = sphi 0, %s203
      %s221 = sphi 0, %s221
      %s223 = sphi 0, %s221
      %s224 = sphi 0, %s223
      %s238 = sphi 0, %s224
      %s242 = sphi 0, %s242
      %s244 = sphi 0, %s242
      %s245 = sphi 0, %s244
      %s259 = sphi 0, %s245
      %s263 = sphi 0, %s263
      %s265 = sphi 0, %s263
      %s266 = sphi 0, %s265
      %s280 = sphi 0, %s266
      %s284 = sphi 0, %s284
      %s286 = sphi 0, %s284
      %s287 = sphi 0, %s286
      %s301 = sphi 0, %s287
      %s307 = sphi 0, %s309
      %s310 = sphi 0, %s307
      %s311 = sphi 0, %s310
      %s327 = sphi 0, %s311
    $region4: #{tpu_custom_call.1} parent=1 // loop_header_branch
      %33 = sbr.rel (%p31) target = $region8
    $region5: #{tpu_custom_call.1} parent=1 // loop_body
      %s35 = ssub.s32 %s30, 1
      %s36 = ssub.s32 %s30, 2
      %s37 = sadd.s32 %s30, 1
      %s38 = ssub.s32 %s30, %s37
      %p39 = scmp.eq.s32.totalorder %s38, 0
      %s41 = sadd.s32 %s40, 1
      %s42 = scalar_select %p39, %s40, %s41
      %p45 = pneg %p39
      %p46 = scmp.eq.s32.totalorder %s30, 1
      %p47 = por %p45, %p46
      %p48 = scmp.ne.s32.totalorder %s40, %s43
      %p49 = scmp.eq.s32.totalorder %s30, 0
      %p50 = por %p48, %p49
      %p51 = scmp.ne.s32.totalorder %s40, %s43
      %p52 = scmp.eq.s32.totalorder %s35, 1
      %p53 = por %p51, %p52
      %p54 = scmp.ne.s32.totalorder %s43, %s44
      %p55 = scmp.eq.s32.totalorder %s35, 0
      %p56 = por %p54, %p55
      %p57 = scmp.ne.s32.totalorder %s43, %s44
      %p58 = scmp.eq.s32.totalorder %s36, 1
      %p59 = por %p57, %p58
      %p61 = scmp.ne.s32.totalorder %s44, %s60
      %p62 = scmp.eq.s32.totalorder %s36, 0
      %p63 = por %p61, %p62
      %s64 = ssub.s32 %s30, %s37
      %p65 = scmp.eq.s32.totalorder %s64, 0
      %s67 = sadd.s32 %s66, 1
      %s68 = scalar_select %p65, %s66, %s67
      %p71 = pneg %p65
      %p72 = scmp.eq.s32.totalorder %s30, 1
      %p73 = por %p71, %p72
      %p74 = scmp.ne.s32.totalorder %s66, %s69
      %p75 = scmp.eq.s32.totalorder %s30, 0
      %p76 = por %p74, %p75
      %p77 = scmp.ne.s32.totalorder %s66, %s69
      %p78 = scmp.eq.s32.totalorder %s35, 1
      %p79 = por %p77, %p78
      %p80 = scmp.ne.s32.totalorder %s69, %s70
      %p81 = scmp.eq.s32.totalorder %s35, 0
      %p82 = por %p80, %p81
      %p83 = scmp.ne.s32.totalorder %s69, %s70
      %p84 = scmp.eq.s32.totalorder %s36, 1
      %p85 = por %p83, %p84
      %p87 = scmp.ne.s32.totalorder %s70, %s86
      %p88 = scmp.eq.s32.totalorder %s36, 0
      %p89 = por %p87, %p88
      %s90 = ssub.s32 %s30, %s37
      %p91 = scmp.eq.s32.totalorder %s90, 0
      %s93 = sadd.s32 %s92, 1
      %s94 = scalar_select %p91, %s92, %s93
      %p97 = pneg %p91
      %p98 = scmp.eq.s32.totalorder %s30, 1
      %p99 = por %p97, %p98
      %p100 = scmp.ne.s32.totalorder %s92, %s95
      %p101 = scmp.eq.s32.totalorder %s30, 0
      %p102 = por %p100, %p101
      %p103 = scmp.ne.s32.totalorder %s92, %s95
      %p104 = scmp.eq.s32.totalorder %s35, 1
      %p105 = por %p103, %p104
      %p106 = scmp.ne.s32.totalorder %s95, %s96
      %p107 = scmp.eq.s32.totalorder %s35, 0
      %p108 = por %p106, %p107
      %p109 = scmp.ne.s32.totalorder %s95, %s96
      %p110 = scmp.eq.s32.totalorder %s36, 1
      %p111 = por %p109, %p110
      %p113 = scmp.ne.s32.totalorder %s96, %s112
      %p114 = scmp.eq.s32.totalorder %s36, 0
      %p115 = por %p113, %p114
      %s117 = sadd.s32 %s116, 1
      %p120 = scmp.eq.s32.totalorder %s30, 1
      %p121 = scmp.ne.s32.totalorder %s116, %s118
      %p122 = scmp.eq.s32.totalorder %s30, 0
      %p123 = por %p121, %p122
      %p124 = scmp.ne.s32.totalorder %s116, %s118
      %p125 = scmp.eq.s32.totalorder %s35, 1
      %p126 = por %p124, %p125
      %p127 = scmp.ne.s32.totalorder %s118, %s119
      %p128 = scmp.eq.s32.totalorder %s35, 0
      %p129 = por %p127, %p128
      %p130 = scmp.ne.s32.totalorder %s118, %s119
      %p131 = scmp.eq.s32.totalorder %s36, 1
      %p132 = por %p130, %p131
      %p134 = scmp.ne.s32.totalorder %s119, %s133
      %p135 = scmp.eq.s32.totalorder %s36, 0
      %p136 = por %p134, %p135
      %s138 = sadd.s32 %s137, 1
      %p141 = scmp.eq.s32.totalorder %s30, 1
      %p142 = scmp.ne.s32.totalorder %s137, %s139
      %p143 = scmp.eq.s32.totalorder %s30, 0
      %p144 = por %p142, %p143
      %p145 = scmp.ne.s32.totalorder %s137, %s139
      %p146 = scmp.eq.s32.totalorder %s35, 1
      %p147 = por %p145, %p146
      %p148 = scmp.ne.s32.totalorder %s139, %s140
      %p149 = scmp.eq.s32.totalorder %s35, 0
      %p150 = por %p148, %p149
      %p151 = scmp.ne.s32.totalorder %s139, %s140
      %p152 = scmp.eq.s32.totalorder %s36, 1
      %p153 = por %p151, %p152
      %p155 = scmp.ne.s32.totalorder %s140, %s154
      %p156 = scmp.eq.s32.totalorder %s36, 0
      %p157 = por %p155, %p156
      %s159 = sadd.s32 %s158, 1
      %p162 = scmp.eq.s32.totalorder %s30, 1
      %p163 = scmp.ne.s32.totalorder %s158, %s160
      %p164 = scmp.eq.s32.totalorder %s30, 0
      %p165 = por %p163, %p164
      %p166 = scmp.ne.s32.totalorder %s158, %s160
      %p167 = scmp.eq.s32.totalorder %s35, 1
      %p168 = por %p166, %p167
      %p169 = scmp.ne.s32.totalorder %s160, %s161
      %p170 = scmp.eq.s32.totalorder %s35, 0
      %p171 = por %p169, %p170
      %p172 = scmp.ne.s32.totalorder %s160, %s161
      %p173 = scmp.eq.s32.totalorder %s36, 1
      %p174 = por %p172, %p173
      %p176 = scmp.ne.s32.totalorder %s161, %s175
      %p177 = scmp.eq.s32.totalorder %s36, 0
      %p178 = por %p176, %p177
      %s180 = sadd.s32 %s179, 1
      %p183 = scmp.eq.s32.totalorder %s30, 1
      %p184 = scmp.ne.s32.totalorder %s179, %s181
      %p185 = scmp.eq.s32.totalorder %s30, 0
      %p186 = por %p184, %p185
      %p187 = scmp.ne.s32.totalorder %s179, %s181
      %p188 = scmp.eq.s32.totalorder %s35, 1
      %p189 = por %p187, %p188
      %p190 = scmp.ne.s32.totalorder %s181, %s182
      %p191 = scmp.eq.s32.totalorder %s35, 0
      %p192 = por %p190, %p191
      %p193 = scmp.ne.s32.totalorder %s181, %s182
      %p194 = scmp.eq.s32.totalorder %s36, 1
      %p195 = por %p193, %p194
      %p197 = scmp.ne.s32.totalorder %s182, %s196
      %p198 = scmp.eq.s32.totalorder %s36, 0
      %p199 = por %p197, %p198
      %s201 = sadd.s32 %s200, 1
      %p204 = scmp.eq.s32.totalorder %s30, 1
      %p205 = scmp.ne.s32.totalorder %s200, %s202
      %p206 = scmp.eq.s32.totalorder %s30, 0
      %p207 = por %p205, %p206
      %p208 = scmp.ne.s32.totalorder %s200, %s202
      %p209 = scmp.eq.s32.totalorder %s35, 1
      %p210 = por %p208, %p209
      %p211 = scmp.ne.s32.totalorder %s202, %s203
      %p212 = scmp.eq.s32.totalorder %s35, 0
      %p213 = por %p211, %p212
      %p214 = scmp.ne.s32.totalorder %s202, %s203
      %p215 = scmp.eq.s32.totalorder %s36, 1
      %p216 = por %p214, %p215
      %p218 = scmp.ne.s32.totalorder %s203, %s217
      %p219 = scmp.eq.s32.totalorder %s36, 0
      %p220 = por %p218, %p219
      %s222 = sadd.s32 %s221, 1
      %p225 = scmp.eq.s32.totalorder %s30, 1
      %p226 = scmp.ne.s32.totalorder %s221, %s223
      %p227 = scmp.eq.s32.totalorder %s30, 0
      %p228 = por %p226, %p227
      %p229 = scmp.ne.s32.totalorder %s221, %s223
      %p230 = scmp.eq.s32.totalorder %s35, 1
      %p231 = por %p229, %p230
      %p232 = scmp.ne.s32.totalorder %s223, %s224
      %p233 = scmp.eq.s32.totalorder %s35, 0
      %p234 = por %p232, %p233
      %p235 = scmp.ne.s32.totalorder %s223, %s224
      %p236 = scmp.eq.s32.totalorder %s36, 1
      %p237 = por %p235, %p236
      %p239 = scmp.ne.s32.totalorder %s224, %s238
      %p240 = scmp.eq.s32.totalorder %s36, 0
      %p241 = por %p239, %p240
      %s243 = sadd.s32 %s242, 1
      %p246 = scmp.eq.s32.totalorder %s30, 1
      %p247 = scmp.ne.s32.totalorder %s242, %s244
      %p248 = scmp.eq.s32.totalorder %s30, 0
      %p249 = por %p247, %p248
      %p250 = scmp.ne.s32.totalorder %s242, %s244
      %p251 = scmp.eq.s32.totalorder %s35, 1
      %p252 = por %p250, %p251
      %p253 = scmp.ne.s32.totalorder %s244, %s245
      %p254 = scmp.eq.s32.totalorder %s35, 0
      %p255 = por %p253, %p254
      %p256 = scmp.ne.s32.totalorder %s244, %s245
      %p257 = scmp.eq.s32.totalorder %s36, 1
      %p258 = por %p256, %p257
      %p260 = scmp.ne.s32.totalorder %s245, %s259
      %p261 = scmp.eq.s32.totalorder %s36, 0
      %p262 = por %p260, %p261
      %s264 = sadd.s32 %s263, 1
      %p267 = scmp.eq.s32.totalorder %s30, 1
      %p268 = scmp.ne.s32.totalorder %s263, %s265
      %p269 = scmp.eq.s32.totalorder %s30, 0
      %p270 = por %p268, %p269
      %p271 = scmp.ne.s32.totalorder %s263, %s265
      %p272 = scmp.eq.s32.totalorder %s35, 1
      %p273 = por %p271, %p272
      %p274 = scmp.ne.s32.totalorder %s265, %s266
      %p275 = scmp.eq.s32.totalorder %s35, 0
      %p276 = por %p274, %p275
      %p277 = scmp.ne.s32.totalorder %s265, %s266
      %p278 = scmp.eq.s32.totalorder %s36, 1
      %p279 = por %p277, %p278
      %p281 = scmp.ne.s32.totalorder %s266, %s280
      %p282 = scmp.eq.s32.totalorder %s36, 0
      %p283 = por %p281, %p282
      %s285 = sadd.s32 %s284, 1
      %p288 = scmp.eq.s32.totalorder %s30, 1
      %p289 = scmp.ne.s32.totalorder %s284, %s286
      %p290 = scmp.eq.s32.totalorder %s30, 0
      %p291 = por %p289, %p290
      %p292 = scmp.ne.s32.totalorder %s284, %s286
      %p293 = scmp.eq.s32.totalorder %s35, 1
      %p294 = por %p292, %p293
      %p295 = scmp.ne.s32.totalorder %s286, %s287
      %p296 = scmp.eq.s32.totalorder %s35, 0
      %p297 = por %p295, %p296
      %p298 = scmp.ne.s32.totalorder %s286, %s287
      %p299 = scmp.eq.s32.totalorder %s36, 1
      %p300 = por %p298, %p299
      %p302 = scmp.ne.s32.totalorder %s287, %s301
      %p303 = scmp.eq.s32.totalorder %s36, 0
      %p304 = por %p302, %p303
      %s305 = ssub.s32 %s30, %s37
      %p306 = scmp.eq.s32.totalorder %s305, 0
      %s308 = sadd.s32 %s307, 1
      %s309 = scalar_select %p306, %s307, %s308
      %p312 = pneg %p306
      %p313 = scmp.eq.s32.totalorder %s30, 1
      %p314 = por %p312, %p313
      %p315 = scmp.ne.s32.totalorder %s307, %s310
      %p316 = scmp.eq.s32.totalorder %s30, 0
      %p317 = por %p315, %p316
      %p318 = scmp.ne.s32.totalorder %s307, %s310
      %p319 = scmp.eq.s32.totalorder %s35, 1
      %p320 = por %p318, %p319
      %p321 = scmp.ne.s32.totalorder %s310, %s311
      %p322 = scmp.eq.s32.totalorder %s35, 0
      %p323 = por %p321, %p322
      %p324 = scmp.ne.s32.totalorder %s310, %s311
      %p325 = scmp.eq.s32.totalorder %s36, 1
      %p326 = por %p324, %p325
      %p328 = scmp.ne.s32.totalorder %s311, %s327
      %p329 = scmp.eq.s32.totalorder %s36, 0
      %p330 = por %p328, %p329
      %p331 = scmp.le.s32.totalorder 1, %s30
      %p332 = scmp.lt.s32.totalorder %s30, 3
      %p333 = pnand %p331, %p332
      %p334 = pneg %p333
      // Predicated region
      $region9: #{tpu_custom_call.1} parent=5 // pred_check
        _
      $region10: #{tpu_custom_call.1} parent=5 // pred_check_branch
        %336 = sbr.rel (%p333) target = $region12
      $region11: #{tpu_custom_call.1} parent=5 // pred_region
        %s337 = ssub.s32 %s30, 1
        // Predicated region
        $region13: #{tpu_custom_call.1} parent=11 // pred_check
          %p338 = pneg %p129
        $region14: #{tpu_custom_call.1} parent=11 // pred_check_branch
          %340 = sbr.rel (%p338) target = $region16
        $region15: #{tpu_custom_call.1} parent=11 // pred_region
          %s342 = ssub.s32 2048, 2048
          %343 = vsyncadd [#allocation9], %s342
          %s344 = sshll.u32 [#allocation8], 4
          %s345 = int_to_ptr.vmem [resolvable:$true] %s344
          %350 = dma.hbm_to_vmem [thread:$0]  %s3, 2048, %s345, [#allocation9], 128, 128, 8
        $region16: #{tpu_custom_call.1} parent=11 // pred_fallthru
          _
        // Predicated region
        $region17: #{tpu_custom_call.1} parent=11 // pred_check
          %p351 = pneg %p150
        $region18: #{tpu_custom_call.1} parent=11 // pred_check_branch
          %353 = sbr.rel (%p351) target = $region20
        $region19: #{tpu_custom_call.1} parent=11 // pred_region
          %s355 = ssub.s32 512, 512
          %356 = vsyncadd [#allocation9], %s355
          %s357 = sshll.u32 [#allocation10], 4
          %s358 = int_to_ptr.vmem [resolvable:$true] %s357
          %363 = dma.hbm_to_vmem [thread:$0]  %s4, 512, %s358, [#allocation9], 128, 128, 8
        $region20: #{tpu_custom_call.1} parent=11 // pred_fallthru
          _
        // Predicated region
        $region21: #{tpu_custom_call.1} parent=11 // pred_check
          %p364 = pneg %p171
        $region22: #{tpu_custom_call.1} parent=11 // pred_check_branch
          %366 = sbr.rel (%p364) target = $region24
        $region23: #{tpu_custom_call.1} parent=11 // pred_region
          _
        $region24: #{tpu_custom_call.1} parent=11 // pred_fallthru
          _
        // Predicated region
        $region25: #{tpu_custom_call.1} parent=11 // pred_check
          %p367 = pneg %p192
        $region26: #{tpu_custom_call.1} parent=11 // pred_check_branch
          %369 = sbr.rel (%p367) target = $region28
        $region27: #{tpu_custom_call.1} parent=11 // pred_region
          %s371 = ssub.s32 6144, 6144
          %372 = vsyncadd [#allocation12], %s371
          %s373 = sshll.u32 [#allocation11], 4
          %s374 = int_to_ptr.vmem [resolvable:$true] %s373
          %379 = dma.hbm_to_vmem [thread:$0]  %s6, 6144, %s374, [#allocation12], 128, 128, 8
        $region28: #{tpu_custom_call.1} parent=11 // pred_fallthru
          _
        // Predicated region
        $region29: #{tpu_custom_call.1} parent=11 // pred_check
          %p380 = pneg %p213
        $region30: #{tpu_custom_call.1} parent=11 // pred_check_branch
          %382 = sbr.rel (%p380) target = $region32
        $region31: #{tpu_custom_call.1} parent=11 // pred_region
          %s384 = ssub.s32 128, 128
          %385 = vsyncadd [#allocation12], %s384
          %s386 = sshll.u32 [#allocation13], 4
          %s387 = int_to_ptr.vmem [resolvable:$true] %s386
          %392 = dma.hbm_to_vmem [thread:$0]  %s7, 128, %s387, [#allocation12], 16, 16, 1
        $region32: #{tpu_custom_call.1} parent=11 // pred_fallthru
          _
        // Predicated region
        $region33: #{tpu_custom_call.1} parent=11 // pred_check
          %p393 = pneg %p234
        $region34: #{tpu_custom_call.1} parent=11 // pred_check_branch
          %395 = sbr.rel (%p393) target = $region36
        $region35: #{tpu_custom_call.1} parent=11 // pred_region
          %s397 = ssub.s32 1024, 1024
          %398 = vsyncadd [#allocation15], %s397
          %s399 = sshll.u32 [#allocation14], 4
          %s400 = int_to_ptr.vmem [resolvable:$true] %s399
          %405 = dma.hbm_to_vmem [thread:$0]  %s8, 1024, %s400, [#allocation15], 128, 128, 8
        $region36: #{tpu_custom_call.1} parent=11 // pred_fallthru
          _
        // Predicated region
        $region37: #{tpu_custom_call.1} parent=11 // pred_check
          %p406 = pneg %p255
        $region38: #{tpu_custom_call.1} parent=11 // pred_check_branch
          %408 = sbr.rel (%p406) target = $region40
        $region39: #{tpu_custom_call.1} parent=11 // pred_region
          _
        $region40: #{tpu_custom_call.1} parent=11 // pred_fallthru
          _
        // Predicated region
        $region41: #{tpu_custom_call.1} parent=11 // pred_check
          %p409 = pneg %p276
        $region42: #{tpu_custom_call.1} parent=11 // pred_check_branch
          %411 = sbr.rel (%p409) target = $region44
        $region43: #{tpu_custom_call.1} parent=11 // pred_region
          _
        $region44: #{tpu_custom_call.1} parent=11 // pred_fallthru
          _
        // Predicated region
        $region45: #{tpu_custom_call.1} parent=11 // pred_check
          %p412 = pneg %p297
        $region46: #{tpu_custom_call.1} parent=11 // pred_check_branch
          %414 = sbr.rel (%p412) target = $region48
        $region47: #{tpu_custom_call.1} parent=11 // pred_region
          _
        $region48: #{tpu_custom_call.1} parent=11 // pred_fallthru
          _
      $region12: #{tpu_custom_call.1} parent=5 // pred_fallthru
        _
      %p415 = scmp.lt.s32.totalorder %s30, 2
      // Predicated region
      $region49: #{tpu_custom_call.1} parent=5 // pred_check
        %p416 = pneg %p415
      $region50: #{tpu_custom_call.1} parent=5 // pred_check_branch
        %418 = sbr.rel (%p416) target = $region52
      $region51: #{tpu_custom_call.1} parent=5 // pred_region
        // Predicated region
        $region53: #{tpu_custom_call.1} parent=51 // pred_check
          %p419 = pneg %p50
        $region54: #{tpu_custom_call.1} parent=51 // pred_check_branch
          %421 = sbr.rel (%p419) target = $region56
        $region55: #{tpu_custom_call.1} parent=51 // pred_region
          %s422 = sand.u32 %s40, 1
          %s423 = scalar_lea.sflag [#allocation3], %s422
          %s424 = sand.u32 %s40, 1
          %s425 = smul.addr %s424, 8
          %s426 = scalar_lea.vmem [#allocation2], %s425
          %s428 = ssub.s32 128, 128
          %429 = vsyncadd %s423, %s428
          %s430 = smul.addr %s30, 128
          %s431 = scalar_lea.hbm %s0, %s430
          %s433 = sshll.u32 %s426, 4
          %s434 = int_to_ptr.vmem [resolvable:$true] %s433
          %436 = dma.hbm_to_vmem [thread:$0]  %s431, 128, %s434, %s423
        $region56: #{tpu_custom_call.1} parent=51 // pred_fallthru
          _
        // Predicated region
        $region57: #{tpu_custom_call.1} parent=51 // pred_check
          %p437 = pneg %p76
        $region58: #{tpu_custom_call.1} parent=51 // pred_check_branch
          %439 = sbr.rel (%p437) target = $region60
        $region59: #{tpu_custom_call.1} parent=51 // pred_region
          %s440 = sand.u32 %s30, 1
          %s441 = scalar_lea.sflag [#allocation6], %s440
          %s442 = sand.u32 %s66, 1
          %s443 = smul.addr %s442, 64
          %s444 = scalar_lea.vmem [#allocation5], %s443
          %s446 = ssub.s32 1024, 1024
          %447 = vsyncadd %s441, %s446
          %s448 = smul.addr %s30, 8
          %s449 = smul.addr %s448, 128
          %s450 = scalar_lea.hbm %s1, %s449
          %s451 = sshll.u32 %s444, 4
          %s452 = int_to_ptr.vmem [resolvable:$true] %s451
          %457 = dma.hbm_to_vmem [thread:$0]  %s450, 1024, %s452, %s441, 128, 128, 8
        $region60: #{tpu_custom_call.1} parent=51 // pred_fallthru
          _
        // Predicated region
        $region61: #{tpu_custom_call.1} parent=51 // pred_check
          %p458 = pneg %p102
        $region62: #{tpu_custom_call.1} parent=51 // pred_check_branch
          %460 = sbr.rel (%p458) target = $region64
        $region63: #{tpu_custom_call.1} parent=51 // pred_region
          %s461 = sand.u32 %s30, 1
          %s462 = scalar_lea.sflag [#allocation6], %s461
          %s463 = sand.u32 %s92, 1
          %s464 = smul.addr %s463, 8
          %s465 = scalar_lea.vmem [#allocation7], %s464
          %s467 = ssub.s32 128, 128
          %468 = vsyncadd %s462, %s467
          %s469 = smul.addr %s30, 128
          %s470 = scalar_lea.hbm %s2, %s469
          %s472 = sshll.u32 %s465, 4
          %s473 = int_to_ptr.vmem [resolvable:$true] %s472
          %475 = dma.hbm_to_vmem [thread:$0]  %s470, 128, %s473, %s462
        $region64: #{tpu_custom_call.1} parent=51 // pred_fallthru
          _
      $region52: #{tpu_custom_call.1} parent=5 // pred_fallthru
        _
      %p476 = scmp.le.s32.totalorder 1, %s30
      %p477 = scmp.lt.s32.totalorder %s30, 3
      %p478 = pnand %p476, %p477
      %p479 = pneg %p478
      // Predicated region
      $region65: #{tpu_custom_call.1} parent=5 // pred_check
        _
      $region66: #{tpu_custom_call.1} parent=5 // pred_check_branch
        %481 = sbr.rel (%p478) target = $region68
      $region67: #{tpu_custom_call.1} parent=5 // pred_region
        %s482 = ssub.s32 %s30, 1
        %s483 = sand.u32 %s43, 1
        %s484 = scalar_lea.sflag [#allocation3], %s483
        %s485 = sand.u32 %s43, 1
        %s486 = smul.addr %s485, 8
        %s487 = scalar_lea.vmem [#allocation2], %s486
        // Predicated region
        $region69: #{tpu_custom_call.1} parent=67 // pred_check
          %p488 = pneg %p56
        $region70: #{tpu_custom_call.1} parent=67 // pred_check_branch
          %490 = sbr.rel (%p488) target = $region72
        $region71: #{tpu_custom_call.1} parent=67 // pred_region
          %491 = dma.done %s484, 128
        $region72: #{tpu_custom_call.1} parent=67 // pred_fallthru
          _
        %s492 = sand.u32 %s35, 1
        %s493 = scalar_lea.sflag [#allocation6], %s492
        %s494 = sand.u32 %s69, 1
        %s495 = smul.addr %s494, 64
        %s496 = scalar_lea.vmem [#allocation5], %s495
        // Predicated region
        $region73: #{tpu_custom_call.1} parent=67 // pred_check
          %p497 = pneg %p82
        $region74: #{tpu_custom_call.1} parent=67 // pred_check_branch
          %499 = sbr.rel (%p497) target = $region76
        $region75: #{tpu_custom_call.1} parent=67 // pred_region
          %500 = dma.done %s493, 1024
        $region76: #{tpu_custom_call.1} parent=67 // pred_fallthru
          _
        %s501 = sand.u32 %s35, 1
        %s502 = scalar_lea.sflag [#allocation6], %s501
        %s503 = sand.u32 %s95, 1
        %s504 = smul.addr %s503, 8
        %s505 = scalar_lea.vmem [#allocation7], %s504
        // Predicated region
        $region77: #{tpu_custom_call.1} parent=67 // pred_check
          %p506 = pneg %p108
        $region78: #{tpu_custom_call.1} parent=67 // pred_check_branch
          %508 = sbr.rel (%p506) target = $region80
        $region79: #{tpu_custom_call.1} parent=67 // pred_region
          %509 = dma.done %s502, 128
        $region80: #{tpu_custom_call.1} parent=67 // pred_fallthru
          _
        // Predicated region
        $region81: #{tpu_custom_call.1} parent=67 // pred_check
          %p510 = pneg %p129
        $region82: #{tpu_custom_call.1} parent=67 // pred_check_branch
          %512 = sbr.rel (%p510) target = $region84
        $region83: #{tpu_custom_call.1} parent=67 // pred_region
          %513 = dma.done [#allocation9], 2048
        $region84: #{tpu_custom_call.1} parent=67 // pred_fallthru
          _
        // Predicated region
        $region85: #{tpu_custom_call.1} parent=67 // pred_check
          %p514 = pneg %p150
        $region86: #{tpu_custom_call.1} parent=67 // pred_check_branch
          %516 = sbr.rel (%p514) target = $region88
        $region87: #{tpu_custom_call.1} parent=67 // pred_region
          %517 = dma.done [#allocation9], 512
        $region88: #{tpu_custom_call.1} parent=67 // pred_fallthru
          _
        // Predicated region
        $region89: #{tpu_custom_call.1} parent=67 // pred_check
          %p518 = pneg %p192
        $region90: #{tpu_custom_call.1} parent=67 // pred_check_branch
          %520 = sbr.rel (%p518) target = $region92
        $region91: #{tpu_custom_call.1} parent=67 // pred_region
          %521 = dma.done [#allocation12], 6144
        $region92: #{tpu_custom_call.1} parent=67 // pred_fallthru
          _
        // Predicated region
        $region93: #{tpu_custom_call.1} parent=67 // pred_check
          %p522 = pneg %p213
        $region94: #{tpu_custom_call.1} parent=67 // pred_check_branch
          %524 = sbr.rel (%p522) target = $region96
        $region95: #{tpu_custom_call.1} parent=67 // pred_region
          %525 = dma.done [#allocation12], 128
        $region96: #{tpu_custom_call.1} parent=67 // pred_fallthru
          _
        // Predicated region
        $region97: #{tpu_custom_call.1} parent=67 // pred_check
          %p526 = pneg %p234
        $region98: #{tpu_custom_call.1} parent=67 // pred_check_branch
          %528 = sbr.rel (%p526) target = $region100
        $region99: #{tpu_custom_call.1} parent=67 // pred_region
          %529 = dma.done [#allocation15], 1024
        $region100: #{tpu_custom_call.1} parent=67 // pred_fallthru
          _
        %s530 = sand.u32 %s43, 1
        %s531 = scalar_lea.sflag [#allocation3], %s530
        %s532 = sand.u32 %s43, 1
        %s533 = smul.addr %s532, 8
        %s534 = scalar_lea.vmem [#allocation2], %s533
        %p535 = pneg %p56
        %p536 = pneg %p53
        %s537 = sand.u32 %s35, 1
        %s538 = scalar_lea.sflag [#allocation6], %s537
        %s539 = sand.u32 %s69, 1
        %s540 = smul.addr %s539, 64
        %s541 = scalar_lea.vmem [#allocation5], %s540
        %p542 = pneg %p82
        %p543 = pneg %p79
        %s544 = sand.u32 %s35, 1
        %s545 = scalar_lea.sflag [#allocation6], %s544
        %s546 = sand.u32 %s95, 1
        %s547 = smul.addr %s546, 8
        %s548 = scalar_lea.vmem [#allocation7], %s547
        %p549 = pneg %p108
        %p550 = pneg %p105
        %p551 = pneg %p129
        %p552 = pneg %p126
        %p553 = pneg %p150
        %p554 = pneg %p147
        %p555 = pneg %p171
        %p556 = pneg %p168
        %p557 = pneg %p192
        %p558 = pneg %p189
        %p559 = pneg %p213
        %p560 = pneg %p210
        %p561 = pneg %p234
        %p562 = pneg %p231
        %p563 = pneg %p255
        %p564 = pneg %p252
        %p565 = pneg %p276
        %p566 = pneg %p273
        %p567 = pneg %p297
        %p568 = pneg %p294
        %p569 = pneg %p323
        %p570 = pneg %p320
        %s571 = sand.u32 %s310, 1
        %s572 = scalar_lea.sflag [#allocation4], %s571
        %s573 = sand.u32 %s310, 1
        %s574 = scalar_lea.vmem [#allocation16], %s573
        %v575 = vld [vmem:[%s487] sm:$0xff]
        %v576 = vld [vmem:[%s496] sm:$0xff]
        %v577 = vld [vmem:[%s496 + $0x8] sm:$0xff]
        %v578 = vld [vmem:[%s496 + $0x10] sm:$0xff]
        %v579 = vld [vmem:[%s496 + $0x18] sm:$0xff]
        %v580 = vld [vmem:[%s496 + $0x20] sm:$0xff]
        %v581 = vld [vmem:[%s496 + $0x28] sm:$0xff]
        %v582 = vld [vmem:[%s496 + $0x30] sm:$0xff]
        %v583 = vld [vmem:[%s496 + $0x38] sm:$0xff]
        %v584 = vld [vmem:[%s505] sm:$0xff]
        %vm585 = vcmask 64512
        %v586 = vsel %vm585, %v584, 0.0
        %587 = vadd.xlane.f32.xlu0 %v586
        %v588 = vpop.xlane.xlu0 %587
        %v589 = vlaneseq
        %v590 = vshrl.u32 %v589, 7
        %v591 = vsub.s32 0, %v590
        %v592 = vrot.slane %v584, %v591
        %594 = vbcast.lane.b32.xlu0 %v592, 256
        %v595 = vpop.permute.xlu0 %594
        %v596 = vlaneseq
        %v597 = vshrl.u32 %v596, 7
        %v598 = vsub.s32 1, %v597
        %v599 = vrot.slane %v584, %v598
        %601 = vbcast.lane.b32.xlu0 %v599, 256
        %v602 = vpop.permute.xlu0 %601
        %v603 = vlaneseq
        %v604 = vshrl.u32 %v603, 7
        %v605 = vsub.s32 2, %v604
        %v606 = vrot.slane %v584, %v605
        %608 = vbcast.lane.b32.xlu0 %v606, 256
        %v609 = vpop.permute.xlu0 %608
        %v610 = vlaneseq
        %v611 = vshrl.u32 %v610, 7
        %v612 = vsub.s32 3, %v611
        %v613 = vrot.slane %v584, %v612
        %615 = vbcast.lane.b32.xlu0 %v613, 256
        %v616 = vpop.permute.xlu0 %615
        %v617 = vlaneseq
        %v618 = vshrl.u32 %v617, 7
        %v619 = vsub.s32 4, %v618
        %v620 = vrot.slane %v584, %v619
        %622 = vbcast.lane.b32.xlu0 %v620, 256
        %v623 = vpop.permute.xlu0 %622
        %v624 = vlaneseq
        %v625 = vshrl.u32 %v624, 7
        %v626 = vsub.s32 5, %v625
        %v627 = vrot.slane %v584, %v626
        %629 = vbcast.lane.b32.xlu0 %v627, 256
        %v630 = vpop.permute.xlu0 %629
        %v631 = vlaneseq
        %v632 = vshrl.u32 %v631, 7
        %v633 = vsub.s32 6, %v632
        %v634 = vrot.slane %v584, %v633
        %636 = vbcast.lane.b32.xlu0 %v634, 256
        %v637 = vpop.permute.xlu0 %636
        %v638 = vlaneseq
        %v639 = vshrl.u32 %v638, 7
        %v640 = vsub.s32 7, %v639
        %v641 = vrot.slane %v584, %v640
        %643 = vbcast.lane.b32.xlu0 %v641, 256
        %v644 = vpop.permute.xlu0 %643
        %v645 = vmul.f32 %v595, %v576
        %v646 = vmul.f32 %v602, %v577
        %v647 = vmul.f32 %v609, %v578
        %v648 = vmul.f32 %v616, %v579
        %v649 = vmul.f32 %v623, %v580
        %v650 = vmul.f32 %v630, %v581
        %v651 = vmul.f32 %v637, %v582
        %v652 = vmul.f32 %v644, %v583
        %vm653 = vcmask 130048
        %v654 = vsel %vm653, %v645, 0.0
        %v655 = vrot.slane %v654, 4
        %v656 = vadd.f32 %v654, %v655
        %v657 = vrot.slane %v656, 2
        %v658 = vadd.f32 %v656, %v657
        %v659 = vrot.slane %v658, 1
        %v660 = vadd.f32 %v658, %v659
        %v661 = vsel %vm653, %v646, 0.0
        %v662 = vrot.slane %v661, 4
        %v663 = vadd.f32 %v661, %v662
        %v664 = vrot.slane %v663, 2
        %v665 = vadd.f32 %v663, %v664
        %v666 = vrot.slane %v665, 1
        %v667 = vadd.f32 %v665, %v666
        %v668 = vsel %vm653, %v647, 0.0
        %v669 = vrot.slane %v668, 4
        %v670 = vadd.f32 %v668, %v669
        %v671 = vrot.slane %v670, 2
        %v672 = vadd.f32 %v670, %v671
        %v673 = vrot.slane %v672, 1
        %v674 = vadd.f32 %v672, %v673
        %v675 = vsel %vm653, %v648, 0.0
        %v676 = vrot.slane %v675, 4
        %v677 = vadd.f32 %v675, %v676
        %v678 = vrot.slane %v677, 2
        %v679 = vadd.f32 %v677, %v678
        %v680 = vrot.slane %v679, 1
        %v681 = vadd.f32 %v679, %v680
        %v682 = vsel %vm653, %v649, 0.0
        %v683 = vrot.slane %v682, 4
        %v684 = vadd.f32 %v682, %v683
        %v685 = vrot.slane %v684, 2
        %v686 = vadd.f32 %v684, %v685
        %v687 = vrot.slane %v686, 1
        %v688 = vadd.f32 %v686, %v687
        %v689 = vsel %vm653, %v650, 0.0
        %v690 = vrot.slane %v689, 4
        %v691 = vadd.f32 %v689, %v690
        %v692 = vrot.slane %v691, 2
        %v693 = vadd.f32 %v691, %v692
        %v694 = vrot.slane %v693, 1
        %v695 = vadd.f32 %v693, %v694
        %v696 = vsel %vm653, %v651, 0.0
        %v697 = vrot.slane %v696, 4
        %v698 = vadd.f32 %v696, %v697
        %v699 = vrot.slane %v698, 2
        %v700 = vadd.f32 %v698, %v699
        %v701 = vrot.slane %v700, 1
        %v702 = vadd.f32 %v700, %v701
        %v703 = vsel %vm653, %v652, 0.0
        %v704 = vrot.slane %v703, 4
        %v705 = vadd.f32 %v703, %v704
        %v706 = vrot.slane %v705, 2
        %v707 = vadd.f32 %v705, %v706
        %v708 = vrot.slane %v707, 1
        %v709 = vadd.f32 %v707, %v708
        %v710 = vld [vmem:[#allocation8] sm:$0xff]
        %v711 = vld [vmem:[#allocation8 + $0x8] sm:$0xff]
        %v712 = vld [vmem:[#allocation8 + $0x10] sm:$0xff]
        %v713 = vld [vmem:[#allocation8 + $0x18] sm:$0xff]
        %s714 = scalar_lea.vmem [#allocation8], 32
        %v715 = vld [vmem:[%s714] sm:$0xff]
        %v716 = vld [vmem:[%s714 + $0x8] sm:$0xff]
        %v717 = vld [vmem:[%s714 + $0x10] sm:$0xff]
        %v718 = vld [vmem:[%s714 + $0x18] sm:$0xff]
        %v719 = vld [vmem:[#allocation10] sm:$0xff]
        %v720 = vld [vmem:[#allocation10 + $0x8] sm:$0xff]
        %v721 = vld [vmem:[%s5] sm:$0x1]
        %vm722 = vcmask 261120
        %v724 = vsel %vm722, %v575, 0
        %726 = vmatprep.subr.mxu0 0.0
        %727 = vmatpush1.msra.mxu0 %v710
        %728 = vmatprep.subr.mxu0 0.0
        %729 = vmatpush1.msra.mxu0 %v711
        %730 = vmatprep.subr.mxu0 0.0
        %731 = vmatpush1.msra.mxu0 %v712
        %732 = vmatprep.subr.mxu0 0.0
        %733 = vmatpush1.msra.mxu0 %v713
        %734 = vmatprep.subr.mxu0 0.0
        %735 = vmatpush1.msra.mxu0 0.0
        %736 = vmatprep.subr.mxu0 0.0
        %737 = vmatpush1.msra.mxu0 0.0
        %738 = vmatprep.subr.mxu0 0.0
        %739 = vmatpush1.msra.mxu0 0.0
        %740 = vmatprep.subr.mxu0 0.0
        %741 = vmatpush1.msra.mxu0 0.0
        %742 = vmatprep.subr.mxu0 0.0
        %743 = vmatpush1.msra.mxu0 0.0
        %744 = vmatprep.subr.mxu0 0.0
        %745 = vmatpush1.msra.mxu0 0.0
        %746 = vmatprep.subr.mxu0 0.0
        %747 = vmatpush1.msra.mxu0 0.0
        %748 = vmatprep.subr.mxu0 0.0
        %749 = vmatpush1.msra.mxu0 0.0
        %750 = vmatprep.subr.mxu0 0.0
        %751 = vmatpush1.msra.mxu0 0.0
        %752 = vmatprep.subr.mxu0 0.0
        %753 = vmatpush1.msra.mxu0 0.0
        %754 = vmatprep.subr.mxu0 0.0
        %755 = vmatpush1.msra.mxu0 0.0
        %756 = vmatprep.subr.mxu0 0.0
        %757 = vmatpush1.msra.mxu0 0.0
        %758 = vmatprep.subr.mxu0 0.0
        %759 = vmatpush1.msra.mxu0 0.0
        %760 = vmatprep.subr.mxu0 0.0
        %761 = vmatpush1.msra.mxu0 0.0
        %762 = vmatprep.subr.mxu0 0.0
        %763 = vmatpush1.msra.mxu0 0.0
        %764 = vmatprep.subr.mxu0 0.0
        %765 = vmatpush1.msra.mxu0 0.0
        %766 = vmatprep.subr.mxu0 0.0
        %767 = vmatpush1.msra.mxu0 0.0
        %768 = vmatprep.subr.mxu0 0.0
        %769 = vmatpush1.msra.mxu0 0.0
        %770 = vmatprep.subr.mxu0 0.0
        %771 = vmatpush1.msra.mxu0 0.0
        %772 = vmatprep.subr.mxu0 0.0
        %773 = vmatpush1.msra.mxu0 0.0
        %774 = vmatprep.subr.mxu0 0.0
        %775 = vmatpush1.msra.mxu0 0.0
        %776 = vmatprep.subr.mxu0 0.0
        %777 = vmatpush1.msra.mxu0 0.0
        %778 = vmatprep.subr.mxu0 0.0
        %779 = vmatpush1.msra.mxu0 0.0
        %780 = vmatprep.subr.mxu0 0.0
        %781 = vmatpush1.msra.mxu0 0.0
        %782 = vmatprep.subr.mxu0 0.0
        %783 = vmatpush1.msra.mxu0 0.0
        %784 = vmatprep.subr.mxu0 0.0
        %785 = vmatpush1.msra.mxu0 0.0
        %786 = vmatprep.subr.mxu0 0.0
        %787 = vmatpush1.msra.mxu0 0.0
        %788 = vmatprep.subr.mxu0 0.0
        %789 = vmatpush1.msra.mxu0 0.0
        %790 = vmatprep.mubr.f32.mxu0 0.0
        %791 = vmatmul.mubr.f32.gmra.mrb[0].mxu0 %v724
        %v792 = vpop.f32.mrb[0].mxu0
        %v793 = vadd.f32 0.0, %v792
        %v794 = vpop.f32.mrb[0].mxu0
        %795 = vdwg.mxu0
        %vm804 = vcmask 1041409
        %v805 = vsel %vm804, %v667, %v660
        %vm806 = vcmask 1042434
        %v807 = vsel %vm806, %v674, %v805
        %vm808 = vcmask 1043459
        %v809 = vsel %vm808, %v681, %v807
        %vm810 = vcmask 1044484
        %v811 = vsel %vm810, %v688, %v809
        %vm812 = vcmask 1045509
        %v813 = vsel %vm812, %v695, %v811
        %vm814 = vcmask 1046534
        %v815 = vsel %vm814, %v702, %v813
        %vm816 = vcmask 1047559
        %v817 = vsel %vm816, %v709, %v815
        %v818 = vsel %vm653, %v817, 0
        %820 = vmatprep.subr.mxu0 0.0
        %821 = vmatpush1.msra.mxu0 %v719
        %822 = vmatprep.subr.mxu0 0.0
        %823 = vmatpush1.msra.mxu0 %v720
        %824 = vmatprep.subr.mxu0 0.0
        %825 = vmatpush1.msra.mxu0 0.0
        %826 = vmatprep.subr.mxu0 0.0
        %827 = vmatpush1.msra.mxu0 0.0
        %828 = vmatprep.subr.mxu0 0.0
        %829 = vmatpush1.msra.mxu0 0.0
        %830 = vmatprep.subr.mxu0 0.0
        %831 = vmatpush1.msra.mxu0 0.0
        %832 = vmatprep.subr.mxu0 0.0
        %833 = vmatpush1.msra.mxu0 0.0
        %834 = vmatprep.subr.mxu0 0.0
        %835 = vmatpush1.msra.mxu0 0.0
        %836 = vmatprep.subr.mxu0 0.0
        %837 = vmatpush1.msra.mxu0 0.0
        %838 = vmatprep.subr.mxu0 0.0
        %839 = vmatpush1.msra.mxu0 0.0
        %840 = vmatprep.subr.mxu0 0.0
        %841 = vmatpush1.msra.mxu0 0.0
        %842 = vmatprep.subr.mxu0 0.0
        %843 = vmatpush1.msra.mxu0 0.0
        %844 = vmatprep.subr.mxu0 0.0
        %845 = vmatpush1.msra.mxu0 0.0
        %846 = vmatprep.subr.mxu0 0.0
        %847 = vmatpush1.msra.mxu0 0.0
        %848 = vmatprep.subr.mxu0 0.0
        %849 = vmatpush1.msra.mxu0 0.0
        %850 = vmatprep.subr.mxu0 0.0
        %851 = vmatpush1.msra.mxu0 0.0
        %852 = vmatprep.subr.mxu0 0.0
        %853 = vmatpush1.msra.mxu0 0.0
        %854 = vmatprep.subr.mxu0 0.0
        %855 = vmatpush1.msra.mxu0 0.0
        %856 = vmatprep.subr.mxu0 0.0
        %857 = vmatpush1.msra.mxu0 0.0
        %858 = vmatprep.subr.mxu0 0.0
        %859 = vmatpush1.msra.mxu0 0.0
        %860 = vmatprep.subr.mxu0 0.0
        %861 = vmatpush1.msra.mxu0 0.0
        %862 = vmatprep.subr.mxu0 0.0
        %863 = vmatpush1.msra.mxu0 0.0
        %864 = vmatprep.subr.mxu0 0.0
        %865 = vmatpush1.msra.mxu0 0.0
        %866 = vmatprep.subr.mxu0 0.0
        %867 = vmatpush1.msra.mxu0 0.0
        %868 = vmatprep.subr.mxu0 0.0
        %869 = vmatpush1.msra.mxu0 0.0
        %870 = vmatprep.subr.mxu0 0.0
        %871 = vmatpush1.msra.mxu0 0.0
        %872 = vmatprep.subr.mxu0 0.0
        %873 = vmatpush1.msra.mxu0 0.0
        %874 = vmatprep.subr.mxu0 0.0
        %875 = vmatpush1.msra.mxu0 0.0
        %876 = vmatprep.subr.mxu0 0.0
        %877 = vmatpush1.msra.mxu0 0.0
        %878 = vmatprep.subr.mxu0 0.0
        %879 = vmatpush1.msra.mxu0 0.0
        %880 = vmatprep.subr.mxu0 0.0
        %881 = vmatpush1.msra.mxu0 0.0
        %882 = vmatprep.subr.mxu0 0.0
        %883 = vmatpush1.msra.mxu0 0.0
        %884 = vmatprep.mubr.f32.mxu0 0.0
        %885 = vmatmul.mubr.f32.gmra.mrb[0].mxu0 %v818
        %v886 = vpop.f32.mrb[0].mxu0
        %v887 = vadd.f32 0.0, %v886
        %v888 = vpop.f32.mrb[0].mxu0
        %889 = vdwg.mxu0
        %v891 = vsel %vm585, %v584, 0
        %893 = vmatprep.subr.mxu0 0.0
        %894 = vmatpush1.msra.mxu0 %v793
        %895 = vmatprep.subr.mxu0 0.0
        %896 = vmatpush1.msra.mxu0 0.0
        %897 = vmatprep.subr.mxu0 0.0
        %898 = vmatpush1.msra.mxu0 0.0
        %899 = vmatprep.subr.mxu0 0.0
        %900 = vmatpush1.msra.mxu0 0.0
        %901 = vmatprep.subr.mxu0 0.0
        %902 = vmatpush1.msra.mxu0 0.0
        %903 = vmatprep.subr.mxu0 0.0
        %904 = vmatpush1.msra.mxu0 0.0
        %905 = vmatprep.subr.mxu0 0.0
        %906 = vmatpush1.msra.mxu0 0.0
        %907 = vmatprep.subr.mxu0 0.0
        %908 = vmatpush1.msra.mxu0 0.0
        %909 = vmatprep.subr.mxu0 0.0
        %910 = vmatpush1.msra.mxu0 0.0
        %911 = vmatprep.subr.mxu0 0.0
        %912 = vmatpush1.msra.mxu0 0.0
        %913 = vmatprep.subr.mxu0 0.0
        %914 = vmatpush1.msra.mxu0 0.0
        %915 = vmatprep.subr.mxu0 0.0
        %916 = vmatpush1.msra.mxu0 0.0
        %917 = vmatprep.subr.mxu0 0.0
        %918 = vmatpush1.msra.mxu0 0.0
        %919 = vmatprep.subr.mxu0 0.0
        %920 = vmatpush1.msra.mxu0 0.0
        %921 = vmatprep.subr.mxu0 0.0
        %922 = vmatpush1.msra.mxu0 0.0
        %923 = vmatprep.subr.mxu0 0.0
        %924 = vmatpush1.msra.mxu0 0.0
        %925 = vmatprep.subr.mxu0 0.0
        %926 = vmatpush1.msra.mxu0 0.0
        %927 = vmatprep.subr.mxu0 0.0
        %928 = vmatpush1.msra.mxu0 0.0
        %929 = vmatprep.subr.mxu0 0.0
        %930 = vmatpush1.msra.mxu0 0.0
        %931 = vmatprep.subr.mxu0 0.0
        %932 = vmatpush1.msra.mxu0 0.0
        %933 = vmatprep.subr.mxu0 0.0
        %934 = vmatpush1.msra.mxu0 0.0
        %935 = vmatprep.subr.mxu0 0.0
        %936 = vmatpush1.msra.mxu0 0.0
        %937 = vmatprep.subr.mxu0 0.0
        %938 = vmatpush1.msra.mxu0 0.0
        %939 = vmatprep.subr.mxu0 0.0
        %940 = vmatpush1.msra.mxu0 0.0
        %941 = vmatprep.subr.mxu0 0.0
        %942 = vmatpush1.msra.mxu0 0.0
        %943 = vmatprep.subr.mxu0 0.0
        %944 = vmatpush1.msra.mxu0 0.0
        %945 = vmatprep.subr.mxu0 0.0
        %946 = vmatpush1.msra.mxu0 0.0
        %947 = vmatprep.subr.mxu0 0.0
        %948 = vmatpush1.msra.mxu0 0.0
        %949 = vmatprep.subr.mxu0 0.0
        %950 = vmatpush1.msra.mxu0 0.0
        %951 = vmatprep.subr.mxu0 0.0
        %952 = vmatpush1.msra.mxu0 0.0
        %953 = vmatprep.subr.mxu0 0.0
        %954 = vmatpush1.msra.mxu0 0.0
        %955 = vmatprep.subr.mxu0 0.0
        %956 = vmatpush1.msra.mxu0 0.0
        %957 = vmatprep.mubr.f32.mxu0 0.0
        %958 = vmatmul.mubr.f32.gmra.mrb[0].mxu0 %v891
        %v959 = vpop.f32.mrb[0].mxu0
        %v960 = vadd.f32 %v887, %v959
        %v961 = vpop.f32.mrb[0].mxu0
        %962 = vdwg.mxu0
        %v964 = vlaneseq
        %v965 = vshrl.u32 %v964, 7
        %v966 = vsub.s32 0, %v965
        %v967 = vrot.slane %v721, %v966
        %969 = vmatprep.subr.mxu0 0.0
        %970 = vmatpush1.msra.mxu0 %v715
        %971 = vmatprep.subr.mxu0 0.0
        %972 = vmatpush1.msra.mxu0 %v716
        %973 = vmatprep.subr.mxu0 0.0
        %974 = vmatpush1.msra.mxu0 %v717
        %975 = vmatprep.subr.mxu0 0.0
        %976 = vmatpush1.msra.mxu0 %v718
        %977 = vmatprep.subr.mxu0 0.0
        %978 = vmatpush1.msra.mxu0 0.0
        %979 = vmatprep.subr.mxu0 0.0
        %980 = vmatpush1.msra.mxu0 0.0
        %981 = vmatprep.subr.mxu0 0.0
        %982 = vmatpush1.msra.mxu0 0.0
        %983 = vmatprep.subr.mxu0 0.0
        %984 = vmatpush1.msra.mxu0 0.0
        %985 = vmatprep.subr.mxu0 0.0
        %986 = vmatpush1.msra.mxu0 0.0
        %987 = vmatprep.subr.mxu0 0.0
        %988 = vmatpush1.msra.mxu0 0.0
        %989 = vmatprep.subr.mxu0 0.0
        %990 = vmatpush1.msra.mxu0 0.0
        %991 = vmatprep.subr.mxu0 0.0
        %992 = vmatpush1.msra.mxu0 0.0
        %993 = vmatprep.subr.mxu0 0.0
        %994 = vmatpush1.msra.mxu0 0.0
        %995 = vmatprep.subr.mxu0 0.0
        %996 = vmatpush1.msra.mxu0 0.0
        %997 = vmatprep.subr.mxu0 0.0
        %998 = vmatpush1.msra.mxu0 0.0
        %999 = vmatprep.subr.mxu0 0.0
        %1000 = vmatpush1.msra.mxu0 0.0
        %1001 = vmatprep.subr.mxu0 0.0
        %1002 = vmatpush1.msra.mxu0 0.0
        %1003 = vmatprep.subr.mxu0 0.0
        %1004 = vmatpush1.msra.mxu0 0.0
        %1005 = vmatprep.subr.mxu0 0.0
        %1006 = vmatpush1.msra.mxu0 0.0
        %1007 = vmatprep.subr.mxu0 0.0
        %1008 = vmatpush1.msra.mxu0 0.0
        %1009 = vmatprep.subr.mxu0 0.0
        %1010 = vmatpush1.msra.mxu0 0.0
        %1011 = vmatprep.subr.mxu0 0.0
        %1012 = vmatpush1.msra.mxu0 0.0
        %1013 = vmatprep.subr.mxu0 0.0
        %1014 = vmatpush1.msra.mxu0 0.0
        %1015 = vmatprep.subr.mxu0 0.0
        %1016 = vmatpush1.msra.mxu0 0.0
        %1017 = vmatprep.subr.mxu0 0.0
        %1018 = vmatpush1.msra.mxu0 0.0
        %1019 = vmatprep.subr.mxu0 0.0
        %1020 = vmatpush1.msra.mxu0 0.0
        %1021 = vmatprep.subr.mxu0 0.0
        %1022 = vmatpush1.msra.mxu0 0.0
        %1023 = vmatprep.subr.mxu0 0.0
        %1024 = vmatpush1.msra.mxu0 0.0
        %1025 = vmatprep.subr.mxu0 0.0
        %1026 = vmatpush1.msra.mxu0 0.0
        %1027 = vmatprep.subr.mxu0 0.0
        %1028 = vmatpush1.msra.mxu0 0.0
        %1029 = vmatprep.subr.mxu0 0.0
        %1030 = vmatpush1.msra.mxu0 0.0
        %1031 = vmatprep.subr.mxu0 0.0
        %1032 = vmatpush1.msra.mxu0 0.0
        %1033 = vmatprep.mubr.f32.mxu0 0.0
        %1034 = vmatmul.mubr.f32.gmra.mrb[0].mxu0 %v724
        %v1035 = vpop.f32.mrb[0].mxu0
        %v1036 = vadd.f32 %v967, %v1035
        %v1037 = vpop.f32.mrb[0].mxu0
        %1038 = vdwg.mxu0
        %v1039 = vmul.f32 %v588, %v1036
        %v1040 = vadd.f32 %v960, %v1039
        %v1041 = vmul.f32 %v1040, 0.125
        %v1042 = vld [vmem:[#allocation11] sm:$0xff]
        %v1043 = vld [vmem:[#allocation11 + $0x8] sm:$0xff]
        %v1044 = vld [vmem:[#allocation11 + $0x10] sm:$0xff]
        %v1045 = vld [vmem:[#allocation11 + $0x18] sm:$0xff]
        %s1046 = scalar_lea.vmem [#allocation11], 32
        %v1047 = vld [vmem:[%s1046] sm:$0xff]
        %v1048 = vld [vmem:[%s1046 + $0x8] sm:$0xff]
        %v1049 = vld [vmem:[%s1046 + $0x10] sm:$0xff]
        %v1050 = vld [vmem:[%s1046 + $0x18] sm:$0xff]
        %s1051 = scalar_lea.vmem [#allocation11], 64
        %v1052 = vld [vmem:[%s1051] sm:$0xff]
        %v1053 = vld [vmem:[%s1051 + $0x8] sm:$0xff]
        %v1054 = vld [vmem:[%s1051 + $0x10] sm:$0xff]
        %v1055 = vld [vmem:[%s1051 + $0x18] sm:$0xff]
        %s1056 = scalar_lea.vmem [#allocation11], 96
        %v1057 = vld [vmem:[%s1056] sm:$0xff]
        %v1058 = vld [vmem:[%s1056 + $0x8] sm:$0xff]
        %v1059 = vld [vmem:[%s1056 + $0x10] sm:$0xff]
        %v1060 = vld [vmem:[%s1056 + $0x18] sm:$0xff]
        %s1061 = scalar_lea.vmem [#allocation11], 128
        %v1062 = vld [vmem:[%s1061] sm:$0xff]
        %v1063 = vld [vmem:[%s1061 + $0x8] sm:$0xff]
        %v1064 = vld [vmem:[%s1061 + $0x10] sm:$0xff]
        %v1065 = vld [vmem:[%s1061 + $0x18] sm:$0xff]
        %s1066 = scalar_lea.vmem [#allocation11], 160
        %v1067 = vld [vmem:[%s1066] sm:$0xff]
        %v1068 = vld [vmem:[%s1066 + $0x8] sm:$0xff]
        %v1069 = vld [vmem:[%s1066 + $0x10] sm:$0xff]
        %v1070 = vld [vmem:[%s1066 + $0x18] sm:$0xff]
        %v1071 = vld [vmem:[#allocation13] sm:$0x1]
        %s1072 = scalar_lea.vmem [#allocation13], 1
        %v1073 = vld [vmem:[%s1072] sm:$0x1]
        %s1074 = scalar_lea.vmem [#allocation13], 2
        %v1075 = vld [vmem:[%s1074] sm:$0x1]
        %s1076 = scalar_lea.vmem [#allocation13], 3
        %v1077 = vld [vmem:[%s1076] sm:$0x1]
        %v1079 = vsel %vm722, %v1041, 0
        %1081 = vmatprep.subr.mxu0 0.0
        %1082 = vmatpush1.msra.mxu0 %v1057
        %1083 = vmatprep.subr.mxu0 0.0
        %1084 = vmatpush1.msra.mxu0 %v1058
        %1085 = vmatprep.subr.mxu0 0.0
        %1086 = vmatpush1.msra.mxu0 %v1059
        %1087 = vmatprep.subr.mxu0 0.0
        %1088 = vmatpush1.msra.mxu0 %v1060
        %1089 = vmatprep.subr.mxu0 0.0
        %1090 = vmatpush1.msra.mxu0 0.0
        %1091 = vmatprep.subr.mxu0 0.0
        %1092 = vmatpush1.msra.mxu0 0.0
        %1093 = vmatprep.subr.mxu0 0.0
        %1094 = vmatpush1.msra.mxu0 0.0
        %1095 = vmatprep.subr.mxu0 0.0
        %1096 = vmatpush1.msra.mxu0 0.0
        %1097 = vmatprep.subr.mxu0 0.0
        %1098 = vmatpush1.msra.mxu0 0.0
        %1099 = vmatprep.subr.mxu0 0.0
        %1100 = vmatpush1.msra.mxu0 0.0
        %1101 = vmatprep.subr.mxu0 0.0
        %1102 = vmatpush1.msra.mxu0 0.0
        %1103 = vmatprep.subr.mxu0 0.0
        %1104 = vmatpush1.msra.mxu0 0.0
        %1105 = vmatprep.subr.mxu0 0.0
        %1106 = vmatpush1.msra.mxu0 0.0
        %1107 = vmatprep.subr.mxu0 0.0
        %1108 = vmatpush1.msra.mxu0 0.0
        %1109 = vmatprep.subr.mxu0 0.0
        %1110 = vmatpush1.msra.mxu0 0.0
        %1111 = vmatprep.subr.mxu0 0.0
        %1112 = vmatpush1.msra.mxu0 0.0
        %1113 = vmatprep.subr.mxu0 0.0
        %1114 = vmatpush1.msra.mxu0 0.0
        %1115 = vmatprep.subr.mxu0 0.0
        %1116 = vmatpush1.msra.mxu0 0.0
        %1117 = vmatprep.subr.mxu0 0.0
        %1118 = vmatpush1.msra.mxu0 0.0
        %1119 = vmatprep.subr.mxu0 0.0
        %1120 = vmatpush1.msra.mxu0 0.0
        %1121 = vmatprep.subr.mxu0 0.0
        %1122 = vmatpush1.msra.mxu0 0.0
        %1123 = vmatprep.subr.mxu0 0.0
        %1124 = vmatpush1.msra.mxu0 0.0
        %1125 = vmatprep.subr.mxu0 0.0
        %1126 = vmatpush1.msra.mxu0 0.0
        %1127 = vmatprep.subr.mxu0 0.0
        %1128 = vmatpush1.msra.mxu0 0.0
        %1129 = vmatprep.subr.mxu0 0.0
        %1130 = vmatpush1.msra.mxu0 0.0
        %1131 = vmatprep.subr.mxu0 0.0
        %1132 = vmatpush1.msra.mxu0 0.0
        %1133 = vmatprep.subr.mxu0 0.0
        %1134 = vmatpush1.msra.mxu0 0.0
        %1135 = vmatprep.subr.mxu0 0.0
        %1136 = vmatpush1.msra.mxu0 0.0
        %1137 = vmatprep.subr.mxu0 0.0
        %1138 = vmatpush1.msra.mxu0 0.0
        %1139 = vmatprep.subr.mxu0 0.0
        %1140 = vmatpush1.msra.mxu0 0.0
        %1141 = vmatprep.subr.mxu0 0.0
        %1142 = vmatpush1.msra.mxu0 0.0
        %1143 = vmatprep.subr.mxu0 0.0
        %1144 = vmatpush1.msra.mxu0 0.0
        %1145 = vmatprep.mubr.f32.mxu0 0.0
        %1146 = vmatmul.mubr.f32.gmra.mrb[0].mxu0 %v1079
        %v1147 = vpop.f32.mrb[0].mxu0
        %v1148 = vadd.f32 0.0, %v1147
        %v1149 = vpop.f32.mrb[0].mxu0
        %1150 = vdwg.mxu0
        %1151 = vmatprep.subr.mxu0 0.0
        %1152 = vmatpush1.msra.mxu0 %v1042
        %1153 = vmatprep.subr.mxu0 0.0
        %1154 = vmatpush1.msra.mxu0 %v1043
        %1155 = vmatprep.subr.mxu0 0.0
        %1156 = vmatpush1.msra.mxu0 %v1044
        %1157 = vmatprep.subr.mxu0 0.0
        %1158 = vmatpush1.msra.mxu0 %v1045
        %1159 = vmatprep.subr.mxu0 0.0
        %1160 = vmatpush1.msra.mxu0 0.0
        %1161 = vmatprep.subr.mxu0 0.0
        %1162 = vmatpush1.msra.mxu0 0.0
        %1163 = vmatprep.subr.mxu0 0.0
        %1164 = vmatpush1.msra.mxu0 0.0
        %1165 = vmatprep.subr.mxu0 0.0
        %1166 = vmatpush1.msra.mxu0 0.0
        %1167 = vmatprep.subr.mxu0 0.0
        %1168 = vmatpush1.msra.mxu0 0.0
        %1169 = vmatprep.subr.mxu0 0.0
        %1170 = vmatpush1.msra.mxu0 0.0
        %1171 = vmatprep.subr.mxu0 0.0
        %1172 = vmatpush1.msra.mxu0 0.0
        %1173 = vmatprep.subr.mxu0 0.0
        %1174 = vmatpush1.msra.mxu0 0.0
        %1175 = vmatprep.subr.mxu0 0.0
        %1176 = vmatpush1.msra.mxu0 0.0
        %1177 = vmatprep.subr.mxu0 0.0
        %1178 = vmatpush1.msra.mxu0 0.0
        %1179 = vmatprep.subr.mxu0 0.0
        %1180 = vmatpush1.msra.mxu0 0.0
        %1181 = vmatprep.subr.mxu0 0.0
        %1182 = vmatpush1.msra.mxu0 0.0
        %1183 = vmatprep.subr.mxu0 0.0
        %1184 = vmatpush1.msra.mxu0 0.0
        %1185 = vmatprep.subr.mxu0 0.0
        %1186 = vmatpush1.msra.mxu0 0.0
        %1187 = vmatprep.subr.mxu0 0.0
        %1188 = vmatpush1.msra.mxu0 0.0
        %1189 = vmatprep.subr.mxu0 0.0
        %1190 = vmatpush1.msra.mxu0 0.0
        %1191 = vmatprep.subr.mxu0 0.0
        %1192 = vmatpush1.msra.mxu0 0.0
        %1193 = vmatprep.subr.mxu0 0.0
        %1194 = vmatpush1.msra.mxu0 0.0
        %1195 = vmatprep.subr.mxu0 0.0
        %1196 = vmatpush1.msra.mxu0 0.0
        %1197 = vmatprep.subr.mxu0 0.0
        %1198 = vmatpush1.msra.mxu0 0.0
        %1199 = vmatprep.subr.mxu0 0.0
        %1200 = vmatpush1.msra.mxu0 0.0
        %1201 = vmatprep.subr.mxu0 0.0
        %1202 = vmatpush1.msra.mxu0 0.0
        %1203 = vmatprep.subr.mxu0 0.0
        %1204 = vmatpush1.msra.mxu0 0.0
        %1205 = vmatprep.subr.mxu0 0.0
        %1206 = vmatpush1.msra.mxu0 0.0
        %1207 = vmatprep.subr.mxu0 0.0
        %1208 = vmatpush1.msra.mxu0 0.0
        %1209 = vmatprep.subr.mxu0 0.0
        %1210 = vmatpush1.msra.mxu0 0.0
        %1211 = vmatprep.subr.mxu0 0.0
        %1212 = vmatpush1.msra.mxu0 0.0
        %1213 = vmatprep.subr.mxu0 0.0
        %1214 = vmatpush1.msra.mxu0 0.0
        %1215 = vmatprep.mubr.f32.mxu0 0.0
        %1216 = vmatmul.mubr.f32.gmra.mrb[0].mxu0 %v724
        %v1217 = vpop.f32.mrb[0].mxu0
        %v1218 = vadd.f32 %v1148, %v1217
        %v1219 = vpop.f32.mrb[0].mxu0
        %1220 = vdwg.mxu0
        %v1222 = vlaneseq
        %v1223 = vshrl.u32 %v1222, 7
        %v1224 = vsub.s32 0, %v1223
        %v1225 = vrot.slane %v1071, %v1224
        %v1227 = vadd.f32 %v1218, %v1225
        %v1228 = vxor.u32 %v1227, 2147483648
        %v1229 = vmul.f32 %v1228, 1.442695
        %v1230 = vpow.pop %v1229
        %v1231 = vadd.f32 %v1230, 1.0
        %v1232 = vrcp.pop %v1231
        %v1233 = vmul.f32 1.0, %v1232
        %1234 = vmatprep.subr.mxu0 0.0
        %1235 = vmatpush1.msra.mxu0 %v1062
        %1236 = vmatprep.subr.mxu0 0.0
        %1237 = vmatpush1.msra.mxu0 %v1063
        %1238 = vmatprep.subr.mxu0 0.0
        %1239 = vmatpush1.msra.mxu0 %v1064
        %1240 = vmatprep.subr.mxu0 0.0
        %1241 = vmatpush1.msra.mxu0 %v1065
        %1242 = vmatprep.subr.mxu0 0.0
        %1243 = vmatpush1.msra.mxu0 0.0
        %1244 = vmatprep.subr.mxu0 0.0
        %1245 = vmatpush1.msra.mxu0 0.0
        %1246 = vmatprep.subr.mxu0 0.0
        %1247 = vmatpush1.msra.mxu0 0.0
        %1248 = vmatprep.subr.mxu0 0.0
        %1249 = vmatpush1.msra.mxu0 0.0
        %1250 = vmatprep.subr.mxu0 0.0
        %1251 = vmatpush1.msra.mxu0 0.0
        %1252 = vmatprep.subr.mxu0 0.0
        %1253 = vmatpush1.msra.mxu0 0.0
        %1254 = vmatprep.subr.mxu0 0.0
        %1255 = vmatpush1.msra.mxu0 0.0
        %1256 = vmatprep.subr.mxu0 0.0
        %1257 = vmatpush1.msra.mxu0 0.0
        %1258 = vmatprep.subr.mxu0 0.0
        %1259 = vmatpush1.msra.mxu0 0.0
        %1260 = vmatprep.subr.mxu0 0.0
        %1261 = vmatpush1.msra.mxu0 0.0
        %1262 = vmatprep.subr.mxu0 0.0
        %1263 = vmatpush1.msra.mxu0 0.0
        %1264 = vmatprep.subr.mxu0 0.0
        %1265 = vmatpush1.msra.mxu0 0.0
        %1266 = vmatprep.subr.mxu0 0.0
        %1267 = vmatpush1.msra.mxu0 0.0
        %1268 = vmatprep.subr.mxu0 0.0
        %1269 = vmatpush1.msra.mxu0 0.0
        %1270 = vmatprep.subr.mxu0 0.0
        %1271 = vmatpush1.msra.mxu0 0.0
        %1272 = vmatprep.subr.mxu0 0.0
        %1273 = vmatpush1.msra.mxu0 0.0
        %1274 = vmatprep.subr.mxu0 0.0
        %1275 = vmatpush1.msra.mxu0 0.0
        %1276 = vmatprep.subr.mxu0 0.0
        %1277 = vmatpush1.msra.mxu0 0.0
        %1278 = vmatprep.subr.mxu0 0.0
        %1279 = vmatpush1.msra.mxu0 0.0
        %1280 = vmatprep.subr.mxu0 0.0
        %1281 = vmatpush1.msra.mxu0 0.0
        %1282 = vmatprep.subr.mxu0 0.0
        %1283 = vmatpush1.msra.mxu0 0.0
        %1284 = vmatprep.subr.mxu0 0.0
        %1285 = vmatpush1.msra.mxu0 0.0
        %1286 = vmatprep.subr.mxu0 0.0
        %1287 = vmatpush1.msra.mxu0 0.0
        %1288 = vmatprep.subr.mxu0 0.0
        %1289 = vmatpush1.msra.mxu0 0.0
        %1290 = vmatprep.subr.mxu0 0.0
        %1291 = vmatpush1.msra.mxu0 0.0
        %1292 = vmatprep.subr.mxu0 0.0
        %1293 = vmatpush1.msra.mxu0 0.0
        %1294 = vmatprep.subr.mxu0 0.0
        %1295 = vmatpush1.msra.mxu0 0.0
        %1296 = vmatprep.subr.mxu0 0.0
        %1297 = vmatpush1.msra.mxu0 0.0
        %1298 = vmatprep.mubr.f32.mxu0 0.0
        %1299 = vmatmul.mubr.f32.gmra.mrb[0].mxu0 %v1079
        %v1300 = vpop.f32.mrb[0].mxu0
        %v1301 = vadd.f32 0.0, %v1300
        %v1302 = vpop.f32.mrb[0].mxu0
        %1303 = vdwg.mxu0
        %1304 = vmatprep.subr.mxu0 0.0
        %1305 = vmatpush1.msra.mxu0 %v1047
        %1306 = vmatprep.subr.mxu0 0.0
        %1307 = vmatpush1.msra.mxu0 %v1048
        %1308 = vmatprep.subr.mxu0 0.0
        %1309 = vmatpush1.msra.mxu0 %v1049
        %1310 = vmatprep.subr.mxu0 0.0
        %1311 = vmatpush1.msra.mxu0 %v1050
        %1312 = vmatprep.subr.mxu0 0.0
        %1313 = vmatpush1.msra.mxu0 0.0
        %1314 = vmatprep.subr.mxu0 0.0
        %1315 = vmatpush1.msra.mxu0 0.0
        %1316 = vmatprep.subr.mxu0 0.0
        %1317 = vmatpush1.msra.mxu0 0.0
        %1318 = vmatprep.subr.mxu0 0.0
        %1319 = vmatpush1.msra.mxu0 0.0
        %1320 = vmatprep.subr.mxu0 0.0
        %1321 = vmatpush1.msra.mxu0 0.0
        %1322 = vmatprep.subr.mxu0 0.0
        %1323 = vmatpush1.msra.mxu0 0.0
        %1324 = vmatprep.subr.mxu0 0.0
        %1325 = vmatpush1.msra.mxu0 0.0
        %1326 = vmatprep.subr.mxu0 0.0
        %1327 = vmatpush1.msra.mxu0 0.0
        %1328 = vmatprep.subr.mxu0 0.0
        %1329 = vmatpush1.msra.mxu0 0.0
        %1330 = vmatprep.subr.mxu0 0.0
        %1331 = vmatpush1.msra.mxu0 0.0
        %1332 = vmatprep.subr.mxu0 0.0
        %1333 = vmatpush1.msra.mxu0 0.0
        %1334 = vmatprep.subr.mxu0 0.0
        %1335 = vmatpush1.msra.mxu0 0.0
        %1336 = vmatprep.subr.mxu0 0.0
        %1337 = vmatpush1.msra.mxu0 0.0
        %1338 = vmatprep.subr.mxu0 0.0
        %1339 = vmatpush1.msra.mxu0 0.0
        %1340 = vmatprep.subr.mxu0 0.0
        %1341 = vmatpush1.msra.mxu0 0.0
        %1342 = vmatprep.subr.mxu0 0.0
        %1343 = vmatpush1.msra.mxu0 0.0
        %1344 = vmatprep.subr.mxu0 0.0
        %1345 = vmatpush1.msra.mxu0 0.0
        %1346 = vmatprep.subr.mxu0 0.0
        %1347 = vmatpush1.msra.mxu0 0.0
        %1348 = vmatprep.subr.mxu0 0.0
        %1349 = vmatpush1.msra.mxu0 0.0
        %1350 = vmatprep.subr.mxu0 0.0
        %1351 = vmatpush1.msra.mxu0 0.0
        %1352 = vmatprep.subr.mxu0 0.0
        %1353 = vmatpush1.msra.mxu0 0.0
        %1354 = vmatprep.subr.mxu0 0.0
        %1355 = vmatpush1.msra.mxu0 0.0
        %1356 = vmatprep.subr.mxu0 0.0
        %1357 = vmatpush1.msra.mxu0 0.0
        %1358 = vmatprep.subr.mxu0 0.0
        %1359 = vmatpush1.msra.mxu0 0.0
        %1360 = vmatprep.subr.mxu0 0.0
        %1361 = vmatpush1.msra.mxu0 0.0
        %1362 = vmatprep.subr.mxu0 0.0
        %1363 = vmatpush1.msra.mxu0 0.0
        %1364 = vmatprep.subr.mxu0 0.0
        %1365 = vmatpush1.msra.mxu0 0.0
        %1366 = vmatprep.subr.mxu0 0.0
        %1367 = vmatpush1.msra.mxu0 0.0
        %1368 = vmatprep.mubr.f32.mxu0 0.0
        %1369 = vmatmul.mubr.f32.gmra.mrb[0].mxu0 %v724
        %v1370 = vpop.f32.mrb[0].mxu0
        %v1371 = vadd.f32 %v1301, %v1370
        %v1372 = vpop.f32.mrb[0].mxu0
        %1373 = vdwg.mxu0
        %v1375 = vlaneseq
        %v1376 = vshrl.u32 %v1375, 7
        %v1377 = vsub.s32 0, %v1376
        %v1378 = vrot.slane %v1073, %v1377
        %v1380 = vadd.f32 %v1371, %v1378
        %v1381 = vxor.u32 %v1380, 2147483648
        %v1382 = vmul.f32 %v1381, 1.442695
        %v1383 = vpow.pop %v1382
        %v1384 = vadd.f32 %v1383, 1.0
        %v1385 = vrcp.pop %v1384
        %v1386 = vmul.f32 1.0, %v1385
        %v1388 = vlaneseq
        %v1389 = vshrl.u32 %v1388, 7
        %v1390 = vsub.s32 0, %v1389
        %v1391 = vrot.slane %v1075, %v1390
        %1393 = vmatprep.subr.mxu0 0.0
        %1394 = vmatpush1.msra.mxu0 %v1052
        %1395 = vmatprep.subr.mxu0 0.0
        %1396 = vmatpush1.msra.mxu0 %v1053
        %1397 = vmatprep.subr.mxu0 0.0
        %1398 = vmatpush1.msra.mxu0 %v1054
        %1399 = vmatprep.subr.mxu0 0.0
        %1400 = vmatpush1.msra.mxu0 %v1055
        %1401 = vmatprep.subr.mxu0 0.0
        %1402 = vmatpush1.msra.mxu0 0.0
        %1403 = vmatprep.subr.mxu0 0.0
        %1404 = vmatpush1.msra.mxu0 0.0
        %1405 = vmatprep.subr.mxu0 0.0
        %1406 = vmatpush1.msra.mxu0 0.0
        %1407 = vmatprep.subr.mxu0 0.0
        %1408 = vmatpush1.msra.mxu0 0.0
        %1409 = vmatprep.subr.mxu0 0.0
        %1410 = vmatpush1.msra.mxu0 0.0
        %1411 = vmatprep.subr.mxu0 0.0
        %1412 = vmatpush1.msra.mxu0 0.0
        %1413 = vmatprep.subr.mxu0 0.0
        %1414 = vmatpush1.msra.mxu0 0.0
        %1415 = vmatprep.subr.mxu0 0.0
        %1416 = vmatpush1.msra.mxu0 0.0
        %1417 = vmatprep.subr.mxu0 0.0
        %1418 = vmatpush1.msra.mxu0 0.0
        %1419 = vmatprep.subr.mxu0 0.0
        %1420 = vmatpush1.msra.mxu0 0.0
        %1421 = vmatprep.subr.mxu0 0.0
        %1422 = vmatpush1.msra.mxu0 0.0
        %1423 = vmatprep.subr.mxu0 0.0
        %1424 = vmatpush1.msra.mxu0 0.0
        %1425 = vmatprep.subr.mxu0 0.0
        %1426 = vmatpush1.msra.mxu0 0.0
        %1427 = vmatprep.subr.mxu0 0.0
        %1428 = vmatpush1.msra.mxu0 0.0
        %1429 = vmatprep.subr.mxu0 0.0
        %1430 = vmatpush1.msra.mxu0 0.0
        %1431 = vmatprep.subr.mxu0 0.0
        %1432 = vmatpush1.msra.mxu0 0.0
        %1433 = vmatprep.subr.mxu0 0.0
        %1434 = vmatpush1.msra.mxu0 0.0
        %1435 = vmatprep.subr.mxu0 0.0
        %1436 = vmatpush1.msra.mxu0 0.0
        %1437 = vmatprep.subr.mxu0 0.0
        %1438 = vmatpush1.msra.mxu0 0.0
        %1439 = vmatprep.subr.mxu0 0.0
        %1440 = vmatpush1.msra.mxu0 0.0
        %1441 = vmatprep.subr.mxu0 0.0
        %1442 = vmatpush1.msra.mxu0 0.0
        %1443 = vmatprep.subr.mxu0 0.0
        %1444 = vmatpush1.msra.mxu0 0.0
        %1445 = vmatprep.subr.mxu0 0.0
        %1446 = vmatpush1.msra.mxu0 0.0
        %1447 = vmatprep.subr.mxu0 0.0
        %1448 = vmatpush1.msra.mxu0 0.0
        %1449 = vmatprep.subr.mxu0 0.0
        %1450 = vmatpush1.msra.mxu0 0.0
        %1451 = vmatprep.subr.mxu0 0.0
        %1452 = vmatpush1.msra.mxu0 0.0
        %1453 = vmatprep.subr.mxu0 0.0
        %1454 = vmatpush1.msra.mxu0 0.0
        %1455 = vmatprep.subr.mxu0 0.0
        %1456 = vmatpush1.msra.mxu0 0.0
        %1457 = vmatprep.mubr.f32.mxu0 0.0
        %1458 = vmatmul.mubr.f32.gmra.mrb[0].mxu0 %v724
        %v1459 = vpop.f32.mrb[0].mxu0
        %v1460 = vadd.f32 %v1391, %v1459
        %v1461 = vpop.f32.mrb[0].mxu0
        %1462 = vdwg.mxu0
        %v1464 = vlaneseq
        %v1465 = vshrl.u32 %v1464, 7
        %v1466 = vsub.s32 0, %v1465
        %v1467 = vrot.slane %v1077, %v1466
        %1469 = vmatprep.subr.mxu0 0.0
        %1470 = vmatpush1.msra.mxu0 %v1067
        %1471 = vmatprep.subr.mxu0 0.0
        %1472 = vmatpush1.msra.mxu0 %v1068
        %1473 = vmatprep.subr.mxu0 0.0
        %1474 = vmatpush1.msra.mxu0 %v1069
        %1475 = vmatprep.subr.mxu0 0.0
        %1476 = vmatpush1.msra.mxu0 %v1070
        %1477 = vmatprep.subr.mxu0 0.0
        %1478 = vmatpush1.msra.mxu0 0.0
        %1479 = vmatprep.subr.mxu0 0.0
        %1480 = vmatpush1.msra.mxu0 0.0
        %1481 = vmatprep.subr.mxu0 0.0
        %1482 = vmatpush1.msra.mxu0 0.0
        %1483 = vmatprep.subr.mxu0 0.0
        %1484 = vmatpush1.msra.mxu0 0.0
        %1485 = vmatprep.subr.mxu0 0.0
        %1486 = vmatpush1.msra.mxu0 0.0
        %1487 = vmatprep.subr.mxu0 0.0
        %1488 = vmatpush1.msra.mxu0 0.0
        %1489 = vmatprep.subr.mxu0 0.0
        %1490 = vmatpush1.msra.mxu0 0.0
        %1491 = vmatprep.subr.mxu0 0.0
        %1492 = vmatpush1.msra.mxu0 0.0
        %1493 = vmatprep.subr.mxu0 0.0
        %1494 = vmatpush1.msra.mxu0 0.0
        %1495 = vmatprep.subr.mxu0 0.0
        %1496 = vmatpush1.msra.mxu0 0.0
        %1497 = vmatprep.subr.mxu0 0.0
        %1498 = vmatpush1.msra.mxu0 0.0
        %1499 = vmatprep.subr.mxu0 0.0
        %1500 = vmatpush1.msra.mxu0 0.0
        %1501 = vmatprep.subr.mxu0 0.0
        %1502 = vmatpush1.msra.mxu0 0.0
        %1503 = vmatprep.subr.mxu0 0.0
        %1504 = vmatpush1.msra.mxu0 0.0
        %1505 = vmatprep.subr.mxu0 0.0
        %1506 = vmatpush1.msra.mxu0 0.0
        %1507 = vmatprep.subr.mxu0 0.0
        %1508 = vmatpush1.msra.mxu0 0.0
        %1509 = vmatprep.subr.mxu0 0.0
        %1510 = vmatpush1.msra.mxu0 0.0
        %1511 = vmatprep.subr.mxu0 0.0
        %1512 = vmatpush1.msra.mxu0 0.0
        %1513 = vmatprep.subr.mxu0 0.0
        %1514 = vmatpush1.msra.mxu0 0.0
        %1515 = vmatprep.subr.mxu0 0.0
        %1516 = vmatpush1.msra.mxu0 0.0
        %1517 = vmatprep.subr.mxu0 0.0
        %1518 = vmatpush1.msra.mxu0 0.0
        %1519 = vmatprep.subr.mxu0 0.0
        %1520 = vmatpush1.msra.mxu0 0.0
        %1521 = vmatprep.subr.mxu0 0.0
        %1522 = vmatpush1.msra.mxu0 0.0
        %1523 = vmatprep.subr.mxu0 0.0
        %1524 = vmatpush1.msra.mxu0 0.0
        %1525 = vmatprep.subr.mxu0 0.0
        %1526 = vmatpush1.msra.mxu0 0.0
        %1527 = vmatprep.subr.mxu0 0.0
        %1528 = vmatpush1.msra.mxu0 0.0
        %1529 = vmatprep.subr.mxu0 0.0
        %1530 = vmatpush1.msra.mxu0 0.0
        %1531 = vmatprep.subr.mxu0 0.0
        %1532 = vmatpush1.msra.mxu0 0.0
        %1533 = vmatprep.mubr.f32.mxu0 0.0
        %1534 = vmatmul.mubr.f32.gmra.mrb[0].mxu0 %v1079
        %v1535 = vpop.f32.mrb[0].mxu0
        %v1536 = vadd.f32 %v1467, %v1535
        %v1537 = vpop.f32.mrb[0].mxu0
        %1538 = vdwg.mxu0
        %v1539 = vmul.f32 %v1233, %v1536
        %v1540 = vadd.f32 %v1460, %v1539
        %v1541 = vtanh.pop %v1540
        %v1542 = vsub.f32 1.0, %v1386
        %v1543 = vmul.f32 %v1542, %v1541
        %v1544 = vmul.f32 %v1386, %v1041
        %v1545 = vadd.f32 %v1543, %v1544
        %v1546 = vmax.f32 %v1545, 0.0
        %s1547 = scalar_lea.vmem [#allocation8], 64
        %v1548 = vld [vmem:[%s1547] sm:$0xff]
        %v1549 = vld [vmem:[%s1547 + $0x8] sm:$0xff]
        %v1550 = vld [vmem:[%s1547 + $0x10] sm:$0xff]
        %v1551 = vld [vmem:[%s1547 + $0x18] sm:$0xff]
        %s1552 = scalar_lea.vmem [#allocation8], 96
        %v1553 = vld [vmem:[%s1552] sm:$0xff]
        %v1554 = vld [vmem:[%s1552 + $0x8] sm:$0xff]
        %v1555 = vld [vmem:[%s1552 + $0x10] sm:$0xff]
        %v1556 = vld [vmem:[%s1552 + $0x18] sm:$0xff]
        %s1557 = scalar_lea.vmem [#allocation10], 16
        %v1558 = vld [vmem:[%s1557] sm:$0xff]
        %v1559 = vld [vmem:[%s1557 + $0x8] sm:$0xff]
        %s1560 = scalar_lea.vmem %s5, 1
        %v1561 = vld [vmem:[%s1560] sm:$0x1]
        %v1563 = vsel %vm722, %v1546, 0
        %1565 = vmatprep.subr.mxu0 0.0
        %1566 = vmatpush1.msra.mxu0 %v1548
        %1567 = vmatprep.subr.mxu0 0.0
        %1568 = vmatpush1.msra.mxu0 %v1549
        %1569 = vmatprep.subr.mxu0 0.0
        %1570 = vmatpush1.msra.mxu0 %v1550
        %1571 = vmatprep.subr.mxu0 0.0
        %1572 = vmatpush1.msra.mxu0 %v1551
        %1573 = vmatprep.subr.mxu0 0.0
        %1574 = vmatpush1.msra.mxu0 0.0
        %1575 = vmatprep.subr.mxu0 0.0
        %1576 = vmatpush1.msra.mxu0 0.0
        %1577 = vmatprep.subr.mxu0 0.0
        %1578 = vmatpush1.msra.mxu0 0.0
        %1579 = vmatprep.subr.mxu0 0.0
        %1580 = vmatpush1.msra.mxu0 0.0
        %1581 = vmatprep.subr.mxu0 0.0
        %1582 = vmatpush1.msra.mxu0 0.0
        %1583 = vmatprep.subr.mxu0 0.0
        %1584 = vmatpush1.msra.mxu0 0.0
        %1585 = vmatprep.subr.mxu0 0.0
        %1586 = vmatpush1.msra.mxu0 0.0
        %1587 = vmatprep.subr.mxu0 0.0
        %1588 = vmatpush1.msra.mxu0 0.0
        %1589 = vmatprep.subr.mxu0 0.0
        %1590 = vmatpush1.msra.mxu0 0.0
        %1591 = vmatprep.subr.mxu0 0.0
        %1592 = vmatpush1.msra.mxu0 0.0
        %1593 = vmatprep.subr.mxu0 0.0
        %1594 = vmatpush1.msra.mxu0 0.0
        %1595 = vmatprep.subr.mxu0 0.0
        %1596 = vmatpush1.msra.mxu0 0.0
        %1597 = vmatprep.subr.mxu0 0.0
        %1598 = vmatpush1.msra.mxu0 0.0
        %1599 = vmatprep.subr.mxu0 0.0
        %1600 = vmatpush1.msra.mxu0 0.0
        %1601 = vmatprep.subr.mxu0 0.0
        %1602 = vmatpush1.msra.mxu0 0.0
        %1603 = vmatprep.subr.mxu0 0.0
        %1604 = vmatpush1.msra.mxu0 0.0
        %1605 = vmatprep.subr.mxu0 0.0
        %1606 = vmatpush1.msra.mxu0 0.0
        %1607 = vmatprep.subr.mxu0 0.0
        %1608 = vmatpush1.msra.mxu0 0.0
        %1609 = vmatprep.subr.mxu0 0.0
        %1610 = vmatpush1.msra.mxu0 0.0
        %1611 = vmatprep.subr.mxu0 0.0
        %1612 = vmatpush1.msra.mxu0 0.0
        %1613 = vmatprep.subr.mxu0 0.0
        %1614 = vmatpush1.msra.mxu0 0.0
        %1615 = vmatprep.subr.mxu0 0.0
        %1616 = vmatpush1.msra.mxu0 0.0
        %1617 = vmatprep.subr.mxu0 0.0
        %1618 = vmatpush1.msra.mxu0 0.0
        %1619 = vmatprep.subr.mxu0 0.0
        %1620 = vmatpush1.msra.mxu0 0.0
        %1621 = vmatprep.subr.mxu0 0.0
        %1622 = vmatpush1.msra.mxu0 0.0
        %1623 = vmatprep.subr.mxu0 0.0
        %1624 = vmatpush1.msra.mxu0 0.0
        %1625 = vmatprep.subr.mxu0 0.0
        %1626 = vmatpush1.msra.mxu0 0.0
        %1627 = vmatprep.subr.mxu0 0.0
        %1628 = vmatpush1.msra.mxu0 0.0
        %1629 = vmatprep.mubr.f32.mxu0 0.0
        %1630 = vmatmul.mubr.f32.gmra.mrb[0].mxu0 %v1563
        %v1631 = vpop.f32.mrb[0].mxu0
        %v1632 = vadd.f32 0.0, %v1631
        %v1633 = vpop.f32.mrb[0].mxu0
        %1634 = vdwg.mxu0
        %1635 = vmatprep.subr.mxu0 0.0
        %1636 = vmatpush1.msra.mxu0 %v1558
        %1637 = vmatprep.subr.mxu0 0.0
        %1638 = vmatpush1.msra.mxu0 %v1559
        %1639 = vmatprep.subr.mxu0 0.0
        %1640 = vmatpush1.msra.mxu0 0.0
        %1641 = vmatprep.subr.mxu0 0.0
        %1642 = vmatpush1.msra.mxu0 0.0
        %1643 = vmatprep.subr.mxu0 0.0
        %1644 = vmatpush1.msra.mxu0 0.0
        %1645 = vmatprep.subr.mxu0 0.0
        %1646 = vmatpush1.msra.mxu0 0.0
        %1647 = vmatprep.subr.mxu0 0.0
        %1648 = vmatpush1.msra.mxu0 0.0
        %1649 = vmatprep.subr.mxu0 0.0
        %1650 = vmatpush1.msra.mxu0 0.0
        %1651 = vmatprep.subr.mxu0 0.0
        %1652 = vmatpush1.msra.mxu0 0.0
        %1653 = vmatprep.subr.mxu0 0.0
        %1654 = vmatpush1.msra.mxu0 0.0
        %1655 = vmatprep.subr.mxu0 0.0
        %1656 = vmatpush1.msra.mxu0 0.0
        %1657 = vmatprep.subr.mxu0 0.0
        %1658 = vmatpush1.msra.mxu0 0.0
        %1659 = vmatprep.subr.mxu0 0.0
        %1660 = vmatpush1.msra.mxu0 0.0
        %1661 = vmatprep.subr.mxu0 0.0
        %1662 = vmatpush1.msra.mxu0 0.0
        %1663 = vmatprep.subr.mxu0 0.0
        %1664 = vmatpush1.msra.mxu0 0.0
        %1665 = vmatprep.subr.mxu0 0.0
        %1666 = vmatpush1.msra.mxu0 0.0
        %1667 = vmatprep.subr.mxu0 0.0
        %1668 = vmatpush1.msra.mxu0 0.0
        %1669 = vmatprep.subr.mxu0 0.0
        %1670 = vmatpush1.msra.mxu0 0.0
        %1671 = vmatprep.subr.mxu0 0.0
        %1672 = vmatpush1.msra.mxu0 0.0
        %1673 = vmatprep.subr.mxu0 0.0
        %1674 = vmatpush1.msra.mxu0 0.0
        %1675 = vmatprep.subr.mxu0 0.0
        %1676 = vmatpush1.msra.mxu0 0.0
        %1677 = vmatprep.subr.mxu0 0.0
        %1678 = vmatpush1.msra.mxu0 0.0
        %1679 = vmatprep.subr.mxu0 0.0
        %1680 = vmatpush1.msra.mxu0 0.0
        %1681 = vmatprep.subr.mxu0 0.0
        %1682 = vmatpush1.msra.mxu0 0.0
        %1683 = vmatprep.subr.mxu0 0.0
        %1684 = vmatpush1.msra.mxu0 0.0
        %1685 = vmatprep.subr.mxu0 0.0
        %1686 = vmatpush1.msra.mxu0 0.0
        %1687 = vmatprep.subr.mxu0 0.0
        %1688 = vmatpush1.msra.mxu0 0.0
        %1689 = vmatprep.subr.mxu0 0.0
        %1690 = vmatpush1.msra.mxu0 0.0
        %1691 = vmatprep.subr.mxu0 0.0
        %1692 = vmatpush1.msra.mxu0 0.0
        %1693 = vmatprep.subr.mxu0 0.0
        %1694 = vmatpush1.msra.mxu0 0.0
        %1695 = vmatprep.subr.mxu0 0.0
        %1696 = vmatpush1.msra.mxu0 0.0
        %1697 = vmatprep.subr.mxu0 0.0
        %1698 = vmatpush1.msra.mxu0 0.0
        %1699 = vmatprep.mubr.f32.mxu0 0.0
        %1700 = vmatmul.mubr.f32.gmra.mrb[0].mxu0 %v818
        %v1701 = vpop.f32.mrb[0].mxu0
        %v1702 = vadd.f32 0.0, %v1701
        %v1703 = vpop.f32.mrb[0].mxu0
        %1704 = vdwg.mxu0
        %1705 = vmatprep.subr.mxu0 0.0
        %1706 = vmatpush1.msra.mxu0 %v1632
        %1707 = vmatprep.subr.mxu0 0.0
        %1708 = vmatpush1.msra.mxu0 0.0
        %1709 = vmatprep.subr.mxu0 0.0
        %1710 = vmatpush1.msra.mxu0 0.0
        %1711 = vmatprep.subr.mxu0 0.0
        %1712 = vmatpush1.msra.mxu0 0.0
        %1713 = vmatprep.subr.mxu0 0.0
        %1714 = vmatpush1.msra.mxu0 0.0
        %1715 = vmatprep.subr.mxu0 0.0
        %1716 = vmatpush1.msra.mxu0 0.0
        %1717 = vmatprep.subr.mxu0 0.0
        %1718 = vmatpush1.msra.mxu0 0.0
        %1719 = vmatprep.subr.mxu0 0.0
        %1720 = vmatpush1.msra.mxu0 0.0
        %1721 = vmatprep.subr.mxu0 0.0
        %1722 = vmatpush1.msra.mxu0 0.0
        %1723 = vmatprep.subr.mxu0 0.0
        %1724 = vmatpush1.msra.mxu0 0.0
        %1725 = vmatprep.subr.mxu0 0.0
        %1726 = vmatpush1.msra.mxu0 0.0
        %1727 = vmatprep.subr.mxu0 0.0
        %1728 = vmatpush1.msra.mxu0 0.0
        %1729 = vmatprep.subr.mxu0 0.0
        %1730 = vmatpush1.msra.mxu0 0.0
        %1731 = vmatprep.subr.mxu0 0.0
        %1732 = vmatpush1.msra.mxu0 0.0
        %1733 = vmatprep.subr.mxu0 0.0
        %1734 = vmatpush1.msra.mxu0 0.0
        %1735 = vmatprep.subr.mxu0 0.0
        %1736 = vmatpush1.msra.mxu0 0.0
        %1737 = vmatprep.subr.mxu0 0.0
        %1738 = vmatpush1.msra.mxu0 0.0
        %1739 = vmatprep.subr.mxu0 0.0
        %1740 = vmatpush1.msra.mxu0 0.0
        %1741 = vmatprep.subr.mxu0 0.0
        %1742 = vmatpush1.msra.mxu0 0.0
        %1743 = vmatprep.subr.mxu0 0.0
        %1744 = vmatpush1.msra.mxu0 0.0
        %1745 = vmatprep.subr.mxu0 0.0
        %1746 = vmatpush1.msra.mxu0 0.0
        %1747 = vmatprep.subr.mxu0 0.0
        %1748 = vmatpush1.msra.mxu0 0.0
        %1749 = vmatprep.subr.mxu0 0.0
        %1750 = vmatpush1.msra.mxu0 0.0
        %1751 = vmatprep.subr.mxu0 0.0
        %1752 = vmatpush1.msra.mxu0 0.0
        %1753 = vmatprep.subr.mxu0 0.0
        %1754 = vmatpush1.msra.mxu0 0.0
        %1755 = vmatprep.subr.mxu0 0.0
        %1756 = vmatpush1.msra.mxu0 0.0
        %1757 = vmatprep.subr.mxu0 0.0
        %1758 = vmatpush1.msra.mxu0 0.0
        %1759 = vmatprep.subr.mxu0 0.0
        %1760 = vmatpush1.msra.mxu0 0.0
        %1761 = vmatprep.subr.mxu0 0.0
        %1762 = vmatpush1.msra.mxu0 0.0
        %1763 = vmatprep.subr.mxu0 0.0
        %1764 = vmatpush1.msra.mxu0 0.0
        %1765 = vmatprep.subr.mxu0 0.0
        %1766 = vmatpush1.msra.mxu0 0.0
        %1767 = vmatprep.subr.mxu0 0.0
        %1768 = vmatpush1.msra.mxu0 0.0
        %1769 = vmatprep.mubr.f32.mxu0 0.0
        %1770 = vmatmul.mubr.f32.gmra.mrb[0].mxu0 %v891
        %v1771 = vpop.f32.mrb[0].mxu0
        %v1772 = vadd.f32 %v1702, %v1771
        %v1773 = vpop.f32.mrb[0].mxu0
        %1774 = vdwg.mxu0
        %v1776 = vlaneseq
        %v1777 = vshrl.u32 %v1776, 7
        %v1778 = vsub.s32 0, %v1777
        %v1779 = vrot.slane %v1561, %v1778
        %1781 = vmatprep.subr.mxu0 0.0
        %1782 = vmatpush1.msra.mxu0 %v1553
        %1783 = vmatprep.subr.mxu0 0.0
        %1784 = vmatpush1.msra.mxu0 %v1554
        %1785 = vmatprep.subr.mxu0 0.0
        %1786 = vmatpush1.msra.mxu0 %v1555
        %1787 = vmatprep.subr.mxu0 0.0
        %1788 = vmatpush1.msra.mxu0 %v1556
        %1789 = vmatprep.subr.mxu0 0.0
        %1790 = vmatpush1.msra.mxu0 0.0
        %1791 = vmatprep.subr.mxu0 0.0
        %1792 = vmatpush1.msra.mxu0 0.0
        %1793 = vmatprep.subr.mxu0 0.0
        %1794 = vmatpush1.msra.mxu0 0.0
        %1795 = vmatprep.subr.mxu0 0.0
        %1796 = vmatpush1.msra.mxu0 0.0
        %1797 = vmatprep.subr.mxu0 0.0
        %1798 = vmatpush1.msra.mxu0 0.0
        %1799 = vmatprep.subr.mxu0 0.0
        %1800 = vmatpush1.msra.mxu0 0.0
        %1801 = vmatprep.subr.mxu0 0.0
        %1802 = vmatpush1.msra.mxu0 0.0
        %1803 = vmatprep.subr.mxu0 0.0
        %1804 = vmatpush1.msra.mxu0 0.0
        %1805 = vmatprep.subr.mxu0 0.0
        %1806 = vmatpush1.msra.mxu0 0.0
        %1807 = vmatprep.subr.mxu0 0.0
        %1808 = vmatpush1.msra.mxu0 0.0
        %1809 = vmatprep.subr.mxu0 0.0
        %1810 = vmatpush1.msra.mxu0 0.0
        %1811 = vmatprep.subr.mxu0 0.0
        %1812 = vmatpush1.msra.mxu0 0.0
        %1813 = vmatprep.subr.mxu0 0.0
        %1814 = vmatpush1.msra.mxu0 0.0
        %1815 = vmatprep.subr.mxu0 0.0
        %1816 = vmatpush1.msra.mxu0 0.0
        %1817 = vmatprep.subr.mxu0 0.0
        %1818 = vmatpush1.msra.mxu0 0.0
        %1819 = vmatprep.subr.mxu0 0.0
        %1820 = vmatpush1.msra.mxu0 0.0
        %1821 = vmatprep.subr.mxu0 0.0
        %1822 = vmatpush1.msra.mxu0 0.0
        %1823 = vmatprep.subr.mxu0 0.0
        %1824 = vmatpush1.msra.mxu0 0.0
        %1825 = vmatprep.subr.mxu0 0.0
        %1826 = vmatpush1.msra.mxu0 0.0
        %1827 = vmatprep.subr.mxu0 0.0
        %1828 = vmatpush1.msra.mxu0 0.0
        %1829 = vmatprep.subr.mxu0 0.0
        %1830 = vmatpush1.msra.mxu0 0.0
        %1831 = vmatprep.subr.mxu0 0.0
        %1832 = vmatpush1.msra.mxu0 0.0
        %1833 = vmatprep.subr.mxu0 0.0
        %1834 = vmatpush1.msra.mxu0 0.0
        %1835 = vmatprep.subr.mxu0 0.0
        %1836 = vmatpush1.msra.mxu0 0.0
        %1837 = vmatprep.subr.mxu0 0.0
        %1838 = vmatpush1.msra.mxu0 0.0
        %1839 = vmatprep.subr.mxu0 0.0
        %1840 = vmatpush1.msra.mxu0 0.0
        %1841 = vmatprep.subr.mxu0 0.0
        %1842 = vmatpush1.msra.mxu0 0.0
        %1843 = vmatprep.subr.mxu0 0.0
        %1844 = vmatpush1.msra.mxu0 0.0
        %1845 = vmatprep.mubr.f32.mxu0 0.0
        %1846 = vmatmul.mubr.f32.gmra.mrb[0].mxu0 %v1563
        %v1847 = vpop.f32.mrb[0].mxu0
        %v1848 = vadd.f32 %v1779, %v1847
        %v1849 = vpop.f32.mrb[0].mxu0
        %1850 = vdwg.mxu0
        %v1851 = vmul.f32 %v588, %v1848
        %v1852 = vadd.f32 %v1772, %v1851
        %v1853 = vmul.f32 %v1852, 0.125
        %s1854 = scalar_lea.vmem [#allocation11], 192
        %v1855 = vld [vmem:[%s1854] sm:$0xff]
        %v1856 = vld [vmem:[%s1854 + $0x8] sm:$0xff]
        %v1857 = vld [vmem:[%s1854 + $0x10] sm:$0xff]
        %v1858 = vld [vmem:[%s1854 + $0x18] sm:$0xff]
        %s1859 = scalar_lea.vmem [#allocation11], 224
        %v1860 = vld [vmem:[%s1859] sm:$0xff]
        %v1861 = vld [vmem:[%s1859 + $0x8] sm:$0xff]
        %v1862 = vld [vmem:[%s1859 + $0x10] sm:$0xff]
        %v1863 = vld [vmem:[%s1859 + $0x18] sm:$0xff]
        %s1864 = scalar_lea.vmem [#allocation11], 256
        %v1865 = vld [vmem:[%s1864] sm:$0xff]
        %v1866 = vld [vmem:[%s1864 + $0x8] sm:$0xff]
        %v1867 = vld [vmem:[%s1864 + $0x10] sm:$0xff]
        %v1868 = vld [vmem:[%s1864 + $0x18] sm:$0xff]
        %s1869 = scalar_lea.vmem [#allocation11], 288
        %v1870 = vld [vmem:[%s1869] sm:$0xff]
        %v1871 = vld [vmem:[%s1869 + $0x8] sm:$0xff]
        %v1872 = vld [vmem:[%s1869 + $0x10] sm:$0xff]
        %v1873 = vld [vmem:[%s1869 + $0x18] sm:$0xff]
        %s1874 = scalar_lea.vmem [#allocation11], 320
        %v1875 = vld [vmem:[%s1874] sm:$0xff]
        %v1876 = vld [vmem:[%s1874 + $0x8] sm:$0xff]
        %v1877 = vld [vmem:[%s1874 + $0x10] sm:$0xff]
        %v1878 = vld [vmem:[%s1874 + $0x18] sm:$0xff]
        %s1879 = scalar_lea.vmem [#allocation11], 352
        %v1880 = vld [vmem:[%s1879] sm:$0xff]
        %v1881 = vld [vmem:[%s1879 + $0x8] sm:$0xff]
        %v1882 = vld [vmem:[%s1879 + $0x10] sm:$0xff]
        %v1883 = vld [vmem:[%s1879 + $0x18] sm:$0xff]
        %s1884 = scalar_lea.vmem [#allocation13], 4
        %v1885 = vld [vmem:[%s1884] sm:$0x1]
        %s1886 = scalar_lea.vmem [#allocation13], 5
        %v1887 = vld [vmem:[%s1886] sm:$0x1]
        %s1888 = scalar_lea.vmem [#allocation13], 6
        %v1889 = vld [vmem:[%s1888] sm:$0x1]
        %s1890 = scalar_lea.vmem [#allocation13], 7
        %v1891 = vld [vmem:[%s1890] sm:$0x1]
        %v1893 = vsel %vm722, %v1853, 0
        %1895 = vmatprep.subr.mxu0 0.0
        %1896 = vmatpush1.msra.mxu0 %v1870
        %1897 = vmatprep.subr.mxu0 0.0
        %1898 = vmatpush1.msra.mxu0 %v1871
        %1899 = vmatprep.subr.mxu0 0.0
        %1900 = vmatpush1.msra.mxu0 %v1872
        %1901 = vmatprep.subr.mxu0 0.0
        %1902 = vmatpush1.msra.mxu0 %v1873
        %1903 = vmatprep.subr.mxu0 0.0
        %1904 = vmatpush1.msra.mxu0 0.0
        %1905 = vmatprep.subr.mxu0 0.0
        %1906 = vmatpush1.msra.mxu0 0.0
        %1907 = vmatprep.subr.mxu0 0.0
        %1908 = vmatpush1.msra.mxu0 0.0
        %1909 = vmatprep.subr.mxu0 0.0
        %1910 = vmatpush1.msra.mxu0 0.0
        %1911 = vmatprep.subr.mxu0 0.0
        %1912 = vmatpush1.msra.mxu0 0.0
        %1913 = vmatprep.subr.mxu0 0.0
        %1914 = vmatpush1.msra.mxu0 0.0
        %1915 = vmatprep.subr.mxu0 0.0
        %1916 = vmatpush1.msra.mxu0 0.0
        %1917 = vmatprep.subr.mxu0 0.0
        %1918 = vmatpush1.msra.mxu0 0.0
        %1919 = vmatprep.subr.mxu0 0.0
        %1920 = vmatpush1.msra.mxu0 0.0
        %1921 = vmatprep.subr.mxu0 0.0
        %1922 = vmatpush1.msra.mxu0 0.0
        %1923 = vmatprep.subr.mxu0 0.0
        %1924 = vmatpush1.msra.mxu0 0.0
        %1925 = vmatprep.subr.mxu0 0.0
        %1926 = vmatpush1.msra.mxu0 0.0
        %1927 = vmatprep.subr.mxu0 0.0
        %1928 = vmatpush1.msra.mxu0 0.0
        %1929 = vmatprep.subr.mxu0 0.0
        %1930 = vmatpush1.msra.mxu0 0.0
        %1931 = vmatprep.subr.mxu0 0.0
        %1932 = vmatpush1.msra.mxu0 0.0
        %1933 = vmatprep.subr.mxu0 0.0
        %1934 = vmatpush1.msra.mxu0 0.0
        %1935 = vmatprep.subr.mxu0 0.0
        %1936 = vmatpush1.msra.mxu0 0.0
        %1937 = vmatprep.subr.mxu0 0.0
        %1938 = vmatpush1.msra.mxu0 0.0
        %1939 = vmatprep.subr.mxu0 0.0
        %1940 = vmatpush1.msra.mxu0 0.0
        %1941 = vmatprep.subr.mxu0 0.0
        %1942 = vmatpush1.msra.mxu0 0.0
        %1943 = vmatprep.subr.mxu0 0.0
        %1944 = vmatpush1.msra.mxu0 0.0
        %1945 = vmatprep.subr.mxu0 0.0
        %1946 = vmatpush1.msra.mxu0 0.0
        %1947 = vmatprep.subr.mxu0 0.0
        %1948 = vmatpush1.msra.mxu0 0.0
        %1949 = vmatprep.subr.mxu0 0.0
        %1950 = vmatpush1.msra.mxu0 0.0
        %1951 = vmatprep.subr.mxu0 0.0
        %1952 = vmatpush1.msra.mxu0 0.0
        %1953 = vmatprep.subr.mxu0 0.0
        %1954 = vmatpush1.msra.mxu0 0.0
        %1955 = vmatprep.subr.mxu0 0.0
        %1956 = vmatpush1.msra.mxu0 0.0
        %1957 = vmatprep.subr.mxu0 0.0
        %1958 = vmatpush1.msra.mxu0 0.0
        %1959 = vmatprep.mubr.f32.mxu0 0.0
        %1960 = vmatmul.mubr.f32.gmra.mrb[0].mxu0 %v1893
        %v1961 = vpop.f32.mrb[0].mxu0
        %v1962 = vadd.f32 0.0, %v1961
        %v1963 = vpop.f32.mrb[0].mxu0
        %1964 = vdwg.mxu0
        %1965 = vmatprep.subr.mxu0 0.0
        %1966 = vmatpush1.msra.mxu0 %v1855
        %1967 = vmatprep.subr.mxu0 0.0
        %1968 = vmatpush1.msra.mxu0 %v1856
        %1969 = vmatprep.subr.mxu0 0.0
        %1970 = vmatpush1.msra.mxu0 %v1857
        %1971 = vmatprep.subr.mxu0 0.0
        %1972 = vmatpush1.msra.mxu0 %v1858
        %1973 = vmatprep.subr.mxu0 0.0
        %1974 = vmatpush1.msra.mxu0 0.0
        %1975 = vmatprep.subr.mxu0 0.0
        %1976 = vmatpush1.msra.mxu0 0.0
        %1977 = vmatprep.subr.mxu0 0.0
        %1978 = vmatpush1.msra.mxu0 0.0
        %1979 = vmatprep.subr.mxu0 0.0
        %1980 = vmatpush1.msra.mxu0 0.0
        %1981 = vmatprep.subr.mxu0 0.0
        %1982 = vmatpush1.msra.mxu0 0.0
        %1983 = vmatprep.subr.mxu0 0.0
        %1984 = vmatpush1.msra.mxu0 0.0
        %1985 = vmatprep.subr.mxu0 0.0
        %1986 = vmatpush1.msra.mxu0 0.0
        %1987 = vmatprep.subr.mxu0 0.0
        %1988 = vmatpush1.msra.mxu0 0.0
        %1989 = vmatprep.subr.mxu0 0.0
        %1990 = vmatpush1.msra.mxu0 0.0
        %1991 = vmatprep.subr.mxu0 0.0
        %1992 = vmatpush1.msra.mxu0 0.0
        %1993 = vmatprep.subr.mxu0 0.0
        %1994 = vmatpush1.msra.mxu0 0.0
        %1995 = vmatprep.subr.mxu0 0.0
        %1996 = vmatpush1.msra.mxu0 0.0
        %1997 = vmatprep.subr.mxu0 0.0
        %1998 = vmatpush1.msra.mxu0 0.0
        %1999 = vmatprep.subr.mxu0 0.0
        %2000 = vmatpush1.msra.mxu0 0.0
        %2001 = vmatprep.subr.mxu0 0.0
        %2002 = vmatpush1.msra.mxu0 0.0
        %2003 = vmatprep.subr.mxu0 0.0
        %2004 = vmatpush1.msra.mxu0 0.0
        %2005 = vmatprep.subr.mxu0 0.0
        %2006 = vmatpush1.msra.mxu0 0.0
        %2007 = vmatprep.subr.mxu0 0.0
        %2008 = vmatpush1.msra.mxu0 0.0
        %2009 = vmatprep.subr.mxu0 0.0
        %2010 = vmatpush1.msra.mxu0 0.0
        %2011 = vmatprep.subr.mxu0 0.0
        %2012 = vmatpush1.msra.mxu0 0.0
        %2013 = vmatprep.subr.mxu0 0.0
        %2014 = vmatpush1.msra.mxu0 0.0
        %2015 = vmatprep.subr.mxu0 0.0
        %2016 = vmatpush1.msra.mxu0 0.0
        %2017 = vmatprep.subr.mxu0 0.0
        %2018 = vmatpush1.msra.mxu0 0.0
        %2019 = vmatprep.subr.mxu0 0.0
        %2020 = vmatpush1.msra.mxu0 0.0
        %2021 = vmatprep.subr.mxu0 0.0
        %2022 = vmatpush1.msra.mxu0 0.0
        %2023 = vmatprep.subr.mxu0 0.0
        %2024 = vmatpush1.msra.mxu0 0.0
        %2025 = vmatprep.subr.mxu0 0.0
        %2026 = vmatpush1.msra.mxu0 0.0
        %2027 = vmatprep.subr.mxu0 0.0
        %2028 = vmatpush1.msra.mxu0 0.0
        %2029 = vmatprep.mubr.f32.mxu0 0.0
        %2030 = vmatmul.mubr.f32.gmra.mrb[0].mxu0 %v1563
        %v2031 = vpop.f32.mrb[0].mxu0
        %v2032 = vadd.f32 %v1962, %v2031
        %v2033 = vpop.f32.mrb[0].mxu0
        %2034 = vdwg.mxu0
        %v2036 = vlaneseq
        %v2037 = vshrl.u32 %v2036, 7
        %v2038 = vsub.s32 0, %v2037
        %v2039 = vrot.slane %v1885, %v2038
        %v2041 = vadd.f32 %v2032, %v2039
        %v2042 = vxor.u32 %v2041, 2147483648
        %v2043 = vmul.f32 %v2042, 1.442695
        %v2044 = vpow.pop %v2043
        %v2045 = vadd.f32 %v2044, 1.0
        %v2046 = vrcp.pop %v2045
        %v2047 = vmul.f32 1.0, %v2046
        %2048 = vmatprep.subr.mxu0 0.0
        %2049 = vmatpush1.msra.mxu0 %v1875
        %2050 = vmatprep.subr.mxu0 0.0
        %2051 = vmatpush1.msra.mxu0 %v1876
        %2052 = vmatprep.subr.mxu0 0.0
        %2053 = vmatpush1.msra.mxu0 %v1877
        %2054 = vmatprep.subr.mxu0 0.0
        %2055 = vmatpush1.msra.mxu0 %v1878
        %2056 = vmatprep.subr.mxu0 0.0
        %2057 = vmatpush1.msra.mxu0 0.0
        %2058 = vmatprep.subr.mxu0 0.0
        %2059 = vmatpush1.msra.mxu0 0.0
        %2060 = vmatprep.subr.mxu0 0.0
        %2061 = vmatpush1.msra.mxu0 0.0
        %2062 = vmatprep.subr.mxu0 0.0
        %2063 = vmatpush1.msra.mxu0 0.0
        %2064 = vmatprep.subr.mxu0 0.0
        %2065 = vmatpush1.msra.mxu0 0.0
        %2066 = vmatprep.subr.mxu0 0.0
        %2067 = vmatpush1.msra.mxu0 0.0
        %2068 = vmatprep.subr.mxu0 0.0
        %2069 = vmatpush1.msra.mxu0 0.0
        %2070 = vmatprep.subr.mxu0 0.0
        %2071 = vmatpush1.msra.mxu0 0.0
        %2072 = vmatprep.subr.mxu0 0.0
        %2073 = vmatpush1.msra.mxu0 0.0
        %2074 = vmatprep.subr.mxu0 0.0
        %2075 = vmatpush1.msra.mxu0 0.0
        %2076 = vmatprep.subr.mxu0 0.0
        %2077 = vmatpush1.msra.mxu0 0.0
        %2078 = vmatprep.subr.mxu0 0.0
        %2079 = vmatpush1.msra.mxu0 0.0
        %2080 = vmatprep.subr.mxu0 0.0
        %2081 = vmatpush1.msra.mxu0 0.0
        %2082 = vmatprep.subr.mxu0 0.0
        %2083 = vmatpush1.msra.mxu0 0.0
        %2084 = vmatprep.subr.mxu0 0.0
        %2085 = vmatpush1.msra.mxu0 0.0
        %2086 = vmatprep.subr.mxu0 0.0
        %2087 = vmatpush1.msra.mxu0 0.0
        %2088 = vmatprep.subr.mxu0 0.0
        %2089 = vmatpush1.msra.mxu0 0.0
        %2090 = vmatprep.subr.mxu0 0.0
        %2091 = vmatpush1.msra.mxu0 0.0
        %2092 = vmatprep.subr.mxu0 0.0
        %2093 = vmatpush1.msra.mxu0 0.0
        %2094 = vmatprep.subr.mxu0 0.0
        %2095 = vmatpush1.msra.mxu0 0.0
        %2096 = vmatprep.subr.mxu0 0.0
        %2097 = vmatpush1.msra.mxu0 0.0
        %2098 = vmatprep.subr.mxu0 0.0
        %2099 = vmatpush1.msra.mxu0 0.0
        %2100 = vmatprep.subr.mxu0 0.0
        %2101 = vmatpush1.msra.mxu0 0.0
        %2102 = vmatprep.subr.mxu0 0.0
        %2103 = vmatpush1.msra.mxu0 0.0
        %2104 = vmatprep.subr.mxu0 0.0
        %2105 = vmatpush1.msra.mxu0 0.0
        %2106 = vmatprep.subr.mxu0 0.0
        %2107 = vmatpush1.msra.mxu0 0.0
        %2108 = vmatprep.subr.mxu0 0.0
        %2109 = vmatpush1.msra.mxu0 0.0
        %2110 = vmatprep.subr.mxu0 0.0
        %2111 = vmatpush1.msra.mxu0 0.0
        %2112 = vmatprep.mubr.f32.mxu0 0.0
        %2113 = vmatmul.mubr.f32.gmra.mrb[0].mxu0 %v1893
        %v2114 = vpop.f32.mrb[0].mxu0
        %v2115 = vadd.f32 0.0, %v2114
        %v2116 = vpop.f32.mrb[0].mxu0
        %2117 = vdwg.mxu0
        %2118 = vmatprep.subr.mxu0 0.0
        %2119 = vmatpush1.msra.mxu0 %v1860
        %2120 = vmatprep.subr.mxu0 0.0
        %2121 = vmatpush1.msra.mxu0 %v1861
        %2122 = vmatprep.subr.mxu0 0.0
        %2123 = vmatpush1.msra.mxu0 %v1862
        %2124 = vmatprep.subr.mxu0 0.0
        %2125 = vmatpush1.msra.mxu0 %v1863
        %2126 = vmatprep.subr.mxu0 0.0
        %2127 = vmatpush1.msra.mxu0 0.0
        %2128 = vmatprep.subr.mxu0 0.0
        %2129 = vmatpush1.msra.mxu0 0.0
        %2130 = vmatprep.subr.mxu0 0.0
        %2131 = vmatpush1.msra.mxu0 0.0
        %2132 = vmatprep.subr.mxu0 0.0
        %2133 = vmatpush1.msra.mxu0 0.0
        %2134 = vmatprep.subr.mxu0 0.0
        %2135 = vmatpush1.msra.mxu0 0.0
        %2136 = vmatprep.subr.mxu0 0.0
        %2137 = vmatpush1.msra.mxu0 0.0
        %2138 = vmatprep.subr.mxu0 0.0
        %2139 = vmatpush1.msra.mxu0 0.0
        %2140 = vmatprep.subr.mxu0 0.0
        %2141 = vmatpush1.msra.mxu0 0.0
        %2142 = vmatprep.subr.mxu0 0.0
        %2143 = vmatpush1.msra.mxu0 0.0
        %2144 = vmatprep.subr.mxu0 0.0
        %2145 = vmatpush1.msra.mxu0 0.0
        %2146 = vmatprep.subr.mxu0 0.0
        %2147 = vmatpush1.msra.mxu0 0.0
        %2148 = vmatprep.subr.mxu0 0.0
        %2149 = vmatpush1.msra.mxu0 0.0
        %2150 = vmatprep.subr.mxu0 0.0
        %2151 = vmatpush1.msra.mxu0 0.0
        %2152 = vmatprep.subr.mxu0 0.0
        %2153 = vmatpush1.msra.mxu0 0.0
        %2154 = vmatprep.subr.mxu0 0.0
        %2155 = vmatpush1.msra.mxu0 0.0
        %2156 = vmatprep.subr.mxu0 0.0
        %2157 = vmatpush1.msra.mxu0 0.0
        %2158 = vmatprep.subr.mxu0 0.0
        %2159 = vmatpush1.msra.mxu0 0.0
        %2160 = vmatprep.subr.mxu0 0.0
        %2161 = vmatpush1.msra.mxu0 0.0
        %2162 = vmatprep.subr.mxu0 0.0
        %2163 = vmatpush1.msra.mxu0 0.0
        %2164 = vmatprep.subr.mxu0 0.0
        %2165 = vmatpush1.msra.mxu0 0.0
        %2166 = vmatprep.subr.mxu0 0.0
        %2167 = vmatpush1.msra.mxu0 0.0
        %2168 = vmatprep.subr.mxu0 0.0
        %2169 = vmatpush1.msra.mxu0 0.0
        %2170 = vmatprep.subr.mxu0 0.0
        %2171 = vmatpush1.msra.mxu0 0.0
        %2172 = vmatprep.subr.mxu0 0.0
        %2173 = vmatpush1.msra.mxu0 0.0
        %2174 = vmatprep.subr.mxu0 0.0
        %2175 = vmatpush1.msra.mxu0 0.0
        %2176 = vmatprep.subr.mxu0 0.0
        %2177 = vmatpush1.msra.mxu0 0.0
        %2178 = vmatprep.subr.mxu0 0.0
        %2179 = vmatpush1.msra.mxu0 0.0
        %2180 = vmatprep.subr.mxu0 0.0
        %2181 = vmatpush1.msra.mxu0 0.0
        %2182 = vmatprep.mubr.f32.mxu0 0.0
        %2183 = vmatmul.mubr.f32.gmra.mrb[0].mxu0 %v1563
        %v2184 = vpop.f32.mrb[0].mxu0
        %v2185 = vadd.f32 %v2115, %v2184
        %v2186 = vpop.f32.mrb[0].mxu0
        %2187 = vdwg.mxu0
        %v2189 = vlaneseq
        %v2190 = vshrl.u32 %v2189, 7
        %v2191 = vsub.s32 0, %v2190
        %v2192 = vrot.slane %v1887, %v2191
        %v2194 = vadd.f32 %v2185, %v2192
        %v2195 = vxor.u32 %v2194, 2147483648
        %v2196 = vmul.f32 %v2195, 1.442695
        %v2197 = vpow.pop %v2196
        %v2198 = vadd.f32 %v2197, 1.0
        %v2199 = vrcp.pop %v2198
        %v2200 = vmul.f32 1.0, %v2199
        %v2202 = vlaneseq
        %v2203 = vshrl.u32 %v2202, 7
        %v2204 = vsub.s32 0, %v2203
        %v2205 = vrot.slane %v1889, %v2204
        %2207 = vmatprep.subr.mxu0 0.0
        %2208 = vmatpush1.msra.mxu0 %v1865
        %2209 = vmatprep.subr.mxu0 0.0
        %2210 = vmatpush1.msra.mxu0 %v1866
        %2211 = vmatprep.subr.mxu0 0.0
        %2212 = vmatpush1.msra.mxu0 %v1867
        %2213 = vmatprep.subr.mxu0 0.0
        %2214 = vmatpush1.msra.mxu0 %v1868
        %2215 = vmatprep.subr.mxu0 0.0
        %2216 = vmatpush1.msra.mxu0 0.0
        %2217 = vmatprep.subr.mxu0 0.0
        %2218 = vmatpush1.msra.mxu0 0.0
        %2219 = vmatprep.subr.mxu0 0.0
        %2220 = vmatpush1.msra.mxu0 0.0
        %2221 = vmatprep.subr.mxu0 0.0
        %2222 = vmatpush1.msra.mxu0 0.0
        %2223 = vmatprep.subr.mxu0 0.0
        %2224 = vmatpush1.msra.mxu0 0.0
        %2225 = vmatprep.subr.mxu0 0.0
        %2226 = vmatpush1.msra.mxu0 0.0
        %2227 = vmatprep.subr.mxu0 0.0
        %2228 = vmatpush1.msra.mxu0 0.0
        %2229 = vmatprep.subr.mxu0 0.0
        %2230 = vmatpush1.msra.mxu0 0.0
        %2231 = vmatprep.subr.mxu0 0.0
        %2232 = vmatpush1.msra.mxu0 0.0
        %2233 = vmatprep.subr.mxu0 0.0
        %2234 = vmatpush1.msra.mxu0 0.0
        %2235 = vmatprep.subr.mxu0 0.0
        %2236 = vmatpush1.msra.mxu0 0.0
        %2237 = vmatprep.subr.mxu0 0.0
        %2238 = vmatpush1.msra.mxu0 0.0
        %2239 = vmatprep.subr.mxu0 0.0
        %2240 = vmatpush1.msra.mxu0 0.0
        %2241 = vmatprep.subr.mxu0 0.0
        %2242 = vmatpush1.msra.mxu0 0.0
        %2243 = vmatprep.subr.mxu0 0.0
        %2244 = vmatpush1.msra.mxu0 0.0
        %2245 = vmatprep.subr.mxu0 0.0
        %2246 = vmatpush1.msra.mxu0 0.0
        %2247 = vmatprep.subr.mxu0 0.0
        %2248 = vmatpush1.msra.mxu0 0.0
        %2249 = vmatprep.subr.mxu0 0.0
        %2250 = vmatpush1.msra.mxu0 0.0
        %2251 = vmatprep.subr.mxu0 0.0
        %2252 = vmatpush1.msra.mxu0 0.0
        %2253 = vmatprep.subr.mxu0 0.0
        %2254 = vmatpush1.msra.mxu0 0.0
        %2255 = vmatprep.subr.mxu0 0.0
        %2256 = vmatpush1.msra.mxu0 0.0
        %2257 = vmatprep.subr.mxu0 0.0
        %2258 = vmatpush1.msra.mxu0 0.0
        %2259 = vmatprep.subr.mxu0 0.0
        %2260 = vmatpush1.msra.mxu0 0.0
        %2261 = vmatprep.subr.mxu0 0.0
        %2262 = vmatpush1.msra.mxu0 0.0
        %2263 = vmatprep.subr.mxu0 0.0
        %2264 = vmatpush1.msra.mxu0 0.0
        %2265 = vmatprep.subr.mxu0 0.0
        %2266 = vmatpush1.msra.mxu0 0.0
        %2267 = vmatprep.subr.mxu0 0.0
        %2268 = vmatpush1.msra.mxu0 0.0
        %2269 = vmatprep.subr.mxu0 0.0
        %2270 = vmatpush1.msra.mxu0 0.0
        %2271 = vmatprep.mubr.f32.mxu0 0.0
        %2272 = vmatmul.mubr.f32.gmra.mrb[0].mxu0 %v1563
        %v2273 = vpop.f32.mrb[0].mxu0
        %v2274 = vadd.f32 %v2205, %v2273
        %v2275 = vpop.f32.mrb[0].mxu0
        %2276 = vdwg.mxu0
        %v2278 = vlaneseq
        %v2279 = vshrl.u32 %v2278, 7
        %v2280 = vsub.s32 0, %v2279
        %v2281 = vrot.slane %v1891, %v2280
        %2283 = vmatprep.subr.mxu0 0.0
        %2284 = vmatpush1.msra.mxu0 %v1880
        %2285 = vmatprep.subr.mxu0 0.0
        %2286 = vmatpush1.msra.mxu0 %v1881
        %2287 = vmatprep.subr.mxu0 0.0
        %2288 = vmatpush1.msra.mxu0 %v1882
        %2289 = vmatprep.subr.mxu0 0.0
        %2290 = vmatpush1.msra.mxu0 %v1883
        %2291 = vmatprep.subr.mxu0 0.0
        %2292 = vmatpush1.msra.mxu0 0.0
        %2293 = vmatprep.subr.mxu0 0.0
        %2294 = vmatpush1.msra.mxu0 0.0
        %2295 = vmatprep.subr.mxu0 0.0
        %2296 = vmatpush1.msra.mxu0 0.0
        %2297 = vmatprep.subr.mxu0 0.0
        %2298 = vmatpush1.msra.mxu0 0.0
        %2299 = vmatprep.subr.mxu0 0.0
        %2300 = vmatpush1.msra.mxu0 0.0
        %2301 = vmatprep.subr.mxu0 0.0
        %2302 = vmatpush1.msra.mxu0 0.0
        %2303 = vmatprep.subr.mxu0 0.0
        %2304 = vmatpush1.msra.mxu0 0.0
        %2305 = vmatprep.subr.mxu0 0.0
        %2306 = vmatpush1.msra.mxu0 0.0
        %2307 = vmatprep.subr.mxu0 0.0
        %2308 = vmatpush1.msra.mxu0 0.0
        %2309 = vmatprep.subr.mxu0 0.0
        %2310 = vmatpush1.msra.mxu0 0.0
        %2311 = vmatprep.subr.mxu0 0.0
        %2312 = vmatpush1.msra.mxu0 0.0
        %2313 = vmatprep.subr.mxu0 0.0
        %2314 = vmatpush1.msra.mxu0 0.0
        %2315 = vmatprep.subr.mxu0 0.0
        %2316 = vmatpush1.msra.mxu0 0.0
        %2317 = vmatprep.subr.mxu0 0.0
        %2318 = vmatpush1.msra.mxu0 0.0
        %2319 = vmatprep.subr.mxu0 0.0
        %2320 = vmatpush1.msra.mxu0 0.0
        %2321 = vmatprep.subr.mxu0 0.0
        %2322 = vmatpush1.msra.mxu0 0.0
        %2323 = vmatprep.subr.mxu0 0.0
        %2324 = vmatpush1.msra.mxu0 0.0
        %2325 = vmatprep.subr.mxu0 0.0
        %2326 = vmatpush1.msra.mxu0 0.0
        %2327 = vmatprep.subr.mxu0 0.0
        %2328 = vmatpush1.msra.mxu0 0.0
        %2329 = vmatprep.subr.mxu0 0.0
        %2330 = vmatpush1.msra.mxu0 0.0
        %2331 = vmatprep.subr.mxu0 0.0
        %2332 = vmatpush1.msra.mxu0 0.0
        %2333 = vmatprep.subr.mxu0 0.0
        %2334 = vmatpush1.msra.mxu0 0.0
        %2335 = vmatprep.subr.mxu0 0.0
        %2336 = vmatpush1.msra.mxu0 0.0
        %2337 = vmatprep.subr.mxu0 0.0
        %2338 = vmatpush1.msra.mxu0 0.0
        %2339 = vmatprep.subr.mxu0 0.0
        %2340 = vmatpush1.msra.mxu0 0.0
        %2341 = vmatprep.subr.mxu0 0.0
        %2342 = vmatpush1.msra.mxu0 0.0
        %2343 = vmatprep.subr.mxu0 0.0
        %2344 = vmatpush1.msra.mxu0 0.0
        %2345 = vmatprep.subr.mxu0 0.0
        %2346 = vmatpush1.msra.mxu0 0.0
        %2347 = vmatprep.mubr.f32.mxu0 0.0
        %2348 = vmatmul.mubr.f32.gmra.mrb[0].mxu0 %v1893
        %v2349 = vpop.f32.mrb[0].mxu0
        %v2350 = vadd.f32 %v2281, %v2349
        %v2351 = vpop.f32.mrb[0].mxu0
        %2352 = vdwg.mxu0
        %v2353 = vmul.f32 %v2047, %v2350
        %v2354 = vadd.f32 %v2274, %v2353
        %v2355 = vtanh.pop %v2354
        %v2356 = vsub.f32 1.0, %v2200
        %v2357 = vmul.f32 %v2356, %v2355
        %v2358 = vmul.f32 %v2200, %v1853
        %v2359 = vadd.f32 %v2357, %v2358
        %v2360 = vmax.f32 %v2359, 0.0
        %v2361 = vld [vmem:[#allocation14] sm:$0xff]
        %v2362 = vld [vmem:[#allocation14 + $0x8] sm:$0xff]
        %v2363 = vld [vmem:[#allocation14 + $0x10] sm:$0xff]
        %v2364 = vld [vmem:[#allocation14 + $0x18] sm:$0xff]
        %s2365 = scalar_lea.vmem [#allocation14], 32
        %v2366 = vld [vmem:[%s2365] sm:$0xff]
        %v2367 = vld [vmem:[%s2365 + $0x8] sm:$0xff]
        %v2368 = vld [vmem:[%s2365 + $0x10] sm:$0xff]
        %v2369 = vld [vmem:[%s2365 + $0x18] sm:$0xff]
        %2370 = vmatprep.subr.mxu0 0.0
        %2371 = vmatpush1.msra.mxu0 %v2366
        %2372 = vmatprep.subr.mxu0 0.0
        %2373 = vmatpush1.msra.mxu0 %v2367
        %2374 = vmatprep.subr.mxu0 0.0
        %2375 = vmatpush1.msra.mxu0 %v2368
        %2376 = vmatprep.subr.mxu0 0.0
        %2377 = vmatpush1.msra.mxu0 %v2369
        %2378 = vmatprep.subr.mxu0 0.0
        %2379 = vmatpush1.msra.mxu0 0.0
        %2380 = vmatprep.subr.mxu0 0.0
        %2381 = vmatpush1.msra.mxu0 0.0
        %2382 = vmatprep.subr.mxu0 0.0
        %2383 = vmatpush1.msra.mxu0 0.0
        %2384 = vmatprep.subr.mxu0 0.0
        %2385 = vmatpush1.msra.mxu0 0.0
        %2386 = vmatprep.subr.mxu0 0.0
        %2387 = vmatpush1.msra.mxu0 0.0
        %2388 = vmatprep.subr.mxu0 0.0
        %2389 = vmatpush1.msra.mxu0 0.0
        %2390 = vmatprep.subr.mxu0 0.0
        %2391 = vmatpush1.msra.mxu0 0.0
        %2392 = vmatprep.subr.mxu0 0.0
        %2393 = vmatpush1.msra.mxu0 0.0
        %2394 = vmatprep.subr.mxu0 0.0
        %2395 = vmatpush1.msra.mxu0 0.0
        %2396 = vmatprep.subr.mxu0 0.0
        %2397 = vmatpush1.msra.mxu0 0.0
        %2398 = vmatprep.subr.mxu0 0.0
        %2399 = vmatpush1.msra.mxu0 0.0
        %2400 = vmatprep.subr.mxu0 0.0
        %2401 = vmatpush1.msra.mxu0 0.0
        %2402 = vmatprep.subr.mxu0 0.0
        %2403 = vmatpush1.msra.mxu0 0.0
        %2404 = vmatprep.subr.mxu0 0.0
        %2405 = vmatpush1.msra.mxu0 0.0
        %2406 = vmatprep.subr.mxu0 0.0
        %2407 = vmatpush1.msra.mxu0 0.0
        %2408 = vmatprep.subr.mxu0 0.0
        %2409 = vmatpush1.msra.mxu0 0.0
        %2410 = vmatprep.subr.mxu0 0.0
        %2411 = vmatpush1.msra.mxu0 0.0
        %2412 = vmatprep.subr.mxu0 0.0
        %2413 = vmatpush1.msra.mxu0 0.0
        %2414 = vmatprep.subr.mxu0 0.0
        %2415 = vmatpush1.msra.mxu0 0.0
        %2416 = vmatprep.subr.mxu0 0.0
        %2417 = vmatpush1.msra.mxu0 0.0
        %2418 = vmatprep.subr.mxu0 0.0
        %2419 = vmatpush1.msra.mxu0 0.0
        %2420 = vmatprep.subr.mxu0 0.0
        %2421 = vmatpush1.msra.mxu0 0.0
        %2422 = vmatprep.subr.mxu0 0.0
        %2423 = vmatpush1.msra.mxu0 0.0
        %2424 = vmatprep.subr.mxu0 0.0
        %2425 = vmatpush1.msra.mxu0 0.0
        %2426 = vmatprep.subr.mxu0 0.0
        %2427 = vmatpush1.msra.mxu0 0.0
        %2428 = vmatprep.subr.mxu0 0.0
        %2429 = vmatpush1.msra.mxu0 0.0
        %2430 = vmatprep.subr.mxu0 0.0
        %2431 = vmatpush1.msra.mxu0 0.0
        %2432 = vmatprep.subr.mxu0 0.0
        %2433 = vmatpush1.msra.mxu0 0.0
        %2434 = vmatprep.mubr.f32.mxu0 0.0
        %2435 = vmatmul.mubr.f32.gmra.mrb[0].mxu0 %v724
        %v2436 = vpop.f32.mrb[0].mxu0
        %v2437 = vadd.f32 0.0, %v2436
        %v2438 = vpop.f32.mrb[0].mxu0
        %2439 = vdwg.mxu0
        %v2441 = vsel %vm722, %v2360, 0
        %2443 = vmatprep.subr.mxu0 0.0
        %2444 = vmatpush1.msra.mxu0 %v2361
        %2445 = vmatprep.subr.mxu0 0.0
        %2446 = vmatpush1.msra.mxu0 %v2362
        %2447 = vmatprep.subr.mxu0 0.0
        %2448 = vmatpush1.msra.mxu0 %v2363
        %2449 = vmatprep.subr.mxu0 0.0
        %2450 = vmatpush1.msra.mxu0 %v2364
        %2451 = vmatprep.subr.mxu0 0.0
        %2452 = vmatpush1.msra.mxu0 0.0
        %2453 = vmatprep.subr.mxu0 0.0
        %2454 = vmatpush1.msra.mxu0 0.0
        %2455 = vmatprep.subr.mxu0 0.0
        %2456 = vmatpush1.msra.mxu0 0.0
        %2457 = vmatprep.subr.mxu0 0.0
        %2458 = vmatpush1.msra.mxu0 0.0
        %2459 = vmatprep.subr.mxu0 0.0
        %2460 = vmatpush1.msra.mxu0 0.0
        %2461 = vmatprep.subr.mxu0 0.0
        %2462 = vmatpush1.msra.mxu0 0.0
        %2463 = vmatprep.subr.mxu0 0.0
        %2464 = vmatpush1.msra.mxu0 0.0
        %2465 = vmatprep.subr.mxu0 0.0
        %2466 = vmatpush1.msra.mxu0 0.0
        %2467 = vmatprep.subr.mxu0 0.0
        %2468 = vmatpush1.msra.mxu0 0.0
        %2469 = vmatprep.subr.mxu0 0.0
        %2470 = vmatpush1.msra.mxu0 0.0
        %2471 = vmatprep.subr.mxu0 0.0
        %2472 = vmatpush1.msra.mxu0 0.0
        %2473 = vmatprep.subr.mxu0 0.0
        %2474 = vmatpush1.msra.mxu0 0.0
        %2475 = vmatprep.subr.mxu0 0.0
        %2476 = vmatpush1.msra.mxu0 0.0
        %2477 = vmatprep.subr.mxu0 0.0
        %2478 = vmatpush1.msra.mxu0 0.0
        %2479 = vmatprep.subr.mxu0 0.0
        %2480 = vmatpush1.msra.mxu0 0.0
        %2481 = vmatprep.subr.mxu0 0.0
        %2482 = vmatpush1.msra.mxu0 0.0
        %2483 = vmatprep.subr.mxu0 0.0
        %2484 = vmatpush1.msra.mxu0 0.0
        %2485 = vmatprep.subr.mxu0 0.0
        %2486 = vmatpush1.msra.mxu0 0.0
        %2487 = vmatprep.subr.mxu0 0.0
        %2488 = vmatpush1.msra.mxu0 0.0
        %2489 = vmatprep.subr.mxu0 0.0
        %2490 = vmatpush1.msra.mxu0 0.0
        %2491 = vmatprep.subr.mxu0 0.0
        %2492 = vmatpush1.msra.mxu0 0.0
        %2493 = vmatprep.subr.mxu0 0.0
        %2494 = vmatpush1.msra.mxu0 0.0
        %2495 = vmatprep.subr.mxu0 0.0
        %2496 = vmatpush1.msra.mxu0 0.0
        %2497 = vmatprep.subr.mxu0 0.0
        %2498 = vmatpush1.msra.mxu0 0.0
        %2499 = vmatprep.subr.mxu0 0.0
        %2500 = vmatpush1.msra.mxu0 0.0
        %2501 = vmatprep.subr.mxu0 0.0
        %2502 = vmatpush1.msra.mxu0 0.0
        %2503 = vmatprep.subr.mxu0 0.0
        %2504 = vmatpush1.msra.mxu0 0.0
        %2505 = vmatprep.subr.mxu0 0.0
        %2506 = vmatpush1.msra.mxu0 0.0
        %2507 = vmatprep.mubr.f32.mxu0 0.0
        %2508 = vmatmul.mubr.f32.gmra.mrb[0].mxu0 %v2441
        %v2509 = vpop.f32.mrb[0].mxu0
        %v2510 = vadd.f32 %v2437, %v2509
        %v2511 = vpop.f32.mrb[0].mxu0
        %2512 = vdwg.mxu0
        %v2513 = vld [vmem:[%s9] sm:$0x1]
        %v2515 = vlaneseq
        %v2516 = vshrl.u32 %v2515, 7
        %v2517 = vsub.s32 0, %v2516
        %v2518 = vrot.slane %v2513, %v2517
        %v2520 = vadd.f32 %v2510, %v2518
        %v2521 = vxor.u32 %v2520, 2147483648
        %v2522 = vmul.f32 %v2521, 1.442695
        %v2523 = vpow.pop %v2522
        %v2524 = vadd.f32 %v2523, 1.0
        %v2525 = vrcp.pop %v2524
        %v2526 = vmul.f32 1.0, %v2525
        %v2527 = vld [vmem:[%s10] sm:$0xff]
        %v2528 = vld [vmem:[%s10 + $0x8] sm:$0xff]
        %v2529 = vld [vmem:[%s10 + $0x10] sm:$0xff]
        %v2530 = vld [vmem:[%s10 + $0x18] sm:$0xff]
        %v2531 = vld [vmem:[%s11] sm:$0x1]
        %v2533 = vlaneseq
        %v2534 = vshrl.u32 %v2533, 7
        %v2535 = vsub.s32 0, %v2534
        %v2536 = vrot.slane %v2531, %v2535
        %2538 = vmatprep.subr.mxu0 0.0
        %2539 = vmatpush1.msra.mxu0 %v2527
        %2540 = vmatprep.subr.mxu0 0.0
        %2541 = vmatpush1.msra.mxu0 %v2528
        %2542 = vmatprep.subr.mxu0 0.0
        %2543 = vmatpush1.msra.mxu0 %v2529
        %2544 = vmatprep.subr.mxu0 0.0
        %2545 = vmatpush1.msra.mxu0 %v2530
        %2546 = vmatprep.subr.mxu0 0.0
        %2547 = vmatpush1.msra.mxu0 0.0
        %2548 = vmatprep.subr.mxu0 0.0
        %2549 = vmatpush1.msra.mxu0 0.0
        %2550 = vmatprep.subr.mxu0 0.0
        %2551 = vmatpush1.msra.mxu0 0.0
        %2552 = vmatprep.subr.mxu0 0.0
        %2553 = vmatpush1.msra.mxu0 0.0
        %2554 = vmatprep.subr.mxu0 0.0
        %2555 = vmatpush1.msra.mxu0 0.0
        %2556 = vmatprep.subr.mxu0 0.0
        %2557 = vmatpush1.msra.mxu0 0.0
        %2558 = vmatprep.subr.mxu0 0.0
        %2559 = vmatpush1.msra.mxu0 0.0
        %2560 = vmatprep.subr.mxu0 0.0
        %2561 = vmatpush1.msra.mxu0 0.0
        %2562 = vmatprep.subr.mxu0 0.0
        %2563 = vmatpush1.msra.mxu0 0.0
        %2564 = vmatprep.subr.mxu0 0.0
        %2565 = vmatpush1.msra.mxu0 0.0
        %2566 = vmatprep.subr.mxu0 0.0
        %2567 = vmatpush1.msra.mxu0 0.0
        %2568 = vmatprep.subr.mxu0 0.0
        %2569 = vmatpush1.msra.mxu0 0.0
        %2570 = vmatprep.subr.mxu0 0.0
        %2571 = vmatpush1.msra.mxu0 0.0
        %2572 = vmatprep.subr.mxu0 0.0
        %2573 = vmatpush1.msra.mxu0 0.0
        %2574 = vmatprep.subr.mxu0 0.0
        %2575 = vmatpush1.msra.mxu0 0.0
        %2576 = vmatprep.subr.mxu0 0.0
        %2577 = vmatpush1.msra.mxu0 0.0
        %2578 = vmatprep.subr.mxu0 0.0
        %2579 = vmatpush1.msra.mxu0 0.0
        %2580 = vmatprep.subr.mxu0 0.0
        %2581 = vmatpush1.msra.mxu0 0.0
        %2582 = vmatprep.subr.mxu0 0.0
        %2583 = vmatpush1.msra.mxu0 0.0
        %2584 = vmatprep.subr.mxu0 0.0
        %2585 = vmatpush1.msra.mxu0 0.0
        %2586 = vmatprep.subr.mxu0 0.0
        %2587 = vmatpush1.msra.mxu0 0.0
        %2588 = vmatprep.subr.mxu0 0.0
        %2589 = vmatpush1.msra.mxu0 0.0
        %2590 = vmatprep.subr.mxu0 0.0
        %2591 = vmatpush1.msra.mxu0 0.0
        %2592 = vmatprep.subr.mxu0 0.0
        %2593 = vmatpush1.msra.mxu0 0.0
        %2594 = vmatprep.subr.mxu0 0.0
        %2595 = vmatpush1.msra.mxu0 0.0
        %2596 = vmatprep.subr.mxu0 0.0
        %2597 = vmatpush1.msra.mxu0 0.0
        %2598 = vmatprep.subr.mxu0 0.0
        %2599 = vmatpush1.msra.mxu0 0.0
        %2600 = vmatprep.subr.mxu0 0.0
        %2601 = vmatpush1.msra.mxu0 0.0
        %2602 = vmatprep.mubr.f32.mxu0 0.0
        %2603 = vmatmul.mubr.f32.gmra.mrb[0].mxu0 %v2441
        %v2604 = vpop.f32.mrb[0].mxu0
        %v2605 = vadd.f32 %v2536, %v2604
        %v2606 = vpop.f32.mrb[0].mxu0
        %2607 = vdwg.mxu0
        %v2608 = vmul.f32 %v2526, %v2605
        %v2609 = vsel %vm722, %v2608, 0.0
        %v2610 = vrot.slane %v2609, 4
        %v2611 = vadd.f32 %v2609, %v2610
        %v2612 = vrot.slane %v2611, 2
        %v2613 = vadd.f32 %v2611, %v2612
        %v2614 = vrot.slane %v2613, 1
        %v2615 = vadd.f32 %v2613, %v2614
        %v2616 = vrcp.pop 8.0
        %v2617 = vmul.f32 %v2615, %v2616
        %v2618 = vmax.f32 %v2617, 0.0
        %vm2619 = vcmask 253952
        %2620 = vst.msk [vmem:[%s574] sm:$0x1] %vm2619, %v2618
        %s2621 = sand.u32 %s310, 1
        %s2622 = scalar_lea.sflag [#allocation4], %s2621
        %s2623 = sand.u32 %s310, 1
        %s2624 = scalar_lea.vmem [#allocation16], %s2623
        // Predicated region
        $region101: #{tpu_custom_call.1} parent=67 // pred_check
          %p2625 = pneg %p320
        $region102: #{tpu_custom_call.1} parent=67 // pred_check_branch
          %2627 = sbr.rel (%p2625) target = $region104
        $region103: #{tpu_custom_call.1} parent=67 // pred_region
          %s2629 = ssub.s32 16, 16
          %2630 = vsyncadd %s2622, %s2629
          %s2631 = smul.addr %s35, 16
          %s2632 = scalar_lea.hbm %s12, %s2631
          %s2634 = sshll.u32 %s2624, 4
          %s2635 = int_to_ptr.vmem [resolvable:$true] %s2634
          %2637 = dma.vmem_to_hbm [thread:$0]  %s2635, 16, %s2632, %s2622
        $region104: #{tpu_custom_call.1} parent=67 // pred_fallthru
          _
      $region68: #{tpu_custom_call.1} parent=5 // pred_fallthru
        _
      %p2638 = scmp.le.s32.totalorder 2, %s30
      // Predicated region
      $region105: #{tpu_custom_call.1} parent=5 // pred_check
        %p2639 = pneg %p2638
      $region106: #{tpu_custom_call.1} parent=5 // pred_check_branch
        %2641 = sbr.rel (%p2639) target = $region108
      $region107: #{tpu_custom_call.1} parent=5 // pred_region
        %s2642 = ssub.s32 %s30, 2
        // Predicated region
        $region109: #{tpu_custom_call.1} parent=107 // pred_check
          %p2643 = pneg %p326
        $region110: #{tpu_custom_call.1} parent=107 // pred_check_branch
          %2645 = sbr.rel (%p2643) target = $region112
        $region111: #{tpu_custom_call.1} parent=107 // pred_region
          %s2646 = sand.u32 %s311, 1
          %s2647 = scalar_lea.sflag [#allocation4], %s2646
          %s2648 = sand.u32 %s311, 1
          %s2649 = scalar_lea.vmem [#allocation16], %s2648
          %2650 = dma.done %s2647, 16
        $region112: #{tpu_custom_call.1} parent=107 // pred_fallthru
          _
      $region108: #{tpu_custom_call.1} parent=5 // pred_fallthru
        _
    $region6: #{tpu_custom_call.1} parent=1 // loop_footer
      %s34 = sadd.s32 1, %s30
    $region7: #{tpu_custom_call.1} parent=1 // loop_footer_branch
      %29 = sbr.rel target = $region3
    $region8: #{tpu_custom_call.1} parent=1 // loop_exit
      _
    %2651 = vsyncpa [#allocation3], 1
    %s2652 = scalar_lea.sflag [#allocation3], 1
    %2653 = vsyncpa %s2652, 1
    %2654 = vsyncpa [#allocation6], 1
    %s2655 = scalar_lea.sflag [#allocation6], 1
    %2656 = vsyncpa %s2655, 1
    %2657 = vsyncpa [#allocation9], 1
    %2658 = vsyncpa [#allocation12], 1
    %2659 = vsyncpa [#allocation15], 1
    %2660 = vsyncpa [#allocation4], 1
    %s2661 = scalar_lea.sflag [#allocation4], 1
    %2662 = vsyncpa %s2661, 1

</llo_original>
